<compile_context>
chip_gen: v7x
topology: tpu7x:2x2x1
jax: 0.10.0
libtpu: 0.0.40
codegen_flags: <defaults>
</compile_context>

<pallas_src>
import jax
import jax.numpy as jnp
from jax import lax
from jax.experimental import pallas as pl
from jax.experimental.pallas import tpu as pltpu


def _make_convblock_kernel(C, Cout, H, W, Nb, use_cbam):
    HW = H * W

    def kernel(*refs):
        if use_cbam:
            (x_ref, wdw_ref, b1_ref, w1_ref, w2_ref, wsp_ref,
             wpw_ref, b2_ref, o_ref, s_ref) = refs
        else:
            (x_ref, wdw_ref, b1_ref, wpw_ref, b2_ref, o_ref) = refs

        # ---- hoisted boundary masks (computed once, reused by every tap) ----
        flat = lax.broadcasted_iota(jnp.int32, (1, HW), 1)      # flat pixel index
        if W & (W - 1) == 0:
            w_pos = jnp.bitwise_and(flat, W - 1)                # column within row
        else:
            w_pos = flat % W

        def row_mask(dh):           # pixels whose row h has h+dh inside [0, H)
            if dh == 0:
                return None
            return (flat >= (-dh) * W) if dh < 0 else (flat < (H - dh) * W)

        def col_mask(dw):           # pixels whose col w has w+dw inside [0, W)
            if dw == 0:
                return None
            return (w_pos >= -dw) if dw < 0 else (w_pos < W - dw)

        def and_mask(a, b):
            if a is None:
                return b
            if b is None:
                return a
            return jnp.logical_and(a, b)

        taps3 = [(dh, dw) for dh in (-1, 0, 1) for dw in (-1, 0, 1)
                 if (dh, dw) != (0, 0)]
        mask3 = {t: and_mask(row_mask(t[0]), col_mask(t[1])) for t in taps3}
        if use_cbam:
            mh7 = {dh: row_mask(dh) for dh in range(-3, 4)}
            mw7 = {dw: col_mask(dw) for dw in range(-3, 4) if dw != 0}

        def tap(a, off, mask):
            """out[.., p] = a[.., p + off], zero outside the image (via mask)."""
            t = a if off % HW == 0 else pltpu.roll(a, shift=(-off) % HW,
                                                   axis=a.ndim - 1)
            return t if mask is None else jnp.where(mask, t, 0.0)

        # Weights / biases read once per grid step (BN scales folded in wrapper).
        wdw = wdw_ref[...]                        # (C, 9)  == dw weight * s1
        b1 = b1_ref[...]                          # (C, 1)
        wpw = wpw_ref[...]                        # (Cout, C) == pw weight * s2
        b2 = b2_ref[...]                          # (Cout, 1)
        if use_cbam:
            w1 = w1_ref[...]                      # (C, Cr)
            w2 = w2_ref[...]                      # (C, Cr)
            wsp = wsp_ref[...]                    # (14, 7), rows = dh x {max, mean}

        for n in range(Nb):                       # static unroll: images per step
            xi = x_ref[n]                         # (C, HW), lane-dense

            # ---- depthwise 3x3, stride 1, padding 1 (BN1 scale pre-folded) ---
            # TODO(synk): stride > 1 for the depthwise conv is not implemented.
            acc = xi * wdw[:, 4:5]                # center tap: no mask, no zero-init
            for dh, dw in taps3:
                t = (dh + 1) * 3 + (dw + 1)
                acc = acc + tap(xi, dh * W + dw, mask3[(dh, dw)]) * wdw[:, t:t + 1]

            # ---- BN1 bias + Hardswish ---------------------------------------
            y = acc + b1
            y = y * jnp.clip(y + 3.0, 0.0, 6.0) * (1.0 / 6.0)

            if use_cbam:
                # Channel gate: GAP -> 1x1 -> ReLU -> 1x1 -> Hardsigmoid
                # (VPU/XLU broadcast-multiplies + reductions, no tiny MXU matmuls).
                ch = jnp.sum(y, axis=1, keepdims=True) * (1.0 / HW)          # (C,1)
                h1 = jnp.maximum(
                    jnp.sum(ch * w1, axis=0, keepdims=True), 0.0)            # (1,Cr)
                z = jnp.sum(w2 * h1, axis=1, keepdims=True)                  # (C,1)
                y = y * (jnp.clip(z + 3.0, 0.0, 6.0) * (1.0 / 6.0))

                # Spatial gate: stack the 7 dh-shifted copies of [max_c; mean_c]
                # into one (14, HW) slab, 7 dw taps, one sublane reduction.
                mx = jnp.max(y, axis=0, keepdims=True)                       # (1,HW)
                av = jnp.sum(y, axis=0, keepdims=True) * (1.0 / C)           # (1,HW)
                for kh, dh in enumerate(range(-3, 4)):
                    m = mh7[dh]
                    s_ref[2 * kh:2 * kh + 1, :] = tap(mx, dh * W, m)
                    s_ref[2 * kh + 1:2 * kh + 2, :] = tap(av, dh * W, m)
                stk = s_ref[...]                                             # (14,HW)
                sp_acc = stk * wsp[:, 3:4]                                   # dw = 0
                for kw, dw in ((0, -3), (1, -2), (2, -1), (4, 1), (5, 2), (6, 3)):
                    sp_acc = sp_acc + tap(stk, dw, mw7[dw]) * wsp[:, kw:kw + 1]
                sp = jnp.sum(sp_acc, axis=0, keepdims=True)                  # (1,HW)
                y = y * jax.nn.sigmoid(sp)

            # ---- pointwise 1x1 (one MXU matmul per image, BN2 scale folded) --
            # TODO(synk): cast operands to bf16 at production channel counts.
            out = jnp.dot(wpw, y, preferred_element_type=jnp.float32)        # (Cout,HW)
            o_ref[n] = out + b2

    return kernel


def _pick_images_per_step(N, C, Cout, HW):
    """Images per grid step: amortize per-step overhead / enlarge DMAs, keep
    >= 2 grid steps (v7x has two TensorCores), stay well inside v7x's 64 MiB
    VMEM (32 MiB default scoped limit)."""
    per_img = 4 * HW * (2 * C + 2 * Cout + 10 * C)   # dbl-buffered I/O + live slabs
    cap = max(1, (16 * 1024 * 1024) // per_img)
    best = 1
    for nb in range(1, N + 1):
        if N % nb == 0 and nb <= cap and (N // nb >= 2 or N <= 1):
            best = nb
    return best


def convblock_forward(x_nchw, params, use_cbam=True):
    N, C, H, W = x_nchw.shape
    HW = H * W
    Cout = params['wpw'].shape[0]
    Cr = params['w1'].shape[1]

    x = x_nchw.reshape(N, C, HW).astype(jnp.float32)   # NCHW, flat spatial (free)
    Nb = _pick_images_per_step(N, C, Cout, HW)

    # Fold the (eval-mode) BN scales into the conv weights; keep biases in-kernel.
    wdw_f = (params['wdw'].reshape(C, 9) * params['s1'][:, None]).astype(jnp.float32)
    wpw_f = (params['wpw'] * params['s2'][:, None]).astype(jnp.float32)
    b1 = params['b1'].reshape(C, 1).astype(jnp.float32)
    b2 = params['b2'].reshape(Cout, 1).astype(jnp.float32)

    kernel = _make_convblock_kernel(C, Cout, H, W, Nb, use_cbam)

    def full(shape):
        nd = len(shape)
        return pl.BlockSpec(shape, lambda n: (0,) * nd)

    in_specs = [pl.BlockSpec((Nb, C, HW), lambda n: (n, 0, 0)),   # Nb images / step
                full((C, 9)),                                     # dw weight * s1
                full((C, 1))]                                     # bn1 bias
    operands = [x, wdw_f, b1]
    scratch = []
    if use_cbam:
        # Pack the 7x7 weight as (14, 7): row = (dh_idx * 2 + channel), col = dw_idx.
        wsp_f = jnp.transpose(params['wsp'], (1, 0, 2)).reshape(14, 7).astype(jnp.float32)
        in_specs += [full((C, Cr)), full((C, Cr)), full((14, 7))]
        operands += [params['w1'].astype(jnp.float32),
                     params['w2'].astype(jnp.float32), wsp_f]
        scratch = [pltpu.VMEM((14, HW), jnp.float32)]             # 7x7 stacking slab
    in_specs += [full((Cout, C)), full((Cout, 1))]
    operands += [wpw_f, b2]

    # VMEM budget from actual need (double-buffered I/O blocks + working slabs),
    # with a safety floor — not a blanket 32 MiB.
    in_bytes = Nb * C * HW * 4
    out_bytes = Nb * Cout * HW * 4
    vmem_need = 2 * (in_bytes + out_bytes) + 8 * in_bytes + (2 << 20)
    vmem_limit = int(min(100 * 2 ** 20, max(16 * 2 ** 20, 2 * vmem_need)))

    out = pl.pallas_call(
        kernel,
        out_shape=jax.ShapeDtypeStruct((N, Cout, HW), jnp.float32),
        grid=(N // Nb,),
        in_specs=in_specs,
        out_specs=pl.BlockSpec((Nb, Cout, HW), lambda n: (n, 0, 0)),
        scratch_shapes=scratch,
        compiler_params=pltpu.CompilerParams(
            dimension_semantics=("parallel",),      # v7x: grid steps over 2 TCs
            vmem_limit_bytes=vmem_limit),
        # TODO(synk): for large H*W add an H-tile grid axis with a 1/3-row halo.
    )(*operands)

    return out.reshape(N, Cout, H, W)               # already NCHW, no transpose


def ref_forward(x, p, use_cbam=True):
    """Pure-JAX reference (NCHW) mirroring the PyTorch forward (eval-mode BN)."""
    C = x.shape[1]
    wdw = p['wdw'][:, None, :, :]                            # (C,1,3,3) OIHW, grouped
    y = lax.conv_general_dilated(x, wdw, (1, 1), ((1, 1), (1, 1)),
                                 feature_group_count=C,
                                 dimension_numbers=('NCHW', 'OIHW', 'NCHW'))
    y = y * p['s1'][None, :, None, None] + p['b1'][None, :, None, None]
    y = y * jnp.clip(y + 3.0, 0.0, 6.0) / 6.0
    if use_cbam:
        ch = jnp.mean(y, axis=(2, 3))                        # (N, C)
        z = jnp.maximum(ch @ p['w1'], 0.0) @ p['w2'].T       # (N, C)
        att = jnp.clip(z + 3.0, 0.0, 6.0) / 6.0
        y = y * att[:, :, None, None]
        mx = jnp.max(y, axis=1, keepdims=True)
        av = jnp.mean(y, axis=1, keepdims=True)
        sp = lax.conv_general_dilated(jnp.concatenate([mx, av], axis=1),
                                      p['wsp'][None], (1, 1), ((3, 3), (3, 3)),
                                      dimension_numbers=('NCHW', 'OIHW', 'NCHW'))
        y = y * jax.nn.sigmoid(sp)
    out = jnp.einsum('nchw,oc->nohw', y, p['wpw'])
    out = out * p['s2'][None, :, None, None] + p['b2'][None, :, None, None]
    return out


if __name__ == "__main__":
    N, Cin, Cout, H, W = 4, 32, 16, 16, 16
    Cr = max(Cin // 16, 1)               # CBAM reduction_ratio = 16
    eps = 1e-5

    key = jax.random.PRNGKey(0)
    ks = jax.random.split(key, 14)

    def bn_fold(kg, kb, km, kv, c):
        gamma = 1.0 + 0.1 * jax.random.normal(kg, (c,), jnp.float32)
        beta = 0.1 * jax.random.normal(kb, (c,), jnp.float32)
        mean = 0.1 * jax.random.normal(km, (c,), jnp.float32)
        var = jax.random.uniform(kv, (c,), jnp.float32, 0.5, 1.5)
        s = gamma / jnp.sqrt(var + eps)
        return s, beta - mean * s

    s1, b1 = bn_fold(ks[0], ks[1], ks[2], ks[3], Cin)
    s2, b2 = bn_fold(ks[4], ks[5], ks[6], ks[7], Cout)

    params = dict(
        wdw=0.2 * jax.random.normal(ks[8], (Cin, 3, 3), jnp.float32),   # dw.weight
        s1=s1, b1=b1,
        w1=0.2 * jax.random.normal(ks[9], (Cin, Cr), jnp.float32),      # gate conv1^T
        w2=0.2 * jax.random.normal(ks[10], (Cin, Cr), jnp.float32),     # gate conv2
        wsp=0.05 * jax.random.normal(ks[11], (2, 7, 7), jnp.float32),   # spatial 7x7
        wpw=0.2 * jax.random.normal(ks[12], (Cout, Cin), jnp.float32),  # pw.weight
        s2=s2, b2=b2,
    )
    x = jax.random.normal(ks[13], (N, Cin, H, W), jnp.float32)

    for use_cbam in (True, False):
        out = jax.block_until_ready(convblock_forward(x, params, use_cbam))
        ref = ref_forward(x, params, use_cbam)
        assert out.shape == (N, Cout, H, W)
        err = float(jnp.max(jnp.abs(out - ref)))
        assert jnp.allclose(out, ref, rtol=1e-4, atol=1e-4), f"max abs err {err}"

    print("KERNEL_OK")
</pallas_src>

<mosaic_0001>
module attributes {stable_mosaic.version = 11 : i64} {
  func.func @kernel(%arg0: i32, %arg1: memref<2x32x256xf32, #tpu.memory_space<vmem>>, %arg2: memref<32x9xf32, #tpu.memory_space<vmem>>, %arg3: memref<32x1xf32, #tpu.memory_space<vmem>>, %arg4: memref<32x2xf32, #tpu.memory_space<vmem>>, %arg5: memref<32x2xf32, #tpu.memory_space<vmem>>, %arg6: memref<14x7xf32, #tpu.memory_space<vmem>>, %arg7: memref<16x32xf32, #tpu.memory_space<vmem>>, %arg8: memref<16x1xf32, #tpu.memory_space<vmem>>, %arg9: memref<2x16x256xf32, #tpu.memory_space<vmem>>, %arg10: memref<14x256xf32, #tpu.memory_space<vmem>>) attributes {dimension_semantics = [#tpu.dimension_semantics<parallel>], iteration_bounds = array<i64: 2>, scalar_prefetch = 0 : i64, scratch_operands = 1 : i64, tpu.core_type = #tpu.core_type<tc>, window_params = [{transform_indices = @transform_0, window_bounds = array<i64: 2, 32, 256>}, {pipeline_mode = #tpu.pipeline_mode<synchronous>, transform_indices = @transform_1, window_bounds = array<i64: 32, 9>}, {pipeline_mode = #tpu.pipeline_mode<synchronous>, transform_indices = @transform_2, window_bounds = array<i64: 32, 1>}, {pipeline_mode = #tpu.pipeline_mode<synchronous>, transform_indices = @transform_3, window_bounds = array<i64: 32, 2>}, {pipeline_mode = #tpu.pipeline_mode<synchronous>, transform_indices = @transform_4, window_bounds = array<i64: 32, 2>}, {pipeline_mode = #tpu.pipeline_mode<synchronous>, transform_indices = @transform_5, window_bounds = array<i64: 14, 7>}, {pipeline_mode = #tpu.pipeline_mode<synchronous>, transform_indices = @transform_6, window_bounds = array<i64: 16, 32>}, {pipeline_mode = #tpu.pipeline_mode<synchronous>, transform_indices = @transform_7, window_bounds = array<i64: 16, 1>}, {transform_indices = @transform_8, window_bounds = array<i64: 2, 16, 256>}]} {
    %0 = tpu.iota {dimensions = array<i32: 1>} : vector<1x256xi32>
    %c15_i32 = arith.constant 15 : i32
    %1 = vector.broadcast %c15_i32 : i32 to vector<1x256xi32>
    %2 = arith.andi %0, %1 : vector<1x256xi32>
    %c16_i32 = arith.constant 16 : i32
    %3 = vector.broadcast %c16_i32 : i32 to vector<1x256xi32>
    %4 = arith.cmpi sge, %0, %3 : vector<1x256xi32>
    %c1_i32 = arith.constant 1 : i32
    %5 = vector.broadcast %c1_i32 : i32 to vector<1x256xi32>
    %6 = arith.cmpi sge, %2, %5 : vector<1x256xi32>
    %7 = arith.andi %4, %6 : vector<1x256xi1>
    %c16_i32_0 = arith.constant 16 : i32
    %8 = vector.broadcast %c16_i32_0 : i32 to vector<1x256xi32>
    %9 = arith.cmpi sge, %0, %8 : vector<1x256xi32>
    %c16_i32_1 = arith.constant 16 : i32
    %10 = vector.broadcast %c16_i32_1 : i32 to vector<1x256xi32>
    %11 = arith.cmpi sge, %0, %10 : vector<1x256xi32>
    %c15_i32_2 = arith.constant 15 : i32
    %12 = vector.broadcast %c15_i32_2 : i32 to vector<1x256xi32>
    %13 = arith.cmpi slt, %2, %12 : vector<1x256xi32>
    %14 = arith.andi %11, %13 : vector<1x256xi1>
    %c1_i32_3 = arith.constant 1 : i32
    %15 = vector.broadcast %c1_i32_3 : i32 to vector<1x256xi32>
    %16 = arith.cmpi sge, %2, %15 : vector<1x256xi32>
    %c15_i32_4 = arith.constant 15 : i32
    %17 = vector.broadcast %c15_i32_4 : i32 to vector<1x256xi32>
    %18 = arith.cmpi slt, %2, %17 : vector<1x256xi32>
    %c240_i32 = arith.constant 240 : i32
    %19 = vector.broadcast %c240_i32 : i32 to vector<1x256xi32>
    %20 = arith.cmpi slt, %0, %19 : vector<1x256xi32>
    %c1_i32_5 = arith.constant 1 : i32
    %21 = vector.broadcast %c1_i32_5 : i32 to vector<1x256xi32>
    %22 = arith.cmpi sge, %2, %21 : vector<1x256xi32>
    %23 = arith.andi %20, %22 : vector<1x256xi1>
    %c240_i32_6 = arith.constant 240 : i32
    %24 = vector.broadcast %c240_i32_6 : i32 to vector<1x256xi32>
    %25 = arith.cmpi slt, %0, %24 : vector<1x256xi32>
    %c240_i32_7 = arith.constant 240 : i32
    %26 = vector.broadcast %c240_i32_7 : i32 to vector<1x256xi32>
    %27 = arith.cmpi slt, %0, %26 : vector<1x256xi32>
    %c15_i32_8 = arith.constant 15 : i32
    %28 = vector.broadcast %c15_i32_8 : i32 to vector<1x256xi32>
    %29 = arith.cmpi slt, %2, %28 : vector<1x256xi32>
    %30 = arith.andi %27, %29 : vector<1x256xi1>
    %c48_i32 = arith.constant 48 : i32
    %31 = vector.broadcast %c48_i32 : i32 to vector<1x256xi32>
    %32 = arith.cmpi sge, %0, %31 : vector<1x256xi32>
    %c32_i32 = arith.constant 32 : i32
    %33 = vector.broadcast %c32_i32 : i32 to vector<1x256xi32>
    %34 = arith.cmpi sge, %0, %33 : vector<1x256xi32>
    %c16_i32_9 = arith.constant 16 : i32
    %35 = vector.broadcast %c16_i32_9 : i32 to vector<1x256xi32>
    %36 = arith.cmpi sge, %0, %35 : vector<1x256xi32>
    %c240_i32_10 = arith.constant 240 : i32
    %37 = vector.broadcast %c240_i32_10 : i32 to vector<1x256xi32>
    %38 = arith.cmpi slt, %0, %37 : vector<1x256xi32>
    %c224_i32 = arith.constant 224 : i32
    %39 = vector.broadcast %c224_i32 : i32 to vector<1x256xi32>
    %40 = arith.cmpi slt, %0, %39 : vector<1x256xi32>
    %c208_i32 = arith.constant 208 : i32
    %41 = vector.broadcast %c208_i32 : i32 to vector<1x256xi32>
    %42 = arith.cmpi slt, %0, %41 : vector<1x256xi32>
    %c3_i32 = arith.constant 3 : i32
    %43 = vector.broadcast %c3_i32 : i32 to vector<1x256xi32>
    %44 = arith.cmpi sge, %2, %43 : vector<1x256xi32>
    %c2_i32 = arith.constant 2 : i32
    %45 = vector.broadcast %c2_i32 : i32 to vector<1x256xi32>
    %46 = arith.cmpi sge, %2, %45 : vector<1x256xi32>
    %c1_i32_11 = arith.constant 1 : i32
    %47 = vector.broadcast %c1_i32_11 : i32 to vector<1x256xi32>
    %48 = arith.cmpi sge, %2, %47 : vector<1x256xi32>
    %c15_i32_12 = arith.constant 15 : i32
    %49 = vector.broadcast %c15_i32_12 : i32 to vector<1x256xi32>
    %50 = arith.cmpi slt, %2, %49 : vector<1x256xi32>
    %c14_i32 = arith.constant 14 : i32
    %51 = vector.broadcast %c14_i32 : i32 to vector<1x256xi32>
    %52 = arith.cmpi slt, %2, %51 : vector<1x256xi32>
    %c13_i32 = arith.constant 13 : i32
    %53 = vector.broadcast %c13_i32 : i32 to vector<1x256xi32>
    %54 = arith.cmpi slt, %2, %53 : vector<1x256xi32>
    %c0 = arith.constant 0 : index
    %c0_13 = arith.constant 0 : index
    %55 = vector.load %arg2[%c0, %c0_13] : memref<32x9xf32, #tpu.memory_space<vmem>>, vector<32x9xf32>
    %c0_14 = arith.constant 0 : index
    %c0_15 = arith.constant 0 : index
    %56 = vector.load %arg3[%c0_14, %c0_15] : memref<32x1xf32, #tpu.memory_space<vmem>>, vector<32x1xf32>
    %c0_16 = arith.constant 0 : index
    %c0_17 = arith.constant 0 : index
    %57 = vector.load %arg7[%c0_16, %c0_17] : memref<16x32xf32, #tpu.memory_space<vmem>>, vector<16x32xf32>
    %c0_18 = arith.constant 0 : index
    %c0_19 = arith.constant 0 : index
    %58 = vector.load %arg8[%c0_18, %c0_19] : memref<16x1xf32, #tpu.memory_space<vmem>>, vector<16x1xf32>
    %c0_20 = arith.constant 0 : index
    %c0_21 = arith.constant 0 : index
    %59 = vector.load %arg4[%c0_20, %c0_21] : memref<32x2xf32, #tpu.memory_space<vmem>>, vector<32x2xf32>
    %c0_22 = arith.constant 0 : index
    %c0_23 = arith.constant 0 : index
    %60 = vector.load %arg5[%c0_22, %c0_23] : memref<32x2xf32, #tpu.memory_space<vmem>>, vector<32x2xf32>
    %c0_24 = arith.constant 0 : index
    %c0_25 = arith.constant 0 : index
    %61 = vector.load %arg6[%c0_24, %c0_25] : memref<14x7xf32, #tpu.memory_space<vmem>>, vector<14x7xf32>
    %c0_26 = arith.constant 0 : index
    %c0_27 = arith.constant 0 : index
    %c0_28 = arith.constant 0 : index
    %62 = vector.load %arg1[%c0_26, %c0_27, %c0_28] : memref<2x32x256xf32, #tpu.memory_space<vmem>>, vector<1x32x256xf32>
    %63 = vector.shape_cast %62 : vector<1x32x256xf32> to vector<32x256xf32>
    %64 = vector.extract_strided_slice %55 {offsets = [0, 4], sizes = [32, 1], strides = [1, 1]} : vector<32x9xf32> to vector<32x1xf32>
    %65 = vector.broadcast %64 : vector<32x1xf32> to vector<32x256xf32>
    %66 = arith.mulf %63, %65 : vector<32x256xf32>
    %c17_i32 = arith.constant 17 : i32
    %67 = tpu.dynamic_rotate %63 by %c17_i32 dim 1 : vector<32x256xf32>, i32 -> vector<32x256xf32>
    %cst = arith.constant 0.000000e+00 : f32
    %68 = vector.shape_cast %7 : vector<1x256xi1> to vector<1x256xi1>
    %69 = vector.broadcast %68 : vector<1x256xi1> to vector<32x256xi1>
    %70 = vector.broadcast %cst : f32 to vector<32x256xf32>
    %71 = arith.select %69, %67, %70 : vector<32x256xi1>, vector<32x256xf32>
    %72 = vector.extract_strided_slice %55 {offsets = [0, 0], sizes = [32, 1], strides = [1, 1]} : vector<32x9xf32> to vector<32x1xf32>
    %73 = vector.broadcast %72 : vector<32x1xf32> to vector<32x256xf32>
    %74 = arith.mulf %71, %73 : vector<32x256xf32>
    %75 = arith.addf %66, %74 : vector<32x256xf32>
    %c16_i32_29 = arith.constant 16 : i32
    %76 = tpu.dynamic_rotate %63 by %c16_i32_29 dim 1 : vector<32x256xf32>, i32 -> vector<32x256xf32>
    %cst_30 = arith.constant 0.000000e+00 : f32
    %77 = vector.shape_cast %9 : vector<1x256xi1> to vector<1x256xi1>
    %78 = vector.broadcast %77 : vector<1x256xi1> to vector<32x256xi1>
    %79 = vector.broadcast %cst_30 : f32 to vector<32x256xf32>
    %80 = arith.select %78, %76, %79 : vector<32x256xi1>, vector<32x256xf32>
    %81 = vector.extract_strided_slice %55 {offsets = [0, 1], sizes = [32, 1], strides = [1, 1]} : vector<32x9xf32> to vector<32x1xf32>
    %82 = vector.broadcast %81 : vector<32x1xf32> to vector<32x256xf32>
    %83 = arith.mulf %80, %82 : vector<32x256xf32>
    %84 = arith.addf %75, %83 : vector<32x256xf32>
    %c15_i32_31 = arith.constant 15 : i32
    %85 = tpu.dynamic_rotate %63 by %c15_i32_31 dim 1 : vector<32x256xf32>, i32 -> vector<32x256xf32>
    %cst_32 = arith.constant 0.000000e+00 : f32
    %86 = vector.shape_cast %14 : vector<1x256xi1> to vector<1x256xi1>
    %87 = vector.broadcast %86 : vector<1x256xi1> to vector<32x256xi1>
    %88 = vector.broadcast %cst_32 : f32 to vector<32x256xf32>
    %89 = arith.select %87, %85, %88 : vector<32x256xi1>, vector<32x256xf32>
    %90 = vector.extract_strided_slice %55 {offsets = [0, 2], sizes = [32, 1], strides = [1, 1]} : vector<32x9xf32> to vector<32x1xf32>
    %91 = vector.broadcast %90 : vector<32x1xf32> to vector<32x256xf32>
    %92 = arith.mulf %89, %91 : vector<32x256xf32>
    %93 = arith.addf %84, %92 : vector<32x256xf32>
    %c1_i32_33 = arith.constant 1 : i32
    %94 = tpu.dynamic_rotate %63 by %c1_i32_33 dim 1 : vector<32x256xf32>, i32 -> vector<32x256xf32>
    %cst_34 = arith.constant 0.000000e+00 : f32
    %95 = vector.shape_cast %16 : vector<1x256xi1> to vector<1x256xi1>
    %96 = vector.broadcast %95 : vector<1x256xi1> to vector<32x256xi1>
    %97 = vector.broadcast %cst_34 : f32 to vector<32x256xf32>
    %98 = arith.select %96, %94, %97 : vector<32x256xi1>, vector<32x256xf32>
    %99 = vector.extract_strided_slice %55 {offsets = [0, 3], sizes = [32, 1], strides = [1, 1]} : vector<32x9xf32> to vector<32x1xf32>
    %100 = vector.broadcast %99 : vector<32x1xf32> to vector<32x256xf32>
    %101 = arith.mulf %98, %100 : vector<32x256xf32>
    %102 = arith.addf %93, %101 : vector<32x256xf32>
    %c255_i32 = arith.constant 255 : i32
    %103 = tpu.dynamic_rotate %63 by %c255_i32 dim 1 : vector<32x256xf32>, i32 -> vector<32x256xf32>
    %cst_35 = arith.constant 0.000000e+00 : f32
    %104 = vector.shape_cast %18 : vector<1x256xi1> to vector<1x256xi1>
    %105 = vector.broadcast %104 : vector<1x256xi1> to vector<32x256xi1>
    %106 = vector.broadcast %cst_35 : f32 to vector<32x256xf32>
    %107 = arith.select %105, %103, %106 : vector<32x256xi1>, vector<32x256xf32>
    %108 = vector.extract_strided_slice %55 {offsets = [0, 5], sizes = [32, 1], strides = [1, 1]} : vector<32x9xf32> to vector<32x1xf32>
    %109 = vector.broadcast %108 : vector<32x1xf32> to vector<32x256xf32>
    %110 = arith.mulf %107, %109 : vector<32x256xf32>
    %111 = arith.addf %102, %110 : vector<32x256xf32>
    %c241_i32 = arith.constant 241 : i32
    %112 = tpu.dynamic_rotate %63 by %c241_i32 dim 1 : vector<32x256xf32>, i32 -> vector<32x256xf32>
    %cst_36 = arith.constant 0.000000e+00 : f32
    %113 = vector.shape_cast %23 : vector<1x256xi1> to vector<1x256xi1>
    %114 = vector.broadcast %113 : vector<1x256xi1> to vector<32x256xi1>
    %115 = vector.broadcast %cst_36 : f32 to vector<32x256xf32>
    %116 = arith.select %114, %112, %115 : vector<32x256xi1>, vector<32x256xf32>
    %117 = vector.extract_strided_slice %55 {offsets = [0, 6], sizes = [32, 1], strides = [1, 1]} : vector<32x9xf32> to vector<32x1xf32>
    %118 = vector.broadcast %117 : vector<32x1xf32> to vector<32x256xf32>
    %119 = arith.mulf %116, %118 : vector<32x256xf32>
    %120 = arith.addf %111, %119 : vector<32x256xf32>
    %c240_i32_37 = arith.constant 240 : i32
    %121 = tpu.dynamic_rotate %63 by %c240_i32_37 dim 1 : vector<32x256xf32>, i32 -> vector<32x256xf32>
    %cst_38 = arith.constant 0.000000e+00 : f32
    %122 = vector.shape_cast %25 : vector<1x256xi1> to vector<1x256xi1>
    %123 = vector.broadcast %122 : vector<1x256xi1> to vector<32x256xi1>
    %124 = vector.broadcast %cst_38 : f32 to vector<32x256xf32>
    %125 = arith.select %123, %121, %124 : vector<32x256xi1>, vector<32x256xf32>
    %126 = vector.extract_strided_slice %55 {offsets = [0, 7], sizes = [32, 1], strides = [1, 1]} : vector<32x9xf32> to vector<32x1xf32>
    %127 = vector.broadcast %126 : vector<32x1xf32> to vector<32x256xf32>
    %128 = arith.mulf %125, %127 : vector<32x256xf32>
    %129 = arith.addf %120, %128 : vector<32x256xf32>
    %c239_i32 = arith.constant 239 : i32
    %130 = tpu.dynamic_rotate %63 by %c239_i32 dim 1 : vector<32x256xf32>, i32 -> vector<32x256xf32>
    %cst_39 = arith.constant 0.000000e+00 : f32
    %131 = vector.shape_cast %30 : vector<1x256xi1> to vector<1x256xi1>
    %132 = vector.broadcast %131 : vector<1x256xi1> to vector<32x256xi1>
    %133 = vector.broadcast %cst_39 : f32 to vector<32x256xf32>
    %134 = arith.select %132, %130, %133 : vector<32x256xi1>, vector<32x256xf32>
    %135 = vector.extract_strided_slice %55 {offsets = [0, 8], sizes = [32, 1], strides = [1, 1]} : vector<32x9xf32> to vector<32x1xf32>
    %136 = vector.broadcast %135 : vector<32x1xf32> to vector<32x256xf32>
    %137 = arith.mulf %134, %136 : vector<32x256xf32>
    %138 = arith.addf %129, %137 : vector<32x256xf32>
    %139 = vector.broadcast %56 : vector<32x1xf32> to vector<32x256xf32>
    %140 = arith.addf %138, %139 : vector<32x256xf32>
    %cst_40 = arith.constant 3.000000e+00 : f32
    %141 = vector.broadcast %cst_40 : f32 to vector<32x256xf32>
    %142 = arith.addf %140, %141 : vector<32x256xf32>
    %cst_41 = arith.constant 0.000000e+00 : f32
    %cst_42 = arith.constant 6.000000e+00 : f32
    %143 = vector.broadcast %cst_41 : f32 to vector<32x256xf32>
    %144 = arith.maximumf %143, %142 : vector<32x256xf32>
    %145 = vector.broadcast %cst_42 : f32 to vector<32x256xf32>
    %146 = arith.minimumf %145, %144 : vector<32x256xf32>
    %147 = arith.mulf %140, %146 : vector<32x256xf32>
    %cst_43 = arith.constant 0.166666672 : f32
    %148 = vector.broadcast %cst_43 : f32 to vector<32x256xf32>
    %149 = arith.mulf %147, %148 : vector<32x256xf32>
    %cst_44 = arith.constant dense<0.000000e+00> : vector<32xf32>
    %150 = vector.multi_reduction <add>, %149, %cst_44 [1] : vector<32x256xf32> to vector<32xf32>
    %151 = vector.shape_cast %150 : vector<32xf32> to vector<32x1xf32>
    %cst_45 = arith.constant 3.906250e-03 : f32
    %152 = vector.broadcast %cst_45 : f32 to vector<32x1xf32>
    %153 = arith.mulf %151, %152 : vector<32x1xf32>
    %154 = vector.broadcast %153 : vector<32x1xf32> to vector<32x2xf32>
    %155 = arith.mulf %154, %59 : vector<32x2xf32>
    %cst_46 = arith.constant dense<0.000000e+00> : vector<2xf32>
    %156 = vector.multi_reduction <add>, %155, %cst_46 [0] : vector<32x2xf32> to vector<2xf32>
    %157 = vector.shape_cast %156 : vector<2xf32> to vector<1x2xf32>
    %cst_47 = arith.constant 0.000000e+00 : f32
    %158 = vector.broadcast %cst_47 : f32 to vector<1x2xf32>
    %159 = arith.maximumf %157, %158 : vector<1x2xf32>
    %160 = vector.broadcast %159 : vector<1x2xf32> to vector<32x2xf32>
    %161 = arith.mulf %60, %160 : vector<32x2xf32>
    %cst_48 = arith.constant dense<0.000000e+00> : vector<32xf32>
    %162 = vector.multi_reduction <add>, %161, %cst_48 [1] : vector<32x2xf32> to vector<32xf32>
    %163 = vector.shape_cast %162 : vector<32xf32> to vector<32x1xf32>
    %cst_49 = arith.constant 3.000000e+00 : f32
    %164 = vector.broadcast %cst_49 : f32 to vector<32x1xf32>
    %165 = arith.addf %163, %164 : vector<32x1xf32>
    %cst_50 = arith.constant 0.000000e+00 : f32
    %cst_51 = arith.constant 6.000000e+00 : f32
    %166 = vector.broadcast %cst_50 : f32 to vector<32x1xf32>
    %167 = arith.maximumf %166, %165 : vector<32x1xf32>
    %168 = vector.broadcast %cst_51 : f32 to vector<32x1xf32>
    %169 = arith.minimumf %168, %167 : vector<32x1xf32>
    %cst_52 = arith.constant 0.166666672 : f32
    %170 = vector.broadcast %cst_52 : f32 to vector<32x1xf32>
    %171 = arith.mulf %169, %170 : vector<32x1xf32>
    %172 = vector.broadcast %171 : vector<32x1xf32> to vector<32x256xf32>
    %173 = arith.mulf %149, %172 : vector<32x256xf32>
    %cst_53 = arith.constant dense<0xFF800000> : vector<256xf32>
    %174 = vector.multi_reduction <maximumf>, %173, %cst_53 [0] : vector<32x256xf32> to vector<256xf32>
    %175 = vector.shape_cast %174 : vector<256xf32> to vector<1x256xf32>
    %cst_54 = arith.constant dense<0.000000e+00> : vector<256xf32>
    %176 = vector.multi_reduction <add>, %173, %cst_54 [0] : vector<32x256xf32> to vector<256xf32>
    %177 = vector.shape_cast %176 : vector<256xf32> to vector<1x256xf32>
    %cst_55 = arith.constant 3.125000e-02 : f32
    %178 = vector.broadcast %cst_55 : f32 to vector<1x256xf32>
    %179 = arith.mulf %177, %178 : vector<1x256xf32>
    %c48_i32_56 = arith.constant 48 : i32
    %180 = tpu.dynamic_rotate %175 by %c48_i32_56 dim 1 : vector<1x256xf32>, i32 -> vector<1x256xf32>
    %cst_57 = arith.constant 0.000000e+00 : f32
    %181 = vector.broadcast %cst_57 : f32 to vector<1x256xf32>
    %182 = arith.select %32, %180, %181 : vector<1x256xi1>, vector<1x256xf32>
    %c0_58 = arith.constant 0 : index
    %c0_59 = arith.constant 0 : index
    %183 = vector.load %arg10[%c0_58, %c0_59] : memref<14x256xf32, #tpu.memory_space<vmem>>, vector<1x256xf32>
    tpu.vector_store %arg10[%c0_58, %c0_59], %182 {strides = array<i32>} : memref<14x256xf32, #tpu.memory_space<vmem>>, vector<1x256xf32>,
    %c48_i32_60 = arith.constant 48 : i32
    %184 = tpu.dynamic_rotate %179 by %c48_i32_60 dim 1 : vector<1x256xf32>, i32 -> vector<1x256xf32>
    %cst_61 = arith.constant 0.000000e+00 : f32
    %185 = vector.broadcast %cst_61 : f32 to vector<1x256xf32>
    %186 = arith.select %32, %184, %185 : vector<1x256xi1>, vector<1x256xf32>
    %c1 = arith.constant 1 : index
    %c0_62 = arith.constant 0 : index
    %187 = vector.load %arg10[%c1, %c0_62] : memref<14x256xf32, #tpu.memory_space<vmem>>, vector<1x256xf32>
    tpu.vector_store %arg10[%c1, %c0_62], %186 {strides = array<i32>} : memref<14x256xf32, #tpu.memory_space<vmem>>, vector<1x256xf32>,
    %c32_i32_63 = arith.constant 32 : i32
    %188 = tpu.dynamic_rotate %175 by %c32_i32_63 dim 1 : vector<1x256xf32>, i32 -> vector<1x256xf32>
    %cst_64 = arith.constant 0.000000e+00 : f32
    %189 = vector.broadcast %cst_64 : f32 to vector<1x256xf32>
    %190 = arith.select %34, %188, %189 : vector<1x256xi1>, vector<1x256xf32>
    %c2 = arith.constant 2 : index
    %c0_65 = arith.constant 0 : index
    %191 = vector.load %arg10[%c2, %c0_65] : memref<14x256xf32, #tpu.memory_space<vmem>>, vector<1x256xf32>
    tpu.vector_store %arg10[%c2, %c0_65], %190 {strides = array<i32>} : memref<14x256xf32, #tpu.memory_space<vmem>>, vector<1x256xf32>,
    %c32_i32_66 = arith.constant 32 : i32
    %192 = tpu.dynamic_rotate %179 by %c32_i32_66 dim 1 : vector<1x256xf32>, i32 -> vector<1x256xf32>
    %cst_67 = arith.constant 0.000000e+00 : f32
    %193 = vector.broadcast %cst_67 : f32 to vector<1x256xf32>
    %194 = arith.select %34, %192, %193 : vector<1x256xi1>, vector<1x256xf32>
    %c3 = arith.constant 3 : index
    %c0_68 = arith.constant 0 : index
    %195 = vector.load %arg10[%c3, %c0_68] : memref<14x256xf32, #tpu.memory_space<vmem>>, vector<1x256xf32>
    tpu.vector_store %arg10[%c3, %c0_68], %194 {strides = array<i32>} : memref<14x256xf32, #tpu.memory_space<vmem>>, vector<1x256xf32>,
    %c16_i32_69 = arith.constant 16 : i32
    %196 = tpu.dynamic_rotate %175 by %c16_i32_69 dim 1 : vector<1x256xf32>, i32 -> vector<1x256xf32>
    %cst_70 = arith.constant 0.000000e+00 : f32
    %197 = vector.broadcast %cst_70 : f32 to vector<1x256xf32>
    %198 = arith.select %36, %196, %197 : vector<1x256xi1>, vector<1x256xf32>
    %c4 = arith.constant 4 : index
    %c0_71 = arith.constant 0 : index
    %199 = vector.load %arg10[%c4, %c0_71] : memref<14x256xf32, #tpu.memory_space<vmem>>, vector<1x256xf32>
    tpu.vector_store %arg10[%c4, %c0_71], %198 {strides = array<i32>} : memref<14x256xf32, #tpu.memory_space<vmem>>, vector<1x256xf32>,
    %c16_i32_72 = arith.constant 16 : i32
    %200 = tpu.dynamic_rotate %179 by %c16_i32_72 dim 1 : vector<1x256xf32>, i32 -> vector<1x256xf32>
    %cst_73 = arith.constant 0.000000e+00 : f32
    %201 = vector.broadcast %cst_73 : f32 to vector<1x256xf32>
    %202 = arith.select %36, %200, %201 : vector<1x256xi1>, vector<1x256xf32>
    %c5 = arith.constant 5 : index
    %c0_74 = arith.constant 0 : index
    %203 = vector.load %arg10[%c5, %c0_74] : memref<14x256xf32, #tpu.memory_space<vmem>>, vector<1x256xf32>
    tpu.vector_store %arg10[%c5, %c0_74], %202 {strides = array<i32>} : memref<14x256xf32, #tpu.memory_space<vmem>>, vector<1x256xf32>,
    %c6 = arith.constant 6 : index
    %c0_75 = arith.constant 0 : index
    %204 = vector.load %arg10[%c6, %c0_75] : memref<14x256xf32, #tpu.memory_space<vmem>>, vector<1x256xf32>
    tpu.vector_store %arg10[%c6, %c0_75], %175 {strides = array<i32>} : memref<14x256xf32, #tpu.memory_space<vmem>>, vector<1x256xf32>,
    %c7 = arith.constant 7 : index
    %c0_76 = arith.constant 0 : index
    %205 = vector.load %arg10[%c7, %c0_76] : memref<14x256xf32, #tpu.memory_space<vmem>>, vector<1x256xf32>
    tpu.vector_store %arg10[%c7, %c0_76], %179 {strides = array<i32>} : memref<14x256xf32, #tpu.memory_space<vmem>>, vector<1x256xf32>,
    %c240_i32_77 = arith.constant 240 : i32
    %206 = tpu.dynamic_rotate %175 by %c240_i32_77 dim 1 : vector<1x256xf32>, i32 -> vector<1x256xf32>
    %cst_78 = arith.constant 0.000000e+00 : f32
    %207 = vector.broadcast %cst_78 : f32 to vector<1x256xf32>
    %208 = arith.select %38, %206, %207 : vector<1x256xi1>, vector<1x256xf32>
    %c8 = arith.constant 8 : index
    %c0_79 = arith.constant 0 : index
    %209 = vector.load %arg10[%c8, %c0_79] : memref<14x256xf32, #tpu.memory_space<vmem>>, vector<1x256xf32>
    tpu.vector_store %arg10[%c8, %c0_79], %208 {strides = array<i32>} : memref<14x256xf32, #tpu.memory_space<vmem>>, vector<1x256xf32>,
    %c240_i32_80 = arith.constant 240 : i32
    %210 = tpu.dynamic_rotate %179 by %c240_i32_80 dim 1 : vector<1x256xf32>, i32 -> vector<1x256xf32>
    %cst_81 = arith.constant 0.000000e+00 : f32
    %211 = vector.broadcast %cst_81 : f32 to vector<1x256xf32>
    %212 = arith.select %38, %210, %211 : vector<1x256xi1>, vector<1x256xf32>
    %c9 = arith.constant 9 : index
    %c0_82 = arith.constant 0 : index
    %213 = vector.load %arg10[%c9, %c0_82] : memref<14x256xf32, #tpu.memory_space<vmem>>, vector<1x256xf32>
    tpu.vector_store %arg10[%c9, %c0_82], %212 {strides = array<i32>} : memref<14x256xf32, #tpu.memory_space<vmem>>, vector<1x256xf32>,
    %c224_i32_83 = arith.constant 224 : i32
    %214 = tpu.dynamic_rotate %175 by %c224_i32_83 dim 1 : vector<1x256xf32>, i32 -> vector<1x256xf32>
    %cst_84 = arith.constant 0.000000e+00 : f32
    %215 = vector.broadcast %cst_84 : f32 to vector<1x256xf32>
    %216 = arith.select %40, %214, %215 : vector<1x256xi1>, vector<1x256xf32>
    %c10 = arith.constant 10 : index
    %c0_85 = arith.constant 0 : index
    %217 = vector.load %arg10[%c10, %c0_85] : memref<14x256xf32, #tpu.memory_space<vmem>>, vector<1x256xf32>
    tpu.vector_store %arg10[%c10, %c0_85], %216 {strides = array<i32>} : memref<14x256xf32, #tpu.memory_space<vmem>>, vector<1x256xf32>,
    %c224_i32_86 = arith.constant 224 : i32
    %218 = tpu.dynamic_rotate %179 by %c224_i32_86 dim 1 : vector<1x256xf32>, i32 -> vector<1x256xf32>
    %cst_87 = arith.constant 0.000000e+00 : f32
    %219 = vector.broadcast %cst_87 : f32 to vector<1x256xf32>
    %220 = arith.select %40, %218, %219 : vector<1x256xi1>, vector<1x256xf32>
    %c11 = arith.constant 11 : index
    %c0_88 = arith.constant 0 : index
    %221 = vector.load %arg10[%c11, %c0_88] : memref<14x256xf32, #tpu.memory_space<vmem>>, vector<1x256xf32>
    tpu.vector_store %arg10[%c11, %c0_88], %220 {strides = array<i32>} : memref<14x256xf32, #tpu.memory_space<vmem>>, vector<1x256xf32>,
    %c208_i32_89 = arith.constant 208 : i32
    %222 = tpu.dynamic_rotate %175 by %c208_i32_89 dim 1 : vector<1x256xf32>, i32 -> vector<1x256xf32>
    %cst_90 = arith.constant 0.000000e+00 : f32
    %223 = vector.broadcast %cst_90 : f32 to vector<1x256xf32>
    %224 = arith.select %42, %222, %223 : vector<1x256xi1>, vector<1x256xf32>
    %c12 = arith.constant 12 : index
    %c0_91 = arith.constant 0 : index
    %225 = vector.load %arg10[%c12, %c0_91] : memref<14x256xf32, #tpu.memory_space<vmem>>, vector<1x256xf32>
    tpu.vector_store %arg10[%c12, %c0_91], %224 {strides = array<i32>} : memref<14x256xf32, #tpu.memory_space<vmem>>, vector<1x256xf32>,
    %c208_i32_92 = arith.constant 208 : i32
    %226 = tpu.dynamic_rotate %179 by %c208_i32_92 dim 1 : vector<1x256xf32>, i32 -> vector<1x256xf32>
    %cst_93 = arith.constant 0.000000e+00 : f32
    %227 = vector.broadcast %cst_93 : f32 to vector<1x256xf32>
    %228 = arith.select %42, %226, %227 : vector<1x256xi1>, vector<1x256xf32>
    %c13 = arith.constant 13 : index
    %c0_94 = arith.constant 0 : index
    %229 = vector.load %arg10[%c13, %c0_94] : memref<14x256xf32, #tpu.memory_space<vmem>>, vector<1x256xf32>
    tpu.vector_store %arg10[%c13, %c0_94], %228 {strides = array<i32>} : memref<14x256xf32, #tpu.memory_space<vmem>>, vector<1x256xf32>,
    %c0_95 = arith.constant 0 : index
    %c0_96 = arith.constant 0 : index
    %230 = vector.load %arg10[%c0_95, %c0_96] : memref<14x256xf32, #tpu.memory_space<vmem>>, vector<14x256xf32>
    %231 = vector.extract_strided_slice %61 {offsets = [0, 3], sizes = [14, 1], strides = [1, 1]} : vector<14x7xf32> to vector<14x1xf32>
    %232 = vector.broadcast %231 : vector<14x1xf32> to vector<14x256xf32>
    %233 = arith.mulf %230, %232 : vector<14x256xf32>
    %c3_i32_97 = arith.constant 3 : i32
    %234 = tpu.dynamic_rotate %230 by %c3_i32_97 dim 1 : vector<14x256xf32>, i32 -> vector<14x256xf32>
    %cst_98 = arith.constant 0.000000e+00 : f32
    %235 = vector.shape_cast %44 : vector<1x256xi1> to vector<1x256xi1>
    %236 = vector.broadcast %235 : vector<1x256xi1> to vector<14x256xi1>
    %237 = vector.broadcast %cst_98 : f32 to vector<14x256xf32>
    %238 = arith.select %236, %234, %237 : vector<14x256xi1>, vector<14x256xf32>
    %239 = vector.extract_strided_slice %61 {offsets = [0, 0], sizes = [14, 1], strides = [1, 1]} : vector<14x7xf32> to vector<14x1xf32>
    %240 = vector.broadcast %239 : vector<14x1xf32> to vector<14x256xf32>
    %241 = arith.mulf %238, %240 : vector<14x256xf32>
    %242 = arith.addf %233, %241 : vector<14x256xf32>
    %c2_i32_99 = arith.constant 2 : i32
    %243 = tpu.dynamic_rotate %230 by %c2_i32_99 dim 1 : vector<14x256xf32>, i32 -> vector<14x256xf32>
    %cst_100 = arith.constant 0.000000e+00 : f32
    %244 = vector.shape_cast %46 : vector<1x256xi1> to vector<1x256xi1>
    %245 = vector.broadcast %244 : vector<1x256xi1> to vector<14x256xi1>
    %246 = vector.broadcast %cst_100 : f32 to vector<14x256xf32>
    %247 = arith.select %245, %243, %246 : vector<14x256xi1>, vector<14x256xf32>
    %248 = vector.extract_strided_slice %61 {offsets = [0, 1], sizes = [14, 1], strides = [1, 1]} : vector<14x7xf32> to vector<14x1xf32>
    %249 = vector.broadcast %248 : vector<14x1xf32> to vector<14x256xf32>
    %250 = arith.mulf %247, %249 : vector<14x256xf32>
    %251 = arith.addf %242, %250 : vector<14x256xf32>
    %c1_i32_101 = arith.constant 1 : i32
    %252 = tpu.dynamic_rotate %230 by %c1_i32_101 dim 1 : vector<14x256xf32>, i32 -> vector<14x256xf32>
    %cst_102 = arith.constant 0.000000e+00 : f32
    %253 = vector.shape_cast %48 : vector<1x256xi1> to vector<1x256xi1>
    %254 = vector.broadcast %253 : vector<1x256xi1> to vector<14x256xi1>
    %255 = vector.broadcast %cst_102 : f32 to vector<14x256xf32>
    %256 = arith.select %254, %252, %255 : vector<14x256xi1>, vector<14x256xf32>
    %257 = vector.extract_strided_slice %61 {offsets = [0, 2], sizes = [14, 1], strides = [1, 1]} : vector<14x7xf32> to vector<14x1xf32>
    %258 = vector.broadcast %257 : vector<14x1xf32> to vector<14x256xf32>
    %259 = arith.mulf %256, %258 : vector<14x256xf32>
    %260 = arith.addf %251, %259 : vector<14x256xf32>
    %c255_i32_103 = arith.constant 255 : i32
    %261 = tpu.dynamic_rotate %230 by %c255_i32_103 dim 1 : vector<14x256xf32>, i32 -> vector<14x256xf32>
    %cst_104 = arith.constant 0.000000e+00 : f32
    %262 = vector.shape_cast %50 : vector<1x256xi1> to vector<1x256xi1>
    %263 = vector.broadcast %262 : vector<1x256xi1> to vector<14x256xi1>
    %264 = vector.broadcast %cst_104 : f32 to vector<14x256xf32>
    %265 = arith.select %263, %261, %264 : vector<14x256xi1>, vector<14x256xf32>
    %266 = vector.extract_strided_slice %61 {offsets = [0, 4], sizes = [14, 1], strides = [1, 1]} : vector<14x7xf32> to vector<14x1xf32>
    %267 = vector.broadcast %266 : vector<14x1xf32> to vector<14x256xf32>
    %268 = arith.mulf %265, %267 : vector<14x256xf32>
    %269 = arith.addf %260, %268 : vector<14x256xf32>
    %c254_i32 = arith.constant 254 : i32
    %270 = tpu.dynamic_rotate %230 by %c254_i32 dim 1 : vector<14x256xf32>, i32 -> vector<14x256xf32>
    %cst_105 = arith.constant 0.000000e+00 : f32
    %271 = vector.shape_cast %52 : vector<1x256xi1> to vector<1x256xi1>
    %272 = vector.broadcast %271 : vector<1x256xi1> to vector<14x256xi1>
    %273 = vector.broadcast %cst_105 : f32 to vector<14x256xf32>
    %274 = arith.select %272, %270, %273 : vector<14x256xi1>, vector<14x256xf32>
    %275 = vector.extract_strided_slice %61 {offsets = [0, 5], sizes = [14, 1], strides = [1, 1]} : vector<14x7xf32> to vector<14x1xf32>
    %276 = vector.broadcast %275 : vector<14x1xf32> to vector<14x256xf32>
    %277 = arith.mulf %274, %276 : vector<14x256xf32>
    %278 = arith.addf %269, %277 : vector<14x256xf32>
    %c253_i32 = arith.constant 253 : i32
    %279 = tpu.dynamic_rotate %230 by %c253_i32 dim 1 : vector<14x256xf32>, i32 -> vector<14x256xf32>
    %cst_106 = arith.constant 0.000000e+00 : f32
    %280 = vector.shape_cast %54 : vector<1x256xi1> to vector<1x256xi1>
    %281 = vector.broadcast %280 : vector<1x256xi1> to vector<14x256xi1>
    %282 = vector.broadcast %cst_106 : f32 to vector<14x256xf32>
    %283 = arith.select %281, %279, %282 : vector<14x256xi1>, vector<14x256xf32>
    %284 = vector.extract_strided_slice %61 {offsets = [0, 6], sizes = [14, 1], strides = [1, 1]} : vector<14x7xf32> to vector<14x1xf32>
    %285 = vector.broadcast %284 : vector<14x1xf32> to vector<14x256xf32>
    %286 = arith.mulf %283, %285 : vector<14x256xf32>
    %287 = arith.addf %278, %286 : vector<14x256xf32>
    %cst_107 = arith.constant dense<0.000000e+00> : vector<256xf32>
    %288 = vector.multi_reduction <add>, %287, %cst_107 [0] : vector<14x256xf32> to vector<256xf32>
    %289 = vector.shape_cast %288 : vector<256xf32> to vector<1x256xf32>
    %290 = arith.negf %289 : vector<1x256xf32>
    %291 = math.exp %290 : vector<1x256xf32>
    %cst_108 = arith.constant 1.000000e+00 : f32
    %292 = vector.broadcast %cst_108 : f32 to vector<1x256xf32>
    %293 = arith.addf %292, %291 : vector<1x256xf32>
    %294 = arith.divf %292, %293 : vector<1x256xf32>
    %295 = vector.broadcast %294 : vector<1x256xf32> to vector<32x256xf32>
    %296 = arith.mulf %173, %295 : vector<32x256xf32>
    %cst_109 = arith.constant dense<0.000000e+00> : vector<16x256xf32>
    %297 = tpu.matmul %57, %296, %cst_109 {dimension_numbers = #tpu.dot_dimension_numbers<[1], [0], [0], [1], [0, 0, 1, 1], [], []>} : vector<16x32xf32>, vector<32x256xf32>, vector<16x256xf32> -> vector<16x256xf32>
    %298 = vector.broadcast %58 : vector<16x1xf32> to vector<16x256xf32>
    %299 = arith.addf %297, %298 : vector<16x256xf32>
    %c0_110 = arith.constant 0 : index
    %c0_111 = arith.constant 0 : index
    %c0_112 = arith.constant 0 : index
    %300 = vector.load %arg9[%c0_110, %c0_111, %c0_112] : memref<2x16x256xf32, #tpu.memory_space<vmem>>, vector<1x16x256xf32>
    %301 = vector.shape_cast %300 : vector<1x16x256xf32> to vector<16x256xf32>
    %302 = vector.shape_cast %299 : vector<16x256xf32> to vector<1x16x256xf32>
    tpu.vector_store %arg9[%c0_110, %c0_111, %c0_112], %302 {strides = array<i32>} : memref<2x16x256xf32, #tpu.memory_space<vmem>>, vector<1x16x256xf32>,
    %c1_113 = arith.constant 1 : index
    %c0_114 = arith.constant 0 : index
    %c0_115 = arith.constant 0 : index
    %303 = vector.load %arg1[%c1_113, %c0_114, %c0_115] : memref<2x32x256xf32, #tpu.memory_space<vmem>>, vector<1x32x256xf32>
    %304 = vector.shape_cast %303 : vector<1x32x256xf32> to vector<32x256xf32>
    %305 = vector.extract_strided_slice %55 {offsets = [0, 4], sizes = [32, 1], strides = [1, 1]} : vector<32x9xf32> to vector<32x1xf32>
    %306 = vector.broadcast %305 : vector<32x1xf32> to vector<32x256xf32>
    %307 = arith.mulf %304, %306 : vector<32x256xf32>
    %c17_i32_116 = arith.constant 17 : i32
    %308 = tpu.dynamic_rotate %304 by %c17_i32_116 dim 1 : vector<32x256xf32>, i32 -> vector<32x256xf32>
    %cst_117 = arith.constant 0.000000e+00 : f32
    %309 = vector.shape_cast %7 : vector<1x256xi1> to vector<1x256xi1>
    %310 = vector.broadcast %309 : vector<1x256xi1> to vector<32x256xi1>
    %311 = vector.broadcast %cst_117 : f32 to vector<32x256xf32>
    %312 = arith.select %310, %308, %311 : vector<32x256xi1>, vector<32x256xf32>
    %313 = vector.extract_strided_slice %55 {offsets = [0, 0], sizes = [32, 1], strides = [1, 1]} : vector<32x9xf32> to vector<32x1xf32>
    %314 = vector.broadcast %313 : vector<32x1xf32> to vector<32x256xf32>
    %315 = arith.mulf %312, %314 : vector<32x256xf32>
    %316 = arith.addf %307, %315 : vector<32x256xf32>
    %c16_i32_118 = arith.constant 16 : i32
    %317 = tpu.dynamic_rotate %304 by %c16_i32_118 dim 1 : vector<32x256xf32>, i32 -> vector<32x256xf32>
    %cst_119 = arith.constant 0.000000e+00 : f32
    %318 = vector.shape_cast %9 : vector<1x256xi1> to vector<1x256xi1>
    %319 = vector.broadcast %318 : vector<1x256xi1> to vector<32x256xi1>
    %320 = vector.broadcast %cst_119 : f32 to vector<32x256xf32>
    %321 = arith.select %319, %317, %320 : vector<32x256xi1>, vector<32x256xf32>
    %322 = vector.extract_strided_slice %55 {offsets = [0, 1], sizes = [32, 1], strides = [1, 1]} : vector<32x9xf32> to vector<32x1xf32>
    %323 = vector.broadcast %322 : vector<32x1xf32> to vector<32x256xf32>
    %324 = arith.mulf %321, %323 : vector<32x256xf32>
    %325 = arith.addf %316, %324 : vector<32x256xf32>
    %c15_i32_120 = arith.constant 15 : i32
    %326 = tpu.dynamic_rotate %304 by %c15_i32_120 dim 1 : vector<32x256xf32>, i32 -> vector<32x256xf32>
    %cst_121 = arith.constant 0.000000e+00 : f32
    %327 = vector.shape_cast %14 : vector<1x256xi1> to vector<1x256xi1>
    %328 = vector.broadcast %327 : vector<1x256xi1> to vector<32x256xi1>
    %329 = vector.broadcast %cst_121 : f32 to vector<32x256xf32>
    %330 = arith.select %328, %326, %329 : vector<32x256xi1>, vector<32x256xf32>
    %331 = vector.extract_strided_slice %55 {offsets = [0, 2], sizes = [32, 1], strides = [1, 1]} : vector<32x9xf32> to vector<32x1xf32>
    %332 = vector.broadcast %331 : vector<32x1xf32> to vector<32x256xf32>
    %333 = arith.mulf %330, %332 : vector<32x256xf32>
    %334 = arith.addf %325, %333 : vector<32x256xf32>
    %c1_i32_122 = arith.constant 1 : i32
    %335 = tpu.dynamic_rotate %304 by %c1_i32_122 dim 1 : vector<32x256xf32>, i32 -> vector<32x256xf32>
    %cst_123 = arith.constant 0.000000e+00 : f32
    %336 = vector.shape_cast %16 : vector<1x256xi1> to vector<1x256xi1>
    %337 = vector.broadcast %336 : vector<1x256xi1> to vector<32x256xi1>
    %338 = vector.broadcast %cst_123 : f32 to vector<32x256xf32>
    %339 = arith.select %337, %335, %338 : vector<32x256xi1>, vector<32x256xf32>
    %340 = vector.extract_strided_slice %55 {offsets = [0, 3], sizes = [32, 1], strides = [1, 1]} : vector<32x9xf32> to vector<32x1xf32>
    %341 = vector.broadcast %340 : vector<32x1xf32> to vector<32x256xf32>
    %342 = arith.mulf %339, %341 : vector<32x256xf32>
    %343 = arith.addf %334, %342 : vector<32x256xf32>
    %c255_i32_124 = arith.constant 255 : i32
    %344 = tpu.dynamic_rotate %304 by %c255_i32_124 dim 1 : vector<32x256xf32>, i32 -> vector<32x256xf32>
    %cst_125 = arith.constant 0.000000e+00 : f32
    %345 = vector.shape_cast %18 : vector<1x256xi1> to vector<1x256xi1>
    %346 = vector.broadcast %345 : vector<1x256xi1> to vector<32x256xi1>
    %347 = vector.broadcast %cst_125 : f32 to vector<32x256xf32>
    %348 = arith.select %346, %344, %347 : vector<32x256xi1>, vector<32x256xf32>
    %349 = vector.extract_strided_slice %55 {offsets = [0, 5], sizes = [32, 1], strides = [1, 1]} : vector<32x9xf32> to vector<32x1xf32>
    %350 = vector.broadcast %349 : vector<32x1xf32> to vector<32x256xf32>
    %351 = arith.mulf %348, %350 : vector<32x256xf32>
    %352 = arith.addf %343, %351 : vector<32x256xf32>
    %c241_i32_126 = arith.constant 241 : i32
    %353 = tpu.dynamic_rotate %304 by %c241_i32_126 dim 1 : vector<32x256xf32>, i32 -> vector<32x256xf32>
    %cst_127 = arith.constant 0.000000e+00 : f32
    %354 = vector.shape_cast %23 : vector<1x256xi1> to vector<1x256xi1>
    %355 = vector.broadcast %354 : vector<1x256xi1> to vector<32x256xi1>
    %356 = vector.broadcast %cst_127 : f32 to vector<32x256xf32>
    %357 = arith.select %355, %353, %356 : vector<32x256xi1>, vector<32x256xf32>
    %358 = vector.extract_strided_slice %55 {offsets = [0, 6], sizes = [32, 1], strides = [1, 1]} : vector<32x9xf32> to vector<32x1xf32>
    %359 = vector.broadcast %358 : vector<32x1xf32> to vector<32x256xf32>
    %360 = arith.mulf %357, %359 : vector<32x256xf32>
    %361 = arith.addf %352, %360 : vector<32x256xf32>
    %c240_i32_128 = arith.constant 240 : i32
    %362 = tpu.dynamic_rotate %304 by %c240_i32_128 dim 1 : vector<32x256xf32>, i32 -> vector<32x256xf32>
    %cst_129 = arith.constant 0.000000e+00 : f32
    %363 = vector.shape_cast %25 : vector<1x256xi1> to vector<1x256xi1>
    %364 = vector.broadcast %363 : vector<1x256xi1> to vector<32x256xi1>
    %365 = vector.broadcast %cst_129 : f32 to vector<32x256xf32>
    %366 = arith.select %364, %362, %365 : vector<32x256xi1>, vector<32x256xf32>
    %367 = vector.extract_strided_slice %55 {offsets = [0, 7], sizes = [32, 1], strides = [1, 1]} : vector<32x9xf32> to vector<32x1xf32>
    %368 = vector.broadcast %367 : vector<32x1xf32> to vector<32x256xf32>
    %369 = arith.mulf %366, %368 : vector<32x256xf32>
    %370 = arith.addf %361, %369 : vector<32x256xf32>
    %c239_i32_130 = arith.constant 239 : i32
    %371 = tpu.dynamic_rotate %304 by %c239_i32_130 dim 1 : vector<32x256xf32>, i32 -> vector<32x256xf32>
    %cst_131 = arith.constant 0.000000e+00 : f32
    %372 = vector.shape_cast %30 : vector<1x256xi1> to vector<1x256xi1>
    %373 = vector.broadcast %372 : vector<1x256xi1> to vector<32x256xi1>
    %374 = vector.broadcast %cst_131 : f32 to vector<32x256xf32>
    %375 = arith.select %373, %371, %374 : vector<32x256xi1>, vector<32x256xf32>
    %376 = vector.extract_strided_slice %55 {offsets = [0, 8], sizes = [32, 1], strides = [1, 1]} : vector<32x9xf32> to vector<32x1xf32>
    %377 = vector.broadcast %376 : vector<32x1xf32> to vector<32x256xf32>
    %378 = arith.mulf %375, %377 : vector<32x256xf32>
    %379 = arith.addf %370, %378 : vector<32x256xf32>
    %380 = vector.broadcast %56 : vector<32x1xf32> to vector<32x256xf32>
    %381 = arith.addf %379, %380 : vector<32x256xf32>
    %cst_132 = arith.constant 3.000000e+00 : f32
    %382 = vector.broadcast %cst_132 : f32 to vector<32x256xf32>
    %383 = arith.addf %381, %382 : vector<32x256xf32>
    %cst_133 = arith.constant 0.000000e+00 : f32
    %cst_134 = arith.constant 6.000000e+00 : f32
    %384 = vector.broadcast %cst_133 : f32 to vector<32x256xf32>
    %385 = arith.maximumf %384, %383 : vector<32x256xf32>
    %386 = vector.broadcast %cst_134 : f32 to vector<32x256xf32>
    %387 = arith.minimumf %386, %385 : vector<32x256xf32>
    %388 = arith.mulf %381, %387 : vector<32x256xf32>
    %cst_135 = arith.constant 0.166666672 : f32
    %389 = vector.broadcast %cst_135 : f32 to vector<32x256xf32>
    %390 = arith.mulf %388, %389 : vector<32x256xf32>
    %cst_136 = arith.constant dense<0.000000e+00> : vector<32xf32>
    %391 = vector.multi_reduction <add>, %390, %cst_136 [1] : vector<32x256xf32> to vector<32xf32>
    %392 = vector.shape_cast %391 : vector<32xf32> to vector<32x1xf32>
    %cst_137 = arith.constant 3.906250e-03 : f32
    %393 = vector.broadcast %cst_137 : f32 to vector<32x1xf32>
    %394 = arith.mulf %392, %393 : vector<32x1xf32>
    %395 = vector.broadcast %394 : vector<32x1xf32> to vector<32x2xf32>
    %396 = arith.mulf %395, %59 : vector<32x2xf32>
    %cst_138 = arith.constant dense<0.000000e+00> : vector<2xf32>
    %397 = vector.multi_reduction <add>, %396, %cst_138 [0] : vector<32x2xf32> to vector<2xf32>
    %398 = vector.shape_cast %397 : vector<2xf32> to vector<1x2xf32>
    %cst_139 = arith.constant 0.000000e+00 : f32
    %399 = vector.broadcast %cst_139 : f32 to vector<1x2xf32>
    %400 = arith.maximumf %398, %399 : vector<1x2xf32>
    %401 = vector.broadcast %400 : vector<1x2xf32> to vector<32x2xf32>
    %402 = arith.mulf %60, %401 : vector<32x2xf32>
    %cst_140 = arith.constant dense<0.000000e+00> : vector<32xf32>
    %403 = vector.multi_reduction <add>, %402, %cst_140 [1] : vector<32x2xf32> to vector<32xf32>
    %404 = vector.shape_cast %403 : vector<32xf32> to vector<32x1xf32>
    %cst_141 = arith.constant 3.000000e+00 : f32
    %405 = vector.broadcast %cst_141 : f32 to vector<32x1xf32>
    %406 = arith.addf %404, %405 : vector<32x1xf32>
    %cst_142 = arith.constant 0.000000e+00 : f32
    %cst_143 = arith.constant 6.000000e+00 : f32
    %407 = vector.broadcast %cst_142 : f32 to vector<32x1xf32>
    %408 = arith.maximumf %407, %406 : vector<32x1xf32>
    %409 = vector.broadcast %cst_143 : f32 to vector<32x1xf32>
    %410 = arith.minimumf %409, %408 : vector<32x1xf32>
    %cst_144 = arith.constant 0.166666672 : f32
    %411 = vector.broadcast %cst_144 : f32 to vector<32x1xf32>
    %412 = arith.mulf %410, %411 : vector<32x1xf32>
    %413 = vector.broadcast %412 : vector<32x1xf32> to vector<32x256xf32>
    %414 = arith.mulf %390, %413 : vector<32x256xf32>
    %cst_145 = arith.constant dense<0xFF800000> : vector<256xf32>
    %415 = vector.multi_reduction <maximumf>, %414, %cst_145 [0] : vector<32x256xf32> to vector<256xf32>
    %416 = vector.shape_cast %415 : vector<256xf32> to vector<1x256xf32>
    %cst_146 = arith.constant dense<0.000000e+00> : vector<256xf32>
    %417 = vector.multi_reduction <add>, %414, %cst_146 [0] : vector<32x256xf32> to vector<256xf32>
    %418 = vector.shape_cast %417 : vector<256xf32> to vector<1x256xf32>
    %cst_147 = arith.constant 3.125000e-02 : f32
    %419 = vector.broadcast %cst_147 : f32 to vector<1x256xf32>
    %420 = arith.mulf %418, %419 : vector<1x256xf32>
    %c48_i32_148 = arith.constant 48 : i32
    %421 = tpu.dynamic_rotate %416 by %c48_i32_148 dim 1 : vector<1x256xf32>, i32 -> vector<1x256xf32>
    %cst_149 = arith.constant 0.000000e+00 : f32
    %422 = vector.broadcast %cst_149 : f32 to vector<1x256xf32>
    %423 = arith.select %32, %421, %422 : vector<1x256xi1>, vector<1x256xf32>
    %c0_150 = arith.constant 0 : index
    %c0_151 = arith.constant 0 : index
    %424 = vector.load %arg10[%c0_150, %c0_151] : memref<14x256xf32, #tpu.memory_space<vmem>>, vector<1x256xf32>
    tpu.vector_store %arg10[%c0_150, %c0_151], %423 {strides = array<i32>} : memref<14x256xf32, #tpu.memory_space<vmem>>, vector<1x256xf32>,
    %c48_i32_152 = arith.constant 48 : i32
    %425 = tpu.dynamic_rotate %420 by %c48_i32_152 dim 1 : vector<1x256xf32>, i32 -> vector<1x256xf32>
    %cst_153 = arith.constant 0.000000e+00 : f32
    %426 = vector.broadcast %cst_153 : f32 to vector<1x256xf32>
    %427 = arith.select %32, %425, %426 : vector<1x256xi1>, vector<1x256xf32>
    %c1_154 = arith.constant 1 : index
    %c0_155 = arith.constant 0 : index
    %428 = vector.load %arg10[%c1_154, %c0_155] : memref<14x256xf32, #tpu.memory_space<vmem>>, vector<1x256xf32>
    tpu.vector_store %arg10[%c1_154, %c0_155], %427 {strides = array<i32>} : memref<14x256xf32, #tpu.memory_space<vmem>>, vector<1x256xf32>,
    %c32_i32_156 = arith.constant 32 : i32
    %429 = tpu.dynamic_rotate %416 by %c32_i32_156 dim 1 : vector<1x256xf32>, i32 -> vector<1x256xf32>
    %cst_157 = arith.constant 0.000000e+00 : f32
    %430 = vector.broadcast %cst_157 : f32 to vector<1x256xf32>
    %431 = arith.select %34, %429, %430 : vector<1x256xi1>, vector<1x256xf32>
    %c2_158 = arith.constant 2 : index
    %c0_159 = arith.constant 0 : index
    %432 = vector.load %arg10[%c2_158, %c0_159] : memref<14x256xf32, #tpu.memory_space<vmem>>, vector<1x256xf32>
    tpu.vector_store %arg10[%c2_158, %c0_159], %431 {strides = array<i32>} : memref<14x256xf32, #tpu.memory_space<vmem>>, vector<1x256xf32>,
    %c32_i32_160 = arith.constant 32 : i32
    %433 = tpu.dynamic_rotate %420 by %c32_i32_160 dim 1 : vector<1x256xf32>, i32 -> vector<1x256xf32>
    %cst_161 = arith.constant 0.000000e+00 : f32
    %434 = vector.broadcast %cst_161 : f32 to vector<1x256xf32>
    %435 = arith.select %34, %433, %434 : vector<1x256xi1>, vector<1x256xf32>
    %c3_162 = arith.constant 3 : index
    %c0_163 = arith.constant 0 : index
    %436 = vector.load %arg10[%c3_162, %c0_163] : memref<14x256xf32, #tpu.memory_space<vmem>>, vector<1x256xf32>
    tpu.vector_store %arg10[%c3_162, %c0_163], %435 {strides = array<i32>} : memref<14x256xf32, #tpu.memory_space<vmem>>, vector<1x256xf32>,
    %c16_i32_164 = arith.constant 16 : i32
    %437 = tpu.dynamic_rotate %416 by %c16_i32_164 dim 1 : vector<1x256xf32>, i32 -> vector<1x256xf32>
    %cst_165 = arith.constant 0.000000e+00 : f32
    %438 = vector.broadcast %cst_165 : f32 to vector<1x256xf32>
    %439 = arith.select %36, %437, %438 : vector<1x256xi1>, vector<1x256xf32>
    %c4_166 = arith.constant 4 : index
    %c0_167 = arith.constant 0 : index
    %440 = vector.load %arg10[%c4_166, %c0_167] : memref<14x256xf32, #tpu.memory_space<vmem>>, vector<1x256xf32>
    tpu.vector_store %arg10[%c4_166, %c0_167], %439 {strides = array<i32>} : memref<14x256xf32, #tpu.memory_space<vmem>>, vector<1x256xf32>,
    %c16_i32_168 = arith.constant 16 : i32
    %441 = tpu.dynamic_rotate %420 by %c16_i32_168 dim 1 : vector<1x256xf32>, i32 -> vector<1x256xf32>
    %cst_169 = arith.constant 0.000000e+00 : f32
    %442 = vector.broadcast %cst_169 : f32 to vector<1x256xf32>
    %443 = arith.select %36, %441, %442 : vector<1x256xi1>, vector<1x256xf32>
    %c5_170 = arith.constant 5 : index
    %c0_171 = arith.constant 0 : index
    %444 = vector.load %arg10[%c5_170, %c0_171] : memref<14x256xf32, #tpu.memory_space<vmem>>, vector<1x256xf32>
    tpu.vector_store %arg10[%c5_170, %c0_171], %443 {strides = array<i32>} : memref<14x256xf32, #tpu.memory_space<vmem>>, vector<1x256xf32>,
    %c6_172 = arith.constant 6 : index
    %c0_173 = arith.constant 0 : index
    %445 = vector.load %arg10[%c6_172, %c0_173] : memref<14x256xf32, #tpu.memory_space<vmem>>, vector<1x256xf32>
    tpu.vector_store %arg10[%c6_172, %c0_173], %416 {strides = array<i32>} : memref<14x256xf32, #tpu.memory_space<vmem>>, vector<1x256xf32>,
    %c7_174 = arith.constant 7 : index
    %c0_175 = arith.constant 0 : index
    %446 = vector.load %arg10[%c7_174, %c0_175] : memref<14x256xf32, #tpu.memory_space<vmem>>, vector<1x256xf32>
    tpu.vector_store %arg10[%c7_174, %c0_175], %420 {strides = array<i32>} : memref<14x256xf32, #tpu.memory_space<vmem>>, vector<1x256xf32>,
    %c240_i32_176 = arith.constant 240 : i32
    %447 = tpu.dynamic_rotate %416 by %c240_i32_176 dim 1 : vector<1x256xf32>, i32 -> vector<1x256xf32>
    %cst_177 = arith.constant 0.000000e+00 : f32
    %448 = vector.broadcast %cst_177 : f32 to vector<1x256xf32>
    %449 = arith.select %38, %447, %448 : vector<1x256xi1>, vector<1x256xf32>
    %c8_178 = arith.constant 8 : index
    %c0_179 = arith.constant 0 : index
    %450 = vector.load %arg10[%c8_178, %c0_179] : memref<14x256xf32, #tpu.memory_space<vmem>>, vector<1x256xf32>
    tpu.vector_store %arg10[%c8_178, %c0_179], %449 {strides = array<i32>} : memref<14x256xf32, #tpu.memory_space<vmem>>, vector<1x256xf32>,
    %c240_i32_180 = arith.constant 240 : i32
    %451 = tpu.dynamic_rotate %420 by %c240_i32_180 dim 1 : vector<1x256xf32>, i32 -> vector<1x256xf32>
    %cst_181 = arith.constant 0.000000e+00 : f32
    %452 = vector.broadcast %cst_181 : f32 to vector<1x256xf32>
    %453 = arith.select %38, %451, %452 : vector<1x256xi1>, vector<1x256xf32>
    %c9_182 = arith.constant 9 : index
    %c0_183 = arith.constant 0 : index
    %454 = vector.load %arg10[%c9_182, %c0_183] : memref<14x256xf32, #tpu.memory_space<vmem>>, vector<1x256xf32>
    tpu.vector_store %arg10[%c9_182, %c0_183], %453 {strides = array<i32>} : memref<14x256xf32, #tpu.memory_space<vmem>>, vector<1x256xf32>,
    %c224_i32_184 = arith.constant 224 : i32
    %455 = tpu.dynamic_rotate %416 by %c224_i32_184 dim 1 : vector<1x256xf32>, i32 -> vector<1x256xf32>
    %cst_185 = arith.constant 0.000000e+00 : f32
    %456 = vector.broadcast %cst_185 : f32 to vector<1x256xf32>
    %457 = arith.select %40, %455, %456 : vector<1x256xi1>, vector<1x256xf32>
    %c10_186 = arith.constant 10 : index
    %c0_187 = arith.constant 0 : index
    %458 = vector.load %arg10[%c10_186, %c0_187] : memref<14x256xf32, #tpu.memory_space<vmem>>, vector<1x256xf32>
    tpu.vector_store %arg10[%c10_186, %c0_187], %457 {strides = array<i32>} : memref<14x256xf32, #tpu.memory_space<vmem>>, vector<1x256xf32>,
    %c224_i32_188 = arith.constant 224 : i32
    %459 = tpu.dynamic_rotate %420 by %c224_i32_188 dim 1 : vector<1x256xf32>, i32 -> vector<1x256xf32>
    %cst_189 = arith.constant 0.000000e+00 : f32
    %460 = vector.broadcast %cst_189 : f32 to vector<1x256xf32>
    %461 = arith.select %40, %459, %460 : vector<1x256xi1>, vector<1x256xf32>
    %c11_190 = arith.constant 11 : index
    %c0_191 = arith.constant 0 : index
    %462 = vector.load %arg10[%c11_190, %c0_191] : memref<14x256xf32, #tpu.memory_space<vmem>>, vector<1x256xf32>
    tpu.vector_store %arg10[%c11_190, %c0_191], %461 {strides = array<i32>} : memref<14x256xf32, #tpu.memory_space<vmem>>, vector<1x256xf32>,
    %c208_i32_192 = arith.constant 208 : i32
    %463 = tpu.dynamic_rotate %416 by %c208_i32_192 dim 1 : vector<1x256xf32>, i32 -> vector<1x256xf32>
    %cst_193 = arith.constant 0.000000e+00 : f32
    %464 = vector.broadcast %cst_193 : f32 to vector<1x256xf32>
    %465 = arith.select %42, %463, %464 : vector<1x256xi1>, vector<1x256xf32>
    %c12_194 = arith.constant 12 : index
    %c0_195 = arith.constant 0 : index
    %466 = vector.load %arg10[%c12_194, %c0_195] : memref<14x256xf32, #tpu.memory_space<vmem>>, vector<1x256xf32>
    tpu.vector_store %arg10[%c12_194, %c0_195], %465 {strides = array<i32>} : memref<14x256xf32, #tpu.memory_space<vmem>>, vector<1x256xf32>,
    %c208_i32_196 = arith.constant 208 : i32
    %467 = tpu.dynamic_rotate %420 by %c208_i32_196 dim 1 : vector<1x256xf32>, i32 -> vector<1x256xf32>
    %cst_197 = arith.constant 0.000000e+00 : f32
    %468 = vector.broadcast %cst_197 : f32 to vector<1x256xf32>
    %469 = arith.select %42, %467, %468 : vector<1x256xi1>, vector<1x256xf32>
    %c13_198 = arith.constant 13 : index
    %c0_199 = arith.constant 0 : index
    %470 = vector.load %arg10[%c13_198, %c0_199] : memref<14x256xf32, #tpu.memory_space<vmem>>, vector<1x256xf32>
    tpu.vector_store %arg10[%c13_198, %c0_199], %469 {strides = array<i32>} : memref<14x256xf32, #tpu.memory_space<vmem>>, vector<1x256xf32>,
    %c0_200 = arith.constant 0 : index
    %c0_201 = arith.constant 0 : index
    %471 = vector.load %arg10[%c0_200, %c0_201] : memref<14x256xf32, #tpu.memory_space<vmem>>, vector<14x256xf32>
    %472 = vector.extract_strided_slice %61 {offsets = [0, 3], sizes = [14, 1], strides = [1, 1]} : vector<14x7xf32> to vector<14x1xf32>
    %473 = vector.broadcast %472 : vector<14x1xf32> to vector<14x256xf32>
    %474 = arith.mulf %471, %473 : vector<14x256xf32>
    %c3_i32_202 = arith.constant 3 : i32
    %475 = tpu.dynamic_rotate %471 by %c3_i32_202 dim 1 : vector<14x256xf32>, i32 -> vector<14x256xf32>
    %cst_203 = arith.constant 0.000000e+00 : f32
    %476 = vector.shape_cast %44 : vector<1x256xi1> to vector<1x256xi1>
    %477 = vector.broadcast %476 : vector<1x256xi1> to vector<14x256xi1>
    %478 = vector.broadcast %cst_203 : f32 to vector<14x256xf32>
    %479 = arith.select %477, %475, %478 : vector<14x256xi1>, vector<14x256xf32>
    %480 = vector.extract_strided_slice %61 {offsets = [0, 0], sizes = [14, 1], strides = [1, 1]} : vector<14x7xf32> to vector<14x1xf32>
    %481 = vector.broadcast %480 : vector<14x1xf32> to vector<14x256xf32>
    %482 = arith.mulf %479, %481 : vector<14x256xf32>
    %483 = arith.addf %474, %482 : vector<14x256xf32>
    %c2_i32_204 = arith.constant 2 : i32
    %484 = tpu.dynamic_rotate %471 by %c2_i32_204 dim 1 : vector<14x256xf32>, i32 -> vector<14x256xf32>
    %cst_205 = arith.constant 0.000000e+00 : f32
    %485 = vector.shape_cast %46 : vector<1x256xi1> to vector<1x256xi1>
    %486 = vector.broadcast %485 : vector<1x256xi1> to vector<14x256xi1>
    %487 = vector.broadcast %cst_205 : f32 to vector<14x256xf32>
    %488 = arith.select %486, %484, %487 : vector<14x256xi1>, vector<14x256xf32>
    %489 = vector.extract_strided_slice %61 {offsets = [0, 1], sizes = [14, 1], strides = [1, 1]} : vector<14x7xf32> to vector<14x1xf32>
    %490 = vector.broadcast %489 : vector<14x1xf32> to vector<14x256xf32>
    %491 = arith.mulf %488, %490 : vector<14x256xf32>
    %492 = arith.addf %483, %491 : vector<14x256xf32>
    %c1_i32_206 = arith.constant 1 : i32
    %493 = tpu.dynamic_rotate %471 by %c1_i32_206 dim 1 : vector<14x256xf32>, i32 -> vector<14x256xf32>
    %cst_207 = arith.constant 0.000000e+00 : f32
    %494 = vector.shape_cast %48 : vector<1x256xi1> to vector<1x256xi1>
    %495 = vector.broadcast %494 : vector<1x256xi1> to vector<14x256xi1>
    %496 = vector.broadcast %cst_207 : f32 to vector<14x256xf32>
    %497 = arith.select %495, %493, %496 : vector<14x256xi1>, vector<14x256xf32>
    %498 = vector.extract_strided_slice %61 {offsets = [0, 2], sizes = [14, 1], strides = [1, 1]} : vector<14x7xf32> to vector<14x1xf32>
    %499 = vector.broadcast %498 : vector<14x1xf32> to vector<14x256xf32>
    %500 = arith.mulf %497, %499 : vector<14x256xf32>
    %501 = arith.addf %492, %500 : vector<14x256xf32>
    %c255_i32_208 = arith.constant 255 : i32
    %502 = tpu.dynamic_rotate %471 by %c255_i32_208 dim 1 : vector<14x256xf32>, i32 -> vector<14x256xf32>
    %cst_209 = arith.constant 0.000000e+00 : f32
    %503 = vector.shape_cast %50 : vector<1x256xi1> to vector<1x256xi1>
    %504 = vector.broadcast %503 : vector<1x256xi1> to vector<14x256xi1>
    %505 = vector.broadcast %cst_209 : f32 to vector<14x256xf32>
    %506 = arith.select %504, %502, %505 : vector<14x256xi1>, vector<14x256xf32>
    %507 = vector.extract_strided_slice %61 {offsets = [0, 4], sizes = [14, 1], strides = [1, 1]} : vector<14x7xf32> to vector<14x1xf32>
    %508 = vector.broadcast %507 : vector<14x1xf32> to vector<14x256xf32>
    %509 = arith.mulf %506, %508 : vector<14x256xf32>
    %510 = arith.addf %501, %509 : vector<14x256xf32>
    %c254_i32_210 = arith.constant 254 : i32
    %511 = tpu.dynamic_rotate %471 by %c254_i32_210 dim 1 : vector<14x256xf32>, i32 -> vector<14x256xf32>
    %cst_211 = arith.constant 0.000000e+00 : f32
    %512 = vector.shape_cast %52 : vector<1x256xi1> to vector<1x256xi1>
    %513 = vector.broadcast %512 : vector<1x256xi1> to vector<14x256xi1>
    %514 = vector.broadcast %cst_211 : f32 to vector<14x256xf32>
    %515 = arith.select %513, %511, %514 : vector<14x256xi1>, vector<14x256xf32>
    %516 = vector.extract_strided_slice %61 {offsets = [0, 5], sizes = [14, 1], strides = [1, 1]} : vector<14x7xf32> to vector<14x1xf32>
    %517 = vector.broadcast %516 : vector<14x1xf32> to vector<14x256xf32>
    %518 = arith.mulf %515, %517 : vector<14x256xf32>
    %519 = arith.addf %510, %518 : vector<14x256xf32>
    %c253_i32_212 = arith.constant 253 : i32
    %520 = tpu.dynamic_rotate %471 by %c253_i32_212 dim 1 : vector<14x256xf32>, i32 -> vector<14x256xf32>
    %cst_213 = arith.constant 0.000000e+00 : f32
    %521 = vector.shape_cast %54 : vector<1x256xi1> to vector<1x256xi1>
    %522 = vector.broadcast %521 : vector<1x256xi1> to vector<14x256xi1>
    %523 = vector.broadcast %cst_213 : f32 to vector<14x256xf32>
    %524 = arith.select %522, %520, %523 : vector<14x256xi1>, vector<14x256xf32>
    %525 = vector.extract_strided_slice %61 {offsets = [0, 6], sizes = [14, 1], strides = [1, 1]} : vector<14x7xf32> to vector<14x1xf32>
    %526 = vector.broadcast %525 : vector<14x1xf32> to vector<14x256xf32>
    %527 = arith.mulf %524, %526 : vector<14x256xf32>
    %528 = arith.addf %519, %527 : vector<14x256xf32>
    %cst_214 = arith.constant dense<0.000000e+00> : vector<256xf32>
    %529 = vector.multi_reduction <add>, %528, %cst_214 [0] : vector<14x256xf32> to vector<256xf32>
    %530 = vector.shape_cast %529 : vector<256xf32> to vector<1x256xf32>
    %531 = arith.negf %530 : vector<1x256xf32>
    %532 = math.exp %531 : vector<1x256xf32>
    %cst_215 = arith.constant 1.000000e+00 : f32
    %533 = vector.broadcast %cst_215 : f32 to vector<1x256xf32>
    %534 = arith.addf %533, %532 : vector<1x256xf32>
    %535 = arith.divf %533, %534 : vector<1x256xf32>
    %536 = vector.broadcast %535 : vector<1x256xf32> to vector<32x256xf32>
    %537 = arith.mulf %414, %536 : vector<32x256xf32>
    %cst_216 = arith.constant dense<0.000000e+00> : vector<16x256xf32>
    %538 = tpu.matmul %57, %537, %cst_216 {dimension_numbers = #tpu.dot_dimension_numbers<[1], [0], [0], [1], [0, 0, 1, 1], [], []>} : vector<16x32xf32>, vector<32x256xf32>, vector<16x256xf32> -> vector<16x256xf32>
    %539 = vector.broadcast %58 : vector<16x1xf32> to vector<16x256xf32>
    %540 = arith.addf %538, %539 : vector<16x256xf32>
    %c1_217 = arith.constant 1 : index
    %c0_218 = arith.constant 0 : index
    %c0_219 = arith.constant 0 : index
    %541 = vector.load %arg9[%c1_217, %c0_218, %c0_219] : memref<2x16x256xf32, #tpu.memory_space<vmem>>, vector<1x16x256xf32>
    %542 = vector.shape_cast %541 : vector<1x16x256xf32> to vector<16x256xf32>
    %543 = vector.shape_cast %540 : vector<16x256xf32> to vector<1x16x256xf32>
    tpu.vector_store %arg9[%c1_217, %c0_218, %c0_219], %543 {strides = array<i32>} : memref<2x16x256xf32, #tpu.memory_space<vmem>>, vector<1x16x256xf32>,
    return
  }
  func.func @transform_0(%arg0: i32) -> (i32, i32, i32) {
    %c0_i32 = arith.constant 0 : i32
    %c0_i32_0 = arith.constant 0 : i32
    %c0_i32_1 = arith.constant 0 : i32
    return %arg0, %c0_i32, %c0_i32_0 : i32, i32, i32
  }
  func.func @transform_1(%arg0: i32) -> (i32, i32) {
    %c0_i32 = arith.constant 0 : i32
    %c0_i32_0 = arith.constant 0 : i32
    %c0_i32_1 = arith.constant 0 : i32
    return %c0_i32, %c0_i32_0 : i32, i32
  }
  func.func @transform_2(%arg0: i32) -> (i32, i32) {
    %c0_i32 = arith.constant 0 : i32
    %c0_i32_0 = arith.constant 0 : i32
    %c0_i32_1 = arith.constant 0 : i32
    return %c0_i32, %c0_i32_0 : i32, i32
  }
  func.func @transform_3(%arg0: i32) -> (i32, i32) {
    %c0_i32 = arith.constant 0 : i32
    %c0_i32_0 = arith.constant 0 : i32
    %c0_i32_1 = arith.constant 0 : i32
    return %c0_i32, %c0_i32_0 : i32, i32
  }
  func.func @transform_4(%arg0: i32) -> (i32, i32) {
    %c0_i32 = arith.constant 0 : i32
    %c0_i32_0 = arith.constant 0 : i32
    %c0_i32_1 = arith.constant 0 : i32
    return %c0_i32, %c0_i32_0 : i32, i32
  }
  func.func @transform_5(%arg0: i32) -> (i32, i32) {
    %c0_i32 = arith.constant 0 : i32
    %c0_i32_0 = arith.constant 0 : i32
    %c0_i32_1 = arith.constant 0 : i32
    return %c0_i32, %c0_i32_0 : i32, i32
  }
  func.func @transform_6(%arg0: i32) -> (i32, i32) {
    %c0_i32 = arith.constant 0 : i32
    %c0_i32_0 = arith.constant 0 : i32
    %c0_i32_1 = arith.constant 0 : i32
    return %c0_i32, %c0_i32_0 : i32, i32
  }
  func.func @transform_7(%arg0: i32) -> (i32, i32) {
    %c0_i32 = arith.constant 0 : i32
    %c0_i32_0 = arith.constant 0 : i32
    %c0_i32_1 = arith.constant 0 : i32
    return %c0_i32, %c0_i32_0 : i32, i32
  }
  func.func @transform_8(%arg0: i32) -> (i32, i32, i32) {
    %c0_i32 = arith.constant 0 : i32
    %c0_i32_0 = arith.constant 0 : i32
    %c0_i32_1 = arith.constant 0 : i32
    return %arg0, %c0_i32, %c0_i32_0 : i32, i32, i32
  }
}

</mosaic_0001>

<llo_original>
// kernel: tpu_custom_call.1
$region0: #{tpu_custom_call.1}
  #allocation0 [shape = 'u32[]', space=smem, size = 0x4, offset = 0x4, fixed_abs, tag = 'smem constant byte address 0x4 - core index']
  #allocation1 [shape = 'u32[144,128]{1,0:T(1,128)}', space=vmem, size = 0x12000, scoped, tag = 'internal scratch']
  #allocation2 [shape = 'f32[14,256]{1,0:T(8,128)}', space=vmem, size = 0x4000, scoped, tag = 'scratch operand']
  %s0 = inlined_call_operand.hbm [shape: f32[4,32,256], index: 0, kind: input, shape index: {}]
  %s1 = inlined_call_operand.vmem [shape: f32[32,9], index: 1, kind: input, shape index: {}]
  %s2 = inlined_call_operand.vmem [shape: f32[32,1], index: 2, kind: input, shape index: {}]
  %s3 = inlined_call_operand.vmem [shape: f32[32,2], index: 3, kind: input, shape index: {}]
  %s4 = inlined_call_operand.vmem [shape: f32[32,2], index: 4, kind: input, shape index: {}]
  %s5 = inlined_call_operand.vmem [shape: f32[14,7], index: 5, kind: input, shape index: {}]
  %s6 = inlined_call_operand.vmem [shape: f32[16,32], index: 6, kind: input, shape index: {}]
  %s7 = inlined_call_operand.vmem [shape: f32[16,1], index: 7, kind: input, shape index: {}]
  %s8 = inlined_call_operand.hbm [shape: f32[4,16,256], index: 8, kind: output, shape index: {}]
  %s9 = sld [smem:[#allocation0]]
  $region69: #{tpu_custom_call.1} parent=0
    _
  %s11 = ssub.s32 1, %s9
  %s12 = scalar_select 0, %s11, %s9
  $region1: #{tpu_custom_call.1} parent=0
    #allocation3 [shape = 'u8[131072]{0}', space=vmem, size = 0x20000, scoped, tag = 'input window, operand 0']
    #allocation4 [shape = 's32[2]{0}', space=sflag, size = 0x8, scoped, tag = 'scoped memory for tpu_custom_call.1']
    #allocation5 [shape = 's32[2]{0}', space=sflag, size = 0x8, scoped, tag = 'scoped memory for tpu_custom_call.1']
    #allocation6 [shape = 'u8[65536]{0}', space=vmem, size = 0x10000, scoped, tag = 'output window, operand 0']
    %13 = vsyncpa [#allocation4], 0
    %s14 = scalar_lea.sflag [#allocation4], 1
    %15 = vsyncpa %s14, 0
    %16 = vsyncpa [#allocation5], 0
    %s17 = scalar_lea.sflag [#allocation5], 1
    %18 = vsyncpa %s17, 0
    loop: start=0, step=1, limit=4
    $region2: #{tpu_custom_call.1} parent=1 // loop_pre_header
      _
    $region3: #{tpu_custom_call.1} parent=1 // loop_header
      %s20 = sphi 0, %s24
      %p21 = scmp.ge.s32.totalorder %s20, 4
      %s30 = sphi 0, %s32
      %s33 = sphi 0, %s30
      %s34 = sphi 0, %s33
      %s50 = sphi 0, %s34
      %s54 = sphi 0, %s54
      %s56 = sphi 0, %s54
      %s57 = sphi 0, %s56
      %s71 = sphi 0, %s57
      %s75 = sphi 0, %s75
      %s77 = sphi 0, %s75
      %s78 = sphi 0, %s77
      %s92 = sphi 0, %s78
      %s96 = sphi 0, %s96
      %s98 = sphi 0, %s96
      %s99 = sphi 0, %s98
      %s113 = sphi 0, %s99
      %s117 = sphi 0, %s117
      %s119 = sphi 0, %s117
      %s120 = sphi 0, %s119
      %s134 = sphi 0, %s120
      %s138 = sphi 0, %s138
      %s140 = sphi 0, %s138
      %s141 = sphi 0, %s140
      %s155 = sphi 0, %s141
      %s159 = sphi 0, %s159
      %s161 = sphi 0, %s159
      %s162 = sphi 0, %s161
      %s176 = sphi 0, %s162
      %s180 = sphi 0, %s180
      %s182 = sphi 0, %s180
      %s183 = sphi 0, %s182
      %s197 = sphi 0, %s183
      %s203 = sphi 0, %s205
      %s206 = sphi 0, %s203
      %s207 = sphi 0, %s206
      %s223 = sphi 0, %s207
    $region4: #{tpu_custom_call.1} parent=1 // loop_header_branch
      %23 = sbr.rel (%p21) target = $region8
    $region5: #{tpu_custom_call.1} parent=1 // loop_body
      %s25 = ssub.s32 %s20, 1
      %s26 = ssub.s32 %s20, 2
      %s27 = sadd.s32 %s20, 1
      %s28 = ssub.s32 %s20, %s27
      %p29 = scmp.eq.s32.totalorder %s28, 0
      %s31 = sadd.s32 %s30, 1
      %s32 = scalar_select %p29, %s30, %s31
      %p35 = pneg %p29
      %p36 = scmp.eq.s32.totalorder %s20, 1
      %p37 = por %p35, %p36
      %p38 = scmp.ne.s32.totalorder %s30, %s33
      %p39 = scmp.eq.s32.totalorder %s20, 0
      %p40 = por %p38, %p39
      %p41 = scmp.ne.s32.totalorder %s30, %s33
      %p42 = scmp.eq.s32.totalorder %s25, 1
      %p43 = por %p41, %p42
      %p44 = scmp.ne.s32.totalorder %s33, %s34
      %p45 = scmp.eq.s32.totalorder %s25, 0
      %p46 = por %p44, %p45
      %p47 = scmp.ne.s32.totalorder %s33, %s34
      %p48 = scmp.eq.s32.totalorder %s26, 1
      %p49 = por %p47, %p48
      %p51 = scmp.ne.s32.totalorder %s34, %s50
      %p52 = scmp.eq.s32.totalorder %s26, 0
      %p53 = por %p51, %p52
      %s55 = sadd.s32 %s54, 1
      %p58 = scmp.eq.s32.totalorder %s20, 1
      %p59 = scmp.ne.s32.totalorder %s54, %s56
      %p60 = scmp.eq.s32.totalorder %s20, 0
      %p61 = por %p59, %p60
      %p62 = scmp.ne.s32.totalorder %s54, %s56
      %p63 = scmp.eq.s32.totalorder %s25, 1
      %p64 = por %p62, %p63
      %p65 = scmp.ne.s32.totalorder %s56, %s57
      %p66 = scmp.eq.s32.totalorder %s25, 0
      %p67 = por %p65, %p66
      %p68 = scmp.ne.s32.totalorder %s56, %s57
      %p69 = scmp.eq.s32.totalorder %s26, 1
      %p70 = por %p68, %p69
      %p72 = scmp.ne.s32.totalorder %s57, %s71
      %p73 = scmp.eq.s32.totalorder %s26, 0
      %p74 = por %p72, %p73
      %s76 = sadd.s32 %s75, 1
      %p79 = scmp.eq.s32.totalorder %s20, 1
      %p80 = scmp.ne.s32.totalorder %s75, %s77
      %p81 = scmp.eq.s32.totalorder %s20, 0
      %p82 = por %p80, %p81
      %p83 = scmp.ne.s32.totalorder %s75, %s77
      %p84 = scmp.eq.s32.totalorder %s25, 1
      %p85 = por %p83, %p84
      %p86 = scmp.ne.s32.totalorder %s77, %s78
      %p87 = scmp.eq.s32.totalorder %s25, 0
      %p88 = por %p86, %p87
      %p89 = scmp.ne.s32.totalorder %s77, %s78
      %p90 = scmp.eq.s32.totalorder %s26, 1
      %p91 = por %p89, %p90
      %p93 = scmp.ne.s32.totalorder %s78, %s92
      %p94 = scmp.eq.s32.totalorder %s26, 0
      %p95 = por %p93, %p94
      %s97 = sadd.s32 %s96, 1
      %p100 = scmp.eq.s32.totalorder %s20, 1
      %p101 = scmp.ne.s32.totalorder %s96, %s98
      %p102 = scmp.eq.s32.totalorder %s20, 0
      %p103 = por %p101, %p102
      %p104 = scmp.ne.s32.totalorder %s96, %s98
      %p105 = scmp.eq.s32.totalorder %s25, 1
      %p106 = por %p104, %p105
      %p107 = scmp.ne.s32.totalorder %s98, %s99
      %p108 = scmp.eq.s32.totalorder %s25, 0
      %p109 = por %p107, %p108
      %p110 = scmp.ne.s32.totalorder %s98, %s99
      %p111 = scmp.eq.s32.totalorder %s26, 1
      %p112 = por %p110, %p111
      %p114 = scmp.ne.s32.totalorder %s99, %s113
      %p115 = scmp.eq.s32.totalorder %s26, 0
      %p116 = por %p114, %p115
      %s118 = sadd.s32 %s117, 1
      %p121 = scmp.eq.s32.totalorder %s20, 1
      %p122 = scmp.ne.s32.totalorder %s117, %s119
      %p123 = scmp.eq.s32.totalorder %s20, 0
      %p124 = por %p122, %p123
      %p125 = scmp.ne.s32.totalorder %s117, %s119
      %p126 = scmp.eq.s32.totalorder %s25, 1
      %p127 = por %p125, %p126
      %p128 = scmp.ne.s32.totalorder %s119, %s120
      %p129 = scmp.eq.s32.totalorder %s25, 0
      %p130 = por %p128, %p129
      %p131 = scmp.ne.s32.totalorder %s119, %s120
      %p132 = scmp.eq.s32.totalorder %s26, 1
      %p133 = por %p131, %p132
      %p135 = scmp.ne.s32.totalorder %s120, %s134
      %p136 = scmp.eq.s32.totalorder %s26, 0
      %p137 = por %p135, %p136
      %s139 = sadd.s32 %s138, 1
      %p142 = scmp.eq.s32.totalorder %s20, 1
      %p143 = scmp.ne.s32.totalorder %s138, %s140
      %p144 = scmp.eq.s32.totalorder %s20, 0
      %p145 = por %p143, %p144
      %p146 = scmp.ne.s32.totalorder %s138, %s140
      %p147 = scmp.eq.s32.totalorder %s25, 1
      %p148 = por %p146, %p147
      %p149 = scmp.ne.s32.totalorder %s140, %s141
      %p150 = scmp.eq.s32.totalorder %s25, 0
      %p151 = por %p149, %p150
      %p152 = scmp.ne.s32.totalorder %s140, %s141
      %p153 = scmp.eq.s32.totalorder %s26, 1
      %p154 = por %p152, %p153
      %p156 = scmp.ne.s32.totalorder %s141, %s155
      %p157 = scmp.eq.s32.totalorder %s26, 0
      %p158 = por %p156, %p157
      %s160 = sadd.s32 %s159, 1
      %p163 = scmp.eq.s32.totalorder %s20, 1
      %p164 = scmp.ne.s32.totalorder %s159, %s161
      %p165 = scmp.eq.s32.totalorder %s20, 0
      %p166 = por %p164, %p165
      %p167 = scmp.ne.s32.totalorder %s159, %s161
      %p168 = scmp.eq.s32.totalorder %s25, 1
      %p169 = por %p167, %p168
      %p170 = scmp.ne.s32.totalorder %s161, %s162
      %p171 = scmp.eq.s32.totalorder %s25, 0
      %p172 = por %p170, %p171
      %p173 = scmp.ne.s32.totalorder %s161, %s162
      %p174 = scmp.eq.s32.totalorder %s26, 1
      %p175 = por %p173, %p174
      %p177 = scmp.ne.s32.totalorder %s162, %s176
      %p178 = scmp.eq.s32.totalorder %s26, 0
      %p179 = por %p177, %p178
      %s181 = sadd.s32 %s180, 1
      %p184 = scmp.eq.s32.totalorder %s20, 1
      %p185 = scmp.ne.s32.totalorder %s180, %s182
      %p186 = scmp.eq.s32.totalorder %s20, 0
      %p187 = por %p185, %p186
      %p188 = scmp.ne.s32.totalorder %s180, %s182
      %p189 = scmp.eq.s32.totalorder %s25, 1
      %p190 = por %p188, %p189
      %p191 = scmp.ne.s32.totalorder %s182, %s183
      %p192 = scmp.eq.s32.totalorder %s25, 0
      %p193 = por %p191, %p192
      %p194 = scmp.ne.s32.totalorder %s182, %s183
      %p195 = scmp.eq.s32.totalorder %s26, 1
      %p196 = por %p194, %p195
      %p198 = scmp.ne.s32.totalorder %s183, %s197
      %p199 = scmp.eq.s32.totalorder %s26, 0
      %p200 = por %p198, %p199
      %s201 = ssub.s32 %s20, %s27
      %p202 = scmp.eq.s32.totalorder %s201, 0
      %s204 = sadd.s32 %s203, 1
      %s205 = scalar_select %p202, %s203, %s204
      %p208 = pneg %p202
      %p209 = scmp.eq.s32.totalorder %s20, 1
      %p210 = por %p208, %p209
      %p211 = scmp.ne.s32.totalorder %s203, %s206
      %p212 = scmp.eq.s32.totalorder %s20, 0
      %p213 = por %p211, %p212
      %p214 = scmp.ne.s32.totalorder %s203, %s206
      %p215 = scmp.eq.s32.totalorder %s25, 1
      %p216 = por %p214, %p215
      %p217 = scmp.ne.s32.totalorder %s206, %s207
      %p218 = scmp.eq.s32.totalorder %s25, 0
      %p219 = por %p217, %p218
      %p220 = scmp.ne.s32.totalorder %s206, %s207
      %p221 = scmp.eq.s32.totalorder %s26, 1
      %p222 = por %p220, %p221
      %p224 = scmp.ne.s32.totalorder %s207, %s223
      %p225 = scmp.eq.s32.totalorder %s26, 0
      %p226 = por %p224, %p225
      %p227 = scmp.le.s32.totalorder 1, %s20
      %p228 = scmp.lt.s32.totalorder %s20, 3
      %p229 = pnand %p227, %p228
      %p230 = pneg %p229
      // Predicated region
      $region9: #{tpu_custom_call.1} parent=5 // pred_check
        _
      $region10: #{tpu_custom_call.1} parent=5 // pred_check_branch
        %232 = sbr.rel (%p229) target = $region12
      $region11: #{tpu_custom_call.1} parent=5 // pred_region
        %s233 = ssub.s32 %s20, 1
        // Predicated region
        $region13: #{tpu_custom_call.1} parent=11 // pred_check
          %p234 = pneg %p67
        $region14: #{tpu_custom_call.1} parent=11 // pred_check_branch
          %236 = sbr.rel (%p234) target = $region16
        $region15: #{tpu_custom_call.1} parent=11 // pred_region
          _
        $region16: #{tpu_custom_call.1} parent=11 // pred_fallthru
          _
        // Predicated region
        $region17: #{tpu_custom_call.1} parent=11 // pred_check
          %p237 = pneg %p88
        $region18: #{tpu_custom_call.1} parent=11 // pred_check_branch
          %239 = sbr.rel (%p237) target = $region20
        $region19: #{tpu_custom_call.1} parent=11 // pred_region
          _
        $region20: #{tpu_custom_call.1} parent=11 // pred_fallthru
          _
        // Predicated region
        $region21: #{tpu_custom_call.1} parent=11 // pred_check
          %p240 = pneg %p109
        $region22: #{tpu_custom_call.1} parent=11 // pred_check_branch
          %242 = sbr.rel (%p240) target = $region24
        $region23: #{tpu_custom_call.1} parent=11 // pred_region
          _
        $region24: #{tpu_custom_call.1} parent=11 // pred_fallthru
          _
        // Predicated region
        $region25: #{tpu_custom_call.1} parent=11 // pred_check
          %p243 = pneg %p130
        $region26: #{tpu_custom_call.1} parent=11 // pred_check_branch
          %245 = sbr.rel (%p243) target = $region28
        $region27: #{tpu_custom_call.1} parent=11 // pred_region
          _
        $region28: #{tpu_custom_call.1} parent=11 // pred_fallthru
          _
        // Predicated region
        $region29: #{tpu_custom_call.1} parent=11 // pred_check
          %p246 = pneg %p151
        $region30: #{tpu_custom_call.1} parent=11 // pred_check_branch
          %248 = sbr.rel (%p246) target = $region32
        $region31: #{tpu_custom_call.1} parent=11 // pred_region
          _
        $region32: #{tpu_custom_call.1} parent=11 // pred_fallthru
          _
        // Predicated region
        $region33: #{tpu_custom_call.1} parent=11 // pred_check
          %p249 = pneg %p172
        $region34: #{tpu_custom_call.1} parent=11 // pred_check_branch
          %251 = sbr.rel (%p249) target = $region36
        $region35: #{tpu_custom_call.1} parent=11 // pred_region
          _
        $region36: #{tpu_custom_call.1} parent=11 // pred_fallthru
          _
        // Predicated region
        $region37: #{tpu_custom_call.1} parent=11 // pred_check
          %p252 = pneg %p193
        $region38: #{tpu_custom_call.1} parent=11 // pred_check_branch
          %254 = sbr.rel (%p252) target = $region40
        $region39: #{tpu_custom_call.1} parent=11 // pred_region
          _
        $region40: #{tpu_custom_call.1} parent=11 // pred_fallthru
          _
      $region12: #{tpu_custom_call.1} parent=5 // pred_fallthru
        _
      %p255 = scmp.lt.s32.totalorder %s20, 2
      // Predicated region
      $region41: #{tpu_custom_call.1} parent=5 // pred_check
        %p256 = pneg %p255
      $region42: #{tpu_custom_call.1} parent=5 // pred_check_branch
        %258 = sbr.rel (%p256) target = $region44
      $region43: #{tpu_custom_call.1} parent=5 // pred_region
        // Predicated region
        $region45: #{tpu_custom_call.1} parent=43 // pred_check
          %p259 = pneg %p40
        $region46: #{tpu_custom_call.1} parent=43 // pred_check_branch
          %261 = sbr.rel (%p259) target = $region48
        $region47: #{tpu_custom_call.1} parent=43 // pred_region
          %s262 = sand.u32 %s30, 1
          %s263 = scalar_lea.sflag [#allocation4], %s262
          %s264 = sand.u32 %s30, 1
          %s265 = smul.addr %s264, 128
          %s266 = scalar_lea.vmem [#allocation3], %s265
          %s267 = smul.u32 2, %s20
          %s269 = ssub.s32 2048, 2048
          %270 = vsyncadd %s263, %s269
          %s271 = smul.addr %s267, 8
          %s272 = smul.addr %s271, 128
          %s273 = scalar_lea.hbm %s0, %s272
          %s274 = sshll.u32 %s266, 4
          %s275 = int_to_ptr.vmem [resolvable:$true] %s274
          %280 = dma.hbm_to_vmem [thread:$0]  %s273, 2048, %s275, %s263, 256, 256, 16
        $region48: #{tpu_custom_call.1} parent=43 // pred_fallthru
          _
      $region44: #{tpu_custom_call.1} parent=5 // pred_fallthru
        _
      %p281 = scmp.le.s32.totalorder 1, %s20
      %p282 = scmp.lt.s32.totalorder %s20, 3
      %p283 = pnand %p281, %p282
      %p284 = pneg %p283
      // Predicated region
      $region49: #{tpu_custom_call.1} parent=5 // pred_check
        _
      $region50: #{tpu_custom_call.1} parent=5 // pred_check_branch
        %286 = sbr.rel (%p283) target = $region52
      $region51: #{tpu_custom_call.1} parent=5 // pred_region
        %s287 = ssub.s32 %s20, 1
        %s288 = sand.u32 %s33, 1
        %s289 = scalar_lea.sflag [#allocation4], %s288
        %s290 = sand.u32 %s33, 1
        %s291 = smul.addr %s290, 128
        %s292 = scalar_lea.vmem [#allocation3], %s291
        // Predicated region
        $region53: #{tpu_custom_call.1} parent=51 // pred_check
          %p293 = pneg %p46
        $region54: #{tpu_custom_call.1} parent=51 // pred_check_branch
          %295 = sbr.rel (%p293) target = $region56
        $region55: #{tpu_custom_call.1} parent=51 // pred_region
          %296 = dma.done %s289, 2048
        $region56: #{tpu_custom_call.1} parent=51 // pred_fallthru
          _
        %s297 = sand.u32 %s33, 1
        %s298 = scalar_lea.sflag [#allocation4], %s297
        %s299 = sand.u32 %s33, 1
        %s300 = smul.addr %s299, 128
        %s301 = scalar_lea.vmem [#allocation3], %s300
        %p302 = pneg %p46
        %p303 = pneg %p43
        %p304 = pneg %p67
        %p305 = pneg %p64
        %p306 = pneg %p88
        %p307 = pneg %p85
        %p308 = pneg %p109
        %p309 = pneg %p106
        %p310 = pneg %p130
        %p311 = pneg %p127
        %p312 = pneg %p151
        %p313 = pneg %p148
        %p314 = pneg %p172
        %p315 = pneg %p169
        %p316 = pneg %p193
        %p317 = pneg %p190
        %p318 = pneg %p219
        %p319 = pneg %p216
        %s320 = sand.u32 %s206, 1
        %s321 = scalar_lea.sflag [#allocation5], %s320
        %s322 = sand.u32 %s206, 1
        %s323 = smul.addr %s322, 64
        %s324 = scalar_lea.vmem [#allocation6], %s323
        %s325 = smul.u32 2, %s25
        %s326 = smul.u32 2, %s25
        %v327 = vlaneseq
        %v328 = vand.u32 %v327, 127
        %v329 = vadd.s32 %v328, 128
        %v330 = vand.u32 %v328, 15
        %v331 = vand.u32 %v329, 15
        %vm332 = vcmp.ge.s32.totalorder %v328, 16
        %vm333 = vcmp.ge.s32.totalorder %v329, 16
        %vm334 = vcmp.ge.s32.totalorder %v330, 1
        %vm335 = vcmp.ge.s32.totalorder %v331, 1
        %vm336 = vmand %vm332, %vm334
        %vm337 = vmand %vm333, %vm335
        %vm338 = vcmp.lt.s32.totalorder %v330, 15
        %vm339 = vcmp.lt.s32.totalorder %v331, 15
        %vm340 = vmand %vm332, %vm338
        %vm341 = vmand %vm333, %vm339
        %vm342 = vcmp.lt.s32.totalorder %v328, 240
        %vm343 = vcmp.lt.s32.totalorder %v329, 240
        %vm344 = vmand %vm342, %vm334
        %vm345 = vmand %vm343, %vm335
        %vm346 = vmand %vm342, %vm338
        %vm347 = vmand %vm343, %vm339
        %vm348 = vcmp.ge.s32.totalorder %v328, 48
        %vm349 = vcmp.ge.s32.totalorder %v329, 48
        %vm350 = vcmp.ge.s32.totalorder %v328, 32
        %vm351 = vcmp.ge.s32.totalorder %v329, 32
        %vm352 = vcmp.lt.s32.totalorder %v328, 224
        %vm353 = vcmp.lt.s32.totalorder %v329, 224
        %vm354 = vcmp.lt.s32.totalorder %v328, 208
        %vm355 = vcmp.lt.s32.totalorder %v329, 208
        %vm356 = vcmp.ge.s32.totalorder %v330, 3
        %vm357 = vcmp.ge.s32.totalorder %v331, 3
        %vm358 = vcmp.ge.s32.totalorder %v330, 2
        %vm359 = vcmp.ge.s32.totalorder %v331, 2
        %vm360 = vcmp.lt.s32.totalorder %v330, 14
        %vm361 = vcmp.lt.s32.totalorder %v331, 14
        %vm362 = vcmp.lt.s32.totalorder %v330, 13
        %vm363 = vcmp.lt.s32.totalorder %v331, 13
        %v364 = vld [vmem:[%s1] sm:$0xff]
        %v365 = vld [vmem:[%s1 + $0x8] sm:$0xff]
        %v366 = vld [vmem:[%s1 + $0x10] sm:$0xff]
        %v367 = vld [vmem:[%s1 + $0x18] sm:$0xff]
        %v368 = vld [vmem:[%s2] sm:$0xff]
        %v369 = vld [vmem:[%s2 + $0x8] sm:$0xff]
        %v370 = vld [vmem:[%s2 + $0x10] sm:$0xff]
        %v371 = vld [vmem:[%s2 + $0x18] sm:$0xff]
        %v372 = vld [vmem:[%s6] sm:$0xff]
        %v373 = vld [vmem:[%s6 + $0x8] sm:$0xff]
        %v374 = vld [vmem:[%s7] sm:$0xff]
        %v375 = vld [vmem:[%s7 + $0x8] sm:$0xff]
        %v376 = vld [vmem:[%s3] sm:$0xff]
        %v377 = vld [vmem:[%s3 + $0x8] sm:$0xff]
        %v378 = vld [vmem:[%s3 + $0x10] sm:$0xff]
        %v379 = vld [vmem:[%s3 + $0x18] sm:$0xff]
        %v380 = vld [vmem:[%s4] sm:$0xff]
        %v381 = vld [vmem:[%s4 + $0x8] sm:$0xff]
        %v382 = vld [vmem:[%s4 + $0x10] sm:$0xff]
        %v383 = vld [vmem:[%s4 + $0x18] sm:$0xff]
        %v384 = vld [vmem:[%s5] sm:$0xff]
        %v385 = vld [vmem:[%s5 + $0x8] sm:$0x3f]
        %v386 = vld [vmem:[%s292] sm:$0xff]
        %v387 = vld [vmem:[%s292 + $0x8] sm:$0xff]
        %v388 = vld [vmem:[%s292 + $0x10] sm:$0xff]
        %v389 = vld [vmem:[%s292 + $0x18] sm:$0xff]
        %v390 = vld [vmem:[%s292 + $0x20] sm:$0xff]
        %v391 = vld [vmem:[%s292 + $0x28] sm:$0xff]
        %v392 = vld [vmem:[%s292 + $0x30] sm:$0xff]
        %v393 = vld [vmem:[%s292 + $0x38] sm:$0xff]
        %395 = vset.pattern.permute.xlu0 4
        %396 = vperm.xlu0 %395, %v364
        %v397 = vpop.permute.xlu0 %396
        %400 = vset.pattern.permute.xlu0 4
        %401 = vperm.xlu0 %400, %v365
        %v402 = vpop.permute.xlu0 %401
        %405 = vset.pattern.permute.xlu0 4
        %406 = vperm.xlu0 %405, %v366
        %v407 = vpop.permute.xlu0 %406
        %410 = vset.pattern.permute.xlu0 4
        %411 = vperm.xlu0 %410, %v367
        %v412 = vpop.permute.xlu0 %411
        %v414 = vmul.f32 %v386, %v397
        %v415 = vmul.f32 %v387, %v397
        %v416 = vmul.f32 %v388, %v402
        %v417 = vmul.f32 %v389, %v402
        %v418 = vmul.f32 %v390, %v407
        %v419 = vmul.f32 %v391, %v407
        %v420 = vmul.f32 %v392, %v412
        %v421 = vmul.f32 %v393, %v412
        %422 = vrot.lane.b32.xlu0 %v386, 17
        %v423 = vpop.permute.xlu0 %422
        %424 = vrot.lane.b32.xlu0 %v388, 17
        %v425 = vpop.permute.xlu0 %424
        %426 = vrot.lane.b32.xlu0 %v390, 17
        %v427 = vpop.permute.xlu0 %426
        %428 = vrot.lane.b32.xlu0 %v392, 17
        %v429 = vpop.permute.xlu0 %428
        %430 = vrot.lane.b32.xlu0 %v387, 17
        %v431 = vpop.permute.xlu0 %430
        %432 = vrot.lane.b32.xlu0 %v389, 17
        %v433 = vpop.permute.xlu0 %432
        %434 = vrot.lane.b32.xlu0 %v391, 17
        %v435 = vpop.permute.xlu0 %434
        %436 = vrot.lane.b32.xlu0 %v393, 17
        %v437 = vpop.permute.xlu0 %436
        %vm438 = vcmp.lt.s32.totalorder %v328, 17
        %v439 = vsel %vm438, %v423, %v431
        %v440 = vsel %vm438, %v425, %v433
        %v441 = vsel %vm438, %v427, %v435
        %v442 = vsel %vm438, %v429, %v437
        %v443 = vsel %vm438, %v431, %v423
        %v444 = vsel %vm438, %v433, %v425
        %v445 = vsel %vm438, %v435, %v427
        %v446 = vsel %vm438, %v437, %v429
        %v447 = vsel %vm336, 1, 0
        %v448 = vsel %vm337, 1, 0
        %vm449 = vcmp.eq.s32.totalorder %v447, 1
        %vm450 = vcmp.eq.s32.totalorder %v448, 1
        %v451 = vsel %vm449, %v443, 0.0
        %v452 = vsel %vm450, %v439, 0.0
        %v453 = vsel %vm449, %v444, 0.0
        %v454 = vsel %vm450, %v440, 0.0
        %v455 = vsel %vm449, %v445, 0.0
        %v456 = vsel %vm450, %v441, 0.0
        %v457 = vsel %vm449, %v446, 0.0
        %v458 = vsel %vm450, %v442, 0.0
        %459 = vset.pattern.permute.xlu0 0
        %460 = vperm.xlu0 %459, %v364
        %v461 = vpop.permute.xlu0 %460
        %463 = vset.pattern.permute.xlu0 0
        %464 = vperm.xlu0 %463, %v365
        %v465 = vpop.permute.xlu0 %464
        %467 = vset.pattern.permute.xlu0 0
        %468 = vperm.xlu0 %467, %v366
        %v469 = vpop.permute.xlu0 %468
        %471 = vset.pattern.permute.xlu0 0
        %472 = vperm.xlu0 %471, %v367
        %v473 = vpop.permute.xlu0 %472
        %v475 = vmul.f32 %v451, %v461
        %v476 = vmul.f32 %v452, %v461
        %v477 = vmul.f32 %v453, %v465
        %v478 = vmul.f32 %v454, %v465
        %v479 = vmul.f32 %v455, %v469
        %v480 = vmul.f32 %v456, %v469
        %v481 = vmul.f32 %v457, %v473
        %v482 = vmul.f32 %v458, %v473
        %v483 = vadd.f32 %v414, %v475
        %v484 = vadd.f32 %v415, %v476
        %v485 = vadd.f32 %v416, %v477
        %v486 = vadd.f32 %v417, %v478
        %v487 = vadd.f32 %v418, %v479
        %v488 = vadd.f32 %v419, %v480
        %v489 = vadd.f32 %v420, %v481
        %v490 = vadd.f32 %v421, %v482
        %491 = vrot.lane.b32.xlu0 %v386, 16
        %v492 = vpop.permute.xlu0 %491
        %493 = vrot.lane.b32.xlu0 %v388, 16
        %v494 = vpop.permute.xlu0 %493
        %495 = vrot.lane.b32.xlu0 %v390, 16
        %v496 = vpop.permute.xlu0 %495
        %497 = vrot.lane.b32.xlu0 %v392, 16
        %v498 = vpop.permute.xlu0 %497
        %499 = vrot.lane.b32.xlu0 %v387, 16
        %v500 = vpop.permute.xlu0 %499
        %501 = vrot.lane.b32.xlu0 %v389, 16
        %v502 = vpop.permute.xlu0 %501
        %503 = vrot.lane.b32.xlu0 %v391, 16
        %v504 = vpop.permute.xlu0 %503
        %505 = vrot.lane.b32.xlu0 %v393, 16
        %v506 = vpop.permute.xlu0 %505
        %vm507 = vcmp.lt.s32.totalorder %v328, 16
        %v508 = vsel %vm507, %v492, %v500
        %v509 = vsel %vm507, %v494, %v502
        %v510 = vsel %vm507, %v496, %v504
        %v511 = vsel %vm507, %v498, %v506
        %v512 = vsel %vm507, %v500, %v492
        %v513 = vsel %vm507, %v502, %v494
        %v514 = vsel %vm507, %v504, %v496
        %v515 = vsel %vm507, %v506, %v498
        %v516 = vsel %vm332, 1, 0
        %v517 = vsel %vm333, 1, 0
        %vm518 = vcmp.eq.s32.totalorder %v516, 1
        %vm519 = vcmp.eq.s32.totalorder %v517, 1
        %v520 = vsel %vm518, %v512, 0.0
        %v521 = vsel %vm519, %v508, 0.0
        %v522 = vsel %vm518, %v513, 0.0
        %v523 = vsel %vm519, %v509, 0.0
        %v524 = vsel %vm518, %v514, 0.0
        %v525 = vsel %vm519, %v510, 0.0
        %v526 = vsel %vm518, %v515, 0.0
        %v527 = vsel %vm519, %v511, 0.0
        %528 = vset.pattern.permute.xlu0 1
        %529 = vperm.xlu0 %528, %v364
        %v530 = vpop.permute.xlu0 %529
        %532 = vset.pattern.permute.xlu0 1
        %533 = vperm.xlu0 %532, %v365
        %v534 = vpop.permute.xlu0 %533
        %536 = vset.pattern.permute.xlu0 1
        %537 = vperm.xlu0 %536, %v366
        %v538 = vpop.permute.xlu0 %537
        %540 = vset.pattern.permute.xlu0 1
        %541 = vperm.xlu0 %540, %v367
        %v542 = vpop.permute.xlu0 %541
        %v544 = vmul.f32 %v520, %v530
        %v545 = vmul.f32 %v521, %v530
        %v546 = vmul.f32 %v522, %v534
        %v547 = vmul.f32 %v523, %v534
        %v548 = vmul.f32 %v524, %v538
        %v549 = vmul.f32 %v525, %v538
        %v550 = vmul.f32 %v526, %v542
        %v551 = vmul.f32 %v527, %v542
        %v552 = vadd.f32 %v483, %v544
        %v553 = vadd.f32 %v484, %v545
        %v554 = vadd.f32 %v485, %v546
        %v555 = vadd.f32 %v486, %v547
        %v556 = vadd.f32 %v487, %v548
        %v557 = vadd.f32 %v488, %v549
        %v558 = vadd.f32 %v489, %v550
        %v559 = vadd.f32 %v490, %v551
        %560 = vrot.lane.b32.xlu0 %v386, 15
        %v561 = vpop.permute.xlu0 %560
        %562 = vrot.lane.b32.xlu0 %v388, 15
        %v563 = vpop.permute.xlu0 %562
        %564 = vrot.lane.b32.xlu0 %v390, 15
        %v565 = vpop.permute.xlu0 %564
        %566 = vrot.lane.b32.xlu0 %v392, 15
        %v567 = vpop.permute.xlu0 %566
        %568 = vrot.lane.b32.xlu0 %v387, 15
        %v569 = vpop.permute.xlu0 %568
        %570 = vrot.lane.b32.xlu0 %v389, 15
        %v571 = vpop.permute.xlu0 %570
        %572 = vrot.lane.b32.xlu0 %v391, 15
        %v573 = vpop.permute.xlu0 %572
        %574 = vrot.lane.b32.xlu0 %v393, 15
        %v575 = vpop.permute.xlu0 %574
        %vm576 = vcmp.lt.s32.totalorder %v328, 15
        %v577 = vsel %vm576, %v561, %v569
        %v578 = vsel %vm576, %v563, %v571
        %v579 = vsel %vm576, %v565, %v573
        %v580 = vsel %vm576, %v567, %v575
        %v581 = vsel %vm576, %v569, %v561
        %v582 = vsel %vm576, %v571, %v563
        %v583 = vsel %vm576, %v573, %v565
        %v584 = vsel %vm576, %v575, %v567
        %v585 = vsel %vm340, 1, 0
        %v586 = vsel %vm341, 1, 0
        %vm587 = vcmp.eq.s32.totalorder %v585, 1
        %vm588 = vcmp.eq.s32.totalorder %v586, 1
        %v589 = vsel %vm587, %v581, 0.0
        %v590 = vsel %vm588, %v577, 0.0
        %v591 = vsel %vm587, %v582, 0.0
        %v592 = vsel %vm588, %v578, 0.0
        %v593 = vsel %vm587, %v583, 0.0
        %v594 = vsel %vm588, %v579, 0.0
        %v595 = vsel %vm587, %v584, 0.0
        %v596 = vsel %vm588, %v580, 0.0
        %597 = vset.pattern.permute.xlu0 2
        %598 = vperm.xlu0 %597, %v364
        %v599 = vpop.permute.xlu0 %598
        %601 = vset.pattern.permute.xlu0 2
        %602 = vperm.xlu0 %601, %v365
        %v603 = vpop.permute.xlu0 %602
        %605 = vset.pattern.permute.xlu0 2
        %606 = vperm.xlu0 %605, %v366
        %v607 = vpop.permute.xlu0 %606
        %609 = vset.pattern.permute.xlu0 2
        %610 = vperm.xlu0 %609, %v367
        %v611 = vpop.permute.xlu0 %610
        %v613 = vmul.f32 %v589, %v599
        %v614 = vmul.f32 %v590, %v599
        %v615 = vmul.f32 %v591, %v603
        %v616 = vmul.f32 %v592, %v603
        %v617 = vmul.f32 %v593, %v607
        %v618 = vmul.f32 %v594, %v607
        %v619 = vmul.f32 %v595, %v611
        %v620 = vmul.f32 %v596, %v611
        %v621 = vadd.f32 %v552, %v613
        %v622 = vadd.f32 %v553, %v614
        %v623 = vadd.f32 %v554, %v615
        %v624 = vadd.f32 %v555, %v616
        %v625 = vadd.f32 %v556, %v617
        %v626 = vadd.f32 %v557, %v618
        %v627 = vadd.f32 %v558, %v619
        %v628 = vadd.f32 %v559, %v620
        %629 = vrot.lane.b32.xlu0 %v386, 1
        %v630 = vpop.permute.xlu0 %629
        %631 = vrot.lane.b32.xlu0 %v388, 1
        %v632 = vpop.permute.xlu0 %631
        %633 = vrot.lane.b32.xlu0 %v390, 1
        %v634 = vpop.permute.xlu0 %633
        %635 = vrot.lane.b32.xlu0 %v392, 1
        %v636 = vpop.permute.xlu0 %635
        %637 = vrot.lane.b32.xlu0 %v387, 1
        %v638 = vpop.permute.xlu0 %637
        %639 = vrot.lane.b32.xlu0 %v389, 1
        %v640 = vpop.permute.xlu0 %639
        %641 = vrot.lane.b32.xlu0 %v391, 1
        %v642 = vpop.permute.xlu0 %641
        %643 = vrot.lane.b32.xlu0 %v393, 1
        %v644 = vpop.permute.xlu0 %643
        %vm645 = vcmp.lt.s32.totalorder %v328, 1
        %v646 = vsel %vm645, %v630, %v638
        %v647 = vsel %vm645, %v632, %v640
        %v648 = vsel %vm645, %v634, %v642
        %v649 = vsel %vm645, %v636, %v644
        %v650 = vsel %vm645, %v638, %v630
        %v651 = vsel %vm645, %v640, %v632
        %v652 = vsel %vm645, %v642, %v634
        %v653 = vsel %vm645, %v644, %v636
        %v654 = vsel %vm334, 1, 0
        %v655 = vsel %vm335, 1, 0
        %vm656 = vcmp.eq.s32.totalorder %v654, 1
        %vm657 = vcmp.eq.s32.totalorder %v655, 1
        %v658 = vsel %vm656, %v650, 0.0
        %v659 = vsel %vm657, %v646, 0.0
        %v660 = vsel %vm656, %v651, 0.0
        %v661 = vsel %vm657, %v647, 0.0
        %v662 = vsel %vm656, %v652, 0.0
        %v663 = vsel %vm657, %v648, 0.0
        %v664 = vsel %vm656, %v653, 0.0
        %v665 = vsel %vm657, %v649, 0.0
        %666 = vset.pattern.permute.xlu0 3
        %667 = vperm.xlu0 %666, %v364
        %v668 = vpop.permute.xlu0 %667
        %670 = vset.pattern.permute.xlu0 3
        %671 = vperm.xlu0 %670, %v365
        %v672 = vpop.permute.xlu0 %671
        %674 = vset.pattern.permute.xlu0 3
        %675 = vperm.xlu0 %674, %v366
        %v676 = vpop.permute.xlu0 %675
        %678 = vset.pattern.permute.xlu0 3
        %679 = vperm.xlu0 %678, %v367
        %v680 = vpop.permute.xlu0 %679
        %v682 = vmul.f32 %v658, %v668
        %v683 = vmul.f32 %v659, %v668
        %v684 = vmul.f32 %v660, %v672
        %v685 = vmul.f32 %v661, %v672
        %v686 = vmul.f32 %v662, %v676
        %v687 = vmul.f32 %v663, %v676
        %v688 = vmul.f32 %v664, %v680
        %v689 = vmul.f32 %v665, %v680
        %v690 = vadd.f32 %v621, %v682
        %v691 = vadd.f32 %v622, %v683
        %v692 = vadd.f32 %v623, %v684
        %v693 = vadd.f32 %v624, %v685
        %v694 = vadd.f32 %v625, %v686
        %v695 = vadd.f32 %v626, %v687
        %v696 = vadd.f32 %v627, %v688
        %v697 = vadd.f32 %v628, %v689
        %698 = vrot.lane.b32.xlu0 %v386, 127
        %v699 = vpop.permute.xlu0 %698
        %700 = vrot.lane.b32.xlu0 %v388, 127
        %v701 = vpop.permute.xlu0 %700
        %702 = vrot.lane.b32.xlu0 %v390, 127
        %v703 = vpop.permute.xlu0 %702
        %704 = vrot.lane.b32.xlu0 %v392, 127
        %v705 = vpop.permute.xlu0 %704
        %706 = vrot.lane.b32.xlu0 %v387, 127
        %v707 = vpop.permute.xlu0 %706
        %708 = vrot.lane.b32.xlu0 %v389, 127
        %v709 = vpop.permute.xlu0 %708
        %710 = vrot.lane.b32.xlu0 %v391, 127
        %v711 = vpop.permute.xlu0 %710
        %712 = vrot.lane.b32.xlu0 %v393, 127
        %v713 = vpop.permute.xlu0 %712
        %vm714 = vcmp.lt.s32.totalorder %v328, 127
        %v715 = vsel %vm714, %v699, %v707
        %v716 = vsel %vm714, %v701, %v709
        %v717 = vsel %vm714, %v703, %v711
        %v718 = vsel %vm714, %v705, %v713
        %v719 = vsel %vm714, %v707, %v699
        %v720 = vsel %vm714, %v709, %v701
        %v721 = vsel %vm714, %v711, %v703
        %v722 = vsel %vm714, %v713, %v705
        %v723 = vsel %vm338, 1, 0
        %v724 = vsel %vm339, 1, 0
        %vm725 = vcmp.eq.s32.totalorder %v723, 1
        %vm726 = vcmp.eq.s32.totalorder %v724, 1
        %v727 = vsel %vm725, %v715, 0.0
        %v728 = vsel %vm726, %v719, 0.0
        %v729 = vsel %vm725, %v716, 0.0
        %v730 = vsel %vm726, %v720, 0.0
        %v731 = vsel %vm725, %v717, 0.0
        %v732 = vsel %vm726, %v721, 0.0
        %v733 = vsel %vm725, %v718, 0.0
        %v734 = vsel %vm726, %v722, 0.0
        %735 = vset.pattern.permute.xlu0 5
        %736 = vperm.xlu0 %735, %v364
        %v737 = vpop.permute.xlu0 %736
        %739 = vset.pattern.permute.xlu0 5
        %740 = vperm.xlu0 %739, %v365
        %v741 = vpop.permute.xlu0 %740
        %743 = vset.pattern.permute.xlu0 5
        %744 = vperm.xlu0 %743, %v366
        %v745 = vpop.permute.xlu0 %744
        %747 = vset.pattern.permute.xlu0 5
        %748 = vperm.xlu0 %747, %v367
        %v749 = vpop.permute.xlu0 %748
        %v751 = vmul.f32 %v727, %v737
        %v752 = vmul.f32 %v728, %v737
        %v753 = vmul.f32 %v729, %v741
        %v754 = vmul.f32 %v730, %v741
        %v755 = vmul.f32 %v731, %v745
        %v756 = vmul.f32 %v732, %v745
        %v757 = vmul.f32 %v733, %v749
        %v758 = vmul.f32 %v734, %v749
        %v759 = vadd.f32 %v690, %v751
        %v760 = vadd.f32 %v691, %v752
        %v761 = vadd.f32 %v692, %v753
        %v762 = vadd.f32 %v693, %v754
        %v763 = vadd.f32 %v694, %v755
        %v764 = vadd.f32 %v695, %v756
        %v765 = vadd.f32 %v696, %v757
        %v766 = vadd.f32 %v697, %v758
        %767 = vrot.lane.b32.xlu0 %v386, 113
        %v768 = vpop.permute.xlu0 %767
        %769 = vrot.lane.b32.xlu0 %v388, 113
        %v770 = vpop.permute.xlu0 %769
        %771 = vrot.lane.b32.xlu0 %v390, 113
        %v772 = vpop.permute.xlu0 %771
        %773 = vrot.lane.b32.xlu0 %v392, 113
        %v774 = vpop.permute.xlu0 %773
        %775 = vrot.lane.b32.xlu0 %v387, 113
        %v776 = vpop.permute.xlu0 %775
        %777 = vrot.lane.b32.xlu0 %v389, 113
        %v778 = vpop.permute.xlu0 %777
        %779 = vrot.lane.b32.xlu0 %v391, 113
        %v780 = vpop.permute.xlu0 %779
        %781 = vrot.lane.b32.xlu0 %v393, 113
        %v782 = vpop.permute.xlu0 %781
        %vm783 = vcmp.lt.s32.totalorder %v328, 113
        %v784 = vsel %vm783, %v768, %v776
        %v785 = vsel %vm783, %v770, %v778
        %v786 = vsel %vm783, %v772, %v780
        %v787 = vsel %vm783, %v774, %v782
        %v788 = vsel %vm783, %v776, %v768
        %v789 = vsel %vm783, %v778, %v770
        %v790 = vsel %vm783, %v780, %v772
        %v791 = vsel %vm783, %v782, %v774
        %v792 = vsel %vm344, 1, 0
        %v793 = vsel %vm345, 1, 0
        %vm794 = vcmp.eq.s32.totalorder %v792, 1
        %vm795 = vcmp.eq.s32.totalorder %v793, 1
        %v796 = vsel %vm794, %v784, 0.0
        %v797 = vsel %vm795, %v788, 0.0
        %v798 = vsel %vm794, %v785, 0.0
        %v799 = vsel %vm795, %v789, 0.0
        %v800 = vsel %vm794, %v786, 0.0
        %v801 = vsel %vm795, %v790, 0.0
        %v802 = vsel %vm794, %v787, 0.0
        %v803 = vsel %vm795, %v791, 0.0
        %804 = vset.pattern.permute.xlu0 6
        %805 = vperm.xlu0 %804, %v364
        %v806 = vpop.permute.xlu0 %805
        %808 = vset.pattern.permute.xlu0 6
        %809 = vperm.xlu0 %808, %v365
        %v810 = vpop.permute.xlu0 %809
        %812 = vset.pattern.permute.xlu0 6
        %813 = vperm.xlu0 %812, %v366
        %v814 = vpop.permute.xlu0 %813
        %816 = vset.pattern.permute.xlu0 6
        %817 = vperm.xlu0 %816, %v367
        %v818 = vpop.permute.xlu0 %817
        %v820 = vmul.f32 %v796, %v806
        %v821 = vmul.f32 %v797, %v806
        %v822 = vmul.f32 %v798, %v810
        %v823 = vmul.f32 %v799, %v810
        %v824 = vmul.f32 %v800, %v814
        %v825 = vmul.f32 %v801, %v814
        %v826 = vmul.f32 %v802, %v818
        %v827 = vmul.f32 %v803, %v818
        %v828 = vadd.f32 %v759, %v820
        %v829 = vadd.f32 %v760, %v821
        %v830 = vadd.f32 %v761, %v822
        %v831 = vadd.f32 %v762, %v823
        %v832 = vadd.f32 %v763, %v824
        %v833 = vadd.f32 %v764, %v825
        %v834 = vadd.f32 %v765, %v826
        %v835 = vadd.f32 %v766, %v827
        %836 = vrot.lane.b32.xlu0 %v386, 112
        %v837 = vpop.permute.xlu0 %836
        %838 = vrot.lane.b32.xlu0 %v388, 112
        %v839 = vpop.permute.xlu0 %838
        %840 = vrot.lane.b32.xlu0 %v390, 112
        %v841 = vpop.permute.xlu0 %840
        %842 = vrot.lane.b32.xlu0 %v392, 112
        %v843 = vpop.permute.xlu0 %842
        %844 = vrot.lane.b32.xlu0 %v387, 112
        %v845 = vpop.permute.xlu0 %844
        %846 = vrot.lane.b32.xlu0 %v389, 112
        %v847 = vpop.permute.xlu0 %846
        %848 = vrot.lane.b32.xlu0 %v391, 112
        %v849 = vpop.permute.xlu0 %848
        %850 = vrot.lane.b32.xlu0 %v393, 112
        %v851 = vpop.permute.xlu0 %850
        %vm852 = vcmp.lt.s32.totalorder %v328, 112
        %v853 = vsel %vm852, %v837, %v845
        %v854 = vsel %vm852, %v839, %v847
        %v855 = vsel %vm852, %v841, %v849
        %v856 = vsel %vm852, %v843, %v851
        %v857 = vsel %vm852, %v845, %v837
        %v858 = vsel %vm852, %v847, %v839
        %v859 = vsel %vm852, %v849, %v841
        %v860 = vsel %vm852, %v851, %v843
        %v861 = vsel %vm342, 1, 0
        %v862 = vsel %vm343, 1, 0
        %vm863 = vcmp.eq.s32.totalorder %v861, 1
        %vm864 = vcmp.eq.s32.totalorder %v862, 1
        %v865 = vsel %vm863, %v853, 0.0
        %v866 = vsel %vm864, %v857, 0.0
        %v867 = vsel %vm863, %v854, 0.0
        %v868 = vsel %vm864, %v858, 0.0
        %v869 = vsel %vm863, %v855, 0.0
        %v870 = vsel %vm864, %v859, 0.0
        %v871 = vsel %vm863, %v856, 0.0
        %v872 = vsel %vm864, %v860, 0.0
        %873 = vset.pattern.permute.xlu0 7
        %874 = vperm.xlu0 %873, %v364
        %v875 = vpop.permute.xlu0 %874
        %877 = vset.pattern.permute.xlu0 7
        %878 = vperm.xlu0 %877, %v365
        %v879 = vpop.permute.xlu0 %878
        %881 = vset.pattern.permute.xlu0 7
        %882 = vperm.xlu0 %881, %v366
        %v883 = vpop.permute.xlu0 %882
        %885 = vset.pattern.permute.xlu0 7
        %886 = vperm.xlu0 %885, %v367
        %v887 = vpop.permute.xlu0 %886
        %v889 = vmul.f32 %v865, %v875
        %v890 = vmul.f32 %v866, %v875
        %v891 = vmul.f32 %v867, %v879
        %v892 = vmul.f32 %v868, %v879
        %v893 = vmul.f32 %v869, %v883
        %v894 = vmul.f32 %v870, %v883
        %v895 = vmul.f32 %v871, %v887
        %v896 = vmul.f32 %v872, %v887
        %v897 = vadd.f32 %v828, %v889
        %v898 = vadd.f32 %v829, %v890
        %v899 = vadd.f32 %v830, %v891
        %v900 = vadd.f32 %v831, %v892
        %v901 = vadd.f32 %v832, %v893
        %v902 = vadd.f32 %v833, %v894
        %v903 = vadd.f32 %v834, %v895
        %v904 = vadd.f32 %v835, %v896
        %905 = vrot.lane.b32.xlu0 %v386, 111
        %v906 = vpop.permute.xlu0 %905
        %907 = vrot.lane.b32.xlu0 %v388, 111
        %v908 = vpop.permute.xlu0 %907
        %909 = vrot.lane.b32.xlu0 %v390, 111
        %v910 = vpop.permute.xlu0 %909
        %911 = vrot.lane.b32.xlu0 %v392, 111
        %v912 = vpop.permute.xlu0 %911
        %913 = vrot.lane.b32.xlu0 %v387, 111
        %v914 = vpop.permute.xlu0 %913
        %915 = vrot.lane.b32.xlu0 %v389, 111
        %v916 = vpop.permute.xlu0 %915
        %917 = vrot.lane.b32.xlu0 %v391, 111
        %v918 = vpop.permute.xlu0 %917
        %919 = vrot.lane.b32.xlu0 %v393, 111
        %v920 = vpop.permute.xlu0 %919
        %vm921 = vcmp.lt.s32.totalorder %v328, 111
        %v922 = vsel %vm921, %v906, %v914
        %v923 = vsel %vm921, %v908, %v916
        %v924 = vsel %vm921, %v910, %v918
        %v925 = vsel %vm921, %v912, %v920
        %v926 = vsel %vm921, %v914, %v906
        %v927 = vsel %vm921, %v916, %v908
        %v928 = vsel %vm921, %v918, %v910
        %v929 = vsel %vm921, %v920, %v912
        %v930 = vsel %vm346, 1, 0
        %v931 = vsel %vm347, 1, 0
        %vm932 = vcmp.eq.s32.totalorder %v930, 1
        %vm933 = vcmp.eq.s32.totalorder %v931, 1
        %v934 = vsel %vm932, %v922, 0.0
        %v935 = vsel %vm933, %v926, 0.0
        %v936 = vsel %vm932, %v923, 0.0
        %v937 = vsel %vm933, %v927, 0.0
        %v938 = vsel %vm932, %v924, 0.0
        %v939 = vsel %vm933, %v928, 0.0
        %v940 = vsel %vm932, %v925, 0.0
        %v941 = vsel %vm933, %v929, 0.0
        %942 = vset.pattern.permute.xlu0 8
        %943 = vperm.xlu0 %942, %v364
        %v944 = vpop.permute.xlu0 %943
        %946 = vset.pattern.permute.xlu0 8
        %947 = vperm.xlu0 %946, %v365
        %v948 = vpop.permute.xlu0 %947
        %950 = vset.pattern.permute.xlu0 8
        %951 = vperm.xlu0 %950, %v366
        %v952 = vpop.permute.xlu0 %951
        %954 = vset.pattern.permute.xlu0 8
        %955 = vperm.xlu0 %954, %v367
        %v956 = vpop.permute.xlu0 %955
        %v958 = vmul.f32 %v934, %v944
        %v959 = vmul.f32 %v935, %v944
        %v960 = vmul.f32 %v936, %v948
        %v961 = vmul.f32 %v937, %v948
        %v962 = vmul.f32 %v938, %v952
        %v963 = vmul.f32 %v939, %v952
        %v964 = vmul.f32 %v940, %v956
        %v965 = vmul.f32 %v941, %v956
        %v966 = vadd.f32 %v897, %v958
        %v967 = vadd.f32 %v898, %v959
        %v968 = vadd.f32 %v899, %v960
        %v969 = vadd.f32 %v900, %v961
        %v970 = vadd.f32 %v901, %v962
        %v971 = vadd.f32 %v902, %v963
        %v972 = vadd.f32 %v903, %v964
        %v973 = vadd.f32 %v904, %v965
        %975 = vset.pattern.permute.xlu0 0
        %976 = vperm.xlu0 %975, %v368
        %v977 = vpop.permute.xlu0 %976
        %980 = vset.pattern.permute.xlu0 0
        %981 = vperm.xlu0 %980, %v369
        %v982 = vpop.permute.xlu0 %981
        %985 = vset.pattern.permute.xlu0 0
        %986 = vperm.xlu0 %985, %v370
        %v987 = vpop.permute.xlu0 %986
        %990 = vset.pattern.permute.xlu0 0
        %991 = vperm.xlu0 %990, %v371
        %v992 = vpop.permute.xlu0 %991
        %v994 = vadd.f32 %v966, %v977
        %v995 = vadd.f32 %v967, %v977
        %v996 = vadd.f32 %v968, %v982
        %v997 = vadd.f32 %v969, %v982
        %v998 = vadd.f32 %v970, %v987
        %v999 = vadd.f32 %v971, %v987
        %v1000 = vadd.f32 %v972, %v992
        %v1001 = vadd.f32 %v973, %v992
        %v1002 = vadd.f32 %v994, 3.0
        %v1003 = vadd.f32 %v995, 3.0
        %v1004 = vadd.f32 %v996, 3.0
        %v1005 = vadd.f32 %v997, 3.0
        %v1006 = vadd.f32 %v998, 3.0
        %v1007 = vadd.f32 %v999, 3.0
        %v1008 = vadd.f32 %v1000, 3.0
        %v1009 = vadd.f32 %v1001, 3.0
        %v1010 = vmax.f32 %v1002, 0.0
        %v1011 = vmax.f32 %v1003, 0.0
        %v1012 = vmax.f32 %v1004, 0.0
        %v1013 = vmax.f32 %v1005, 0.0
        %v1014 = vmax.f32 %v1006, 0.0
        %v1015 = vmax.f32 %v1007, 0.0
        %v1016 = vmax.f32 %v1008, 0.0
        %v1017 = vmax.f32 %v1009, 0.0
        %v1018 = vmin.f32 %v1010, 6.0
        %v1019 = vmin.f32 %v1011, 6.0
        %v1020 = vmin.f32 %v1012, 6.0
        %v1021 = vmin.f32 %v1013, 6.0
        %v1022 = vmin.f32 %v1014, 6.0
        %v1023 = vmin.f32 %v1015, 6.0
        %v1024 = vmin.f32 %v1016, 6.0
        %v1025 = vmin.f32 %v1017, 6.0
        %v1026 = vmul.f32 %v994, %v1018
        %v1027 = vmul.f32 %v995, %v1019
        %v1028 = vmul.f32 %v996, %v1020
        %v1029 = vmul.f32 %v997, %v1021
        %v1030 = vmul.f32 %v998, %v1022
        %v1031 = vmul.f32 %v999, %v1023
        %v1032 = vmul.f32 %v1000, %v1024
        %v1033 = vmul.f32 %v1001, %v1025
        %v1034 = vmul.f32 %v1026, 0.16666667
        %v1035 = vmul.f32 %v1027, 0.16666667
        %v1036 = vmul.f32 %v1028, 0.16666667
        %v1037 = vmul.f32 %v1029, 0.16666667
        %v1038 = vmul.f32 %v1030, 0.16666667
        %v1039 = vmul.f32 %v1031, 0.16666667
        %v1040 = vmul.f32 %v1032, 0.16666667
        %v1041 = vmul.f32 %v1033, 0.16666667
        %v1042 = vadd.f32 %v1034, %v1035
        %1043 = vadd.xlane.f32.xlu0 %v1042
        %v1044 = vpop.xlane.xlu0 %1043
        %v1045 = vadd.f32 %v1036, %v1037
        %1046 = vadd.xlane.f32.xlu0 %v1045
        %v1047 = vpop.xlane.xlu0 %1046
        %v1048 = vadd.f32 %v1038, %v1039
        %1049 = vadd.xlane.f32.xlu0 %v1048
        %v1050 = vpop.xlane.xlu0 %1049
        %v1051 = vadd.f32 %v1040, %v1041
        %1052 = vadd.xlane.f32.xlu0 %v1051
        %v1053 = vpop.xlane.xlu0 %1052
        %v1054 = vmul.f32 %v1044, 0.00390625
        %v1055 = vmul.f32 %v1047, 0.00390625
        %v1056 = vmul.f32 %v1050, 0.00390625
        %v1057 = vmul.f32 %v1053, 0.00390625
        %v1058 = vmul.f32 %v1054, %v376
        %v1059 = vmul.f32 %v1055, %v377
        %v1060 = vmul.f32 %v1056, %v378
        %v1061 = vmul.f32 %v1057, %v379
        %vm1062 = vcmask 15360
        %v1063 = vsel %vm1062, %v1058, 0.0
        %v1064 = vsel %vm1062, %v1059, 0.0
        %v1065 = vadd.f32 %v1063, %v1064
        %v1066 = vsel %vm1062, %v1060, 0.0
        %v1067 = vadd.f32 %v1065, %v1066
        %v1068 = vsel %vm1062, %v1061, 0.0
        %v1069 = vadd.f32 %v1067, %v1068
        %v1070 = vrot.slane %v1069, 4
        %v1071 = vadd.f32 %v1069, %v1070
        %v1072 = vrot.slane %v1071, 2
        %v1073 = vadd.f32 %v1071, %v1072
        %v1074 = vrot.slane %v1073, 1
        %v1075 = vadd.f32 %v1073, %v1074
        %v1076 = vmax.f32 %v1075, 0.0
        %v1077 = vmul.f32 %v380, %v1076
        %v1078 = vmul.f32 %v381, %v1076
        %v1079 = vmul.f32 %v382, %v1076
        %v1080 = vmul.f32 %v383, %v1076
        %v1081 = vsel %vm1062, %v1077, 0.0
        %1082 = vadd.xlane.f32.xlu0 %v1081
        %v1083 = vpop.xlane.xlu0 %1082
        %v1084 = vsel %vm1062, %v1078, 0.0
        %1085 = vadd.xlane.f32.xlu0 %v1084
        %v1086 = vpop.xlane.xlu0 %1085
        %v1087 = vsel %vm1062, %v1079, 0.0
        %1088 = vadd.xlane.f32.xlu0 %v1087
        %v1089 = vpop.xlane.xlu0 %1088
        %v1090 = vsel %vm1062, %v1080, 0.0
        %1091 = vadd.xlane.f32.xlu0 %v1090
        %v1092 = vpop.xlane.xlu0 %1091
        %v1093 = vadd.f32 %v1083, 3.0
        %v1094 = vadd.f32 %v1086, 3.0
        %v1095 = vadd.f32 %v1089, 3.0
        %v1096 = vadd.f32 %v1092, 3.0
        %v1097 = vmax.f32 %v1093, 0.0
        %v1098 = vmax.f32 %v1094, 0.0
        %v1099 = vmax.f32 %v1095, 0.0
        %v1100 = vmax.f32 %v1096, 0.0
        %v1101 = vmin.f32 %v1097, 6.0
        %v1102 = vmin.f32 %v1098, 6.0
        %v1103 = vmin.f32 %v1099, 6.0
        %v1104 = vmin.f32 %v1100, 6.0
        %v1105 = vmul.f32 %v1101, 0.16666667
        %v1106 = vmul.f32 %v1102, 0.16666667
        %v1107 = vmul.f32 %v1103, 0.16666667
        %v1108 = vmul.f32 %v1104, 0.16666667
        %v1109 = vmul.f32 %v1034, %v1105
        %v1110 = vmul.f32 %v1035, %v1105
        %v1111 = vmul.f32 %v1036, %v1106
        %v1112 = vmul.f32 %v1037, %v1106
        %v1113 = vmul.f32 %v1038, %v1107
        %v1114 = vmul.f32 %v1039, %v1107
        %v1115 = vmul.f32 %v1040, %v1108
        %v1116 = vmul.f32 %v1041, %v1108
        %v1117 = vmax.f32 %v1109, %v1113
        %v1118 = vmax.f32 %v1111, %v1115
        %v1119 = vmax.f32 %v1117, %v1118
        %v1120 = vrot.slane %v1119, 4
        %v1121 = vmax.f32 %v1119, %v1120
        %v1122 = vrot.slane %v1121, 2
        %v1123 = vmax.f32 %v1121, %v1122
        %v1124 = vrot.slane %v1123, 1
        %v1125 = vmax.f32 %v1123, %v1124
        %v1126 = vmax.f32 %v1110, %v1114
        %v1127 = vmax.f32 %v1112, %v1116
        %v1128 = vmax.f32 %v1126, %v1127
        %v1129 = vrot.slane %v1128, 4
        %v1130 = vmax.f32 %v1128, %v1129
        %v1131 = vrot.slane %v1130, 2
        %v1132 = vmax.f32 %v1130, %v1131
        %v1133 = vrot.slane %v1132, 1
        %v1134 = vmax.f32 %v1132, %v1133
        %v1135 = vadd.f32 %v1109, %v1111
        %v1136 = vadd.f32 %v1135, %v1113
        %v1137 = vadd.f32 %v1136, %v1115
        %v1138 = vrot.slane %v1137, 4
        %v1139 = vadd.f32 %v1137, %v1138
        %v1140 = vrot.slane %v1139, 2
        %v1141 = vadd.f32 %v1139, %v1140
        %v1142 = vrot.slane %v1141, 1
        %v1143 = vadd.f32 %v1141, %v1142
        %v1144 = vadd.f32 %v1110, %v1112
        %v1145 = vadd.f32 %v1144, %v1114
        %v1146 = vadd.f32 %v1145, %v1116
        %v1147 = vrot.slane %v1146, 4
        %v1148 = vadd.f32 %v1146, %v1147
        %v1149 = vrot.slane %v1148, 2
        %v1150 = vadd.f32 %v1148, %v1149
        %v1151 = vrot.slane %v1150, 1
        %v1152 = vadd.f32 %v1150, %v1151
        %v1153 = vmul.f32 %v1143, 0.03125
        %v1154 = vmul.f32 %v1152, 0.03125
        %1155 = vrot.lane.b32.xlu0 %v1125, 48
        %v1156 = vpop.permute.xlu0 %1155
        %1157 = vrot.lane.b32.xlu0 %v1134, 48
        %v1158 = vpop.permute.xlu0 %1157
        %vm1159 = vcmp.lt.s32.totalorder %v328, 48
        %v1160 = vsel %vm1159, %v1156, %v1158
        %v1161 = vsel %vm1159, %v1158, %v1156
        %v1162 = vsel %vm348, %v1161, 0.0
        %v1163 = vsel %vm349, %v1160, 0.0
        %v1166 = vcombine.low %v1162, %v1163
        %v1168 = vunpack.c.l.s4 1966171168
        %v1169 = vunpack.c.0.s8 %v1168
        %v1170 = vlaneseq
        %v1171 = vshrl.u32 %v1170, 7
        %v1172 = vsub.s32 %v1169, %v1171
        %v1173 = vrot.slane %v1166, %v1172
        %v1175 = vunpack.c.l.s4 1966171168
        %v1176 = vunpack.c.0.s8 %v1175
        %v1177 = vlaneseq
        %v1178 = vshrl.u32 %v1177, 7
        %v1179 = vsub.s32 %v1176, %v1178
        %v1180 = vrot.slane %v1173, %v1179
        %v1182 = vlaneseq
        %vm1183 = vcmp.ge.s32.totalorder %v1182, 0
        %vm1184 = vcmp.lt.s32.totalorder %v1182, 256
        %vm1185 = vmand %vm1183, %vm1184
        %1186 = vst.msk [vmem:[#allocation2] ss:$8 sm:$0x3] %vm1185, %v1180
        %1187 = vst.msk [vmem:[#allocation2] ss:$8 sm:$0x0] %vm1185, %v1180
        %1188 = vrot.lane.b32.xlu0 %v1153, 48
        %v1189 = vpop.permute.xlu0 %1188
        %1190 = vrot.lane.b32.xlu0 %v1154, 48
        %v1191 = vpop.permute.xlu0 %1190
        %v1192 = vsel %vm1159, %v1189, %v1191
        %v1193 = vsel %vm1159, %v1191, %v1189
        %v1194 = vsel %vm348, %v1193, 0.0
        %v1195 = vsel %vm349, %v1192, 0.0
        %v1198 = vcombine.low %v1194, %v1195
        %v1200 = vunpack.c.l.s4 1966171168
        %v1201 = vunpack.c.0.s8 %v1200
        %v1202 = vlaneseq
        %v1203 = vshrl.u32 %v1202, 7
        %v1204 = vsub.s32 %v1201, %v1203
        %v1205 = vrot.slane %v1198, %v1204
        %v1207 = vunpack.c.l.s4 1966171168
        %v1208 = vunpack.c.0.s8 %v1207
        %v1209 = vlaneseq
        %v1210 = vshrl.u32 %v1209, 7
        %v1211 = vsub.s32 %v1208, %v1210
        %v1212 = vrot.slane %v1205, %v1211
        %s1214 = scalar_lea.vmem [#allocation2], 1
        %1215 = vst.msk [vmem:[%s1214] ss:$8 sm:$0x3] %vm1185, %v1212
        %1216 = vst.msk [vmem:[%s1214] ss:$8 sm:$0x0] %vm1185, %v1212
        %1217 = vrot.lane.b32.xlu0 %v1125, 32
        %v1218 = vpop.permute.xlu0 %1217
        %1219 = vrot.lane.b32.xlu0 %v1134, 32
        %v1220 = vpop.permute.xlu0 %1219
        %vm1221 = vcmp.lt.s32.totalorder %v328, 32
        %v1222 = vsel %vm1221, %v1218, %v1220
        %v1223 = vsel %vm1221, %v1220, %v1218
        %v1224 = vsel %vm350, %v1223, 0.0
        %v1225 = vsel %vm351, %v1222, 0.0
        %v1228 = vcombine.low %v1224, %v1225
        %v1230 = vunpack.c.l.s4 1966171168
        %v1231 = vunpack.c.0.s8 %v1230
        %v1232 = vlaneseq
        %v1233 = vshrl.u32 %v1232, 7
        %v1234 = vsub.s32 %v1231, %v1233
        %v1235 = vrot.slane %v1228, %v1234
        %v1237 = vunpack.c.l.s4 1966171168
        %v1238 = vunpack.c.0.s8 %v1237
        %v1239 = vlaneseq
        %v1240 = vshrl.u32 %v1239, 7
        %v1241 = vsub.s32 %v1238, %v1240
        %v1242 = vrot.slane %v1235, %v1241
        %s1244 = scalar_lea.vmem [#allocation2], 2
        %1245 = vst.msk [vmem:[%s1244] ss:$8 sm:$0x3] %vm1185, %v1242
        %1246 = vst.msk [vmem:[%s1244] ss:$8 sm:$0x0] %vm1185, %v1242
        %1247 = vrot.lane.b32.xlu0 %v1153, 32
        %v1248 = vpop.permute.xlu0 %1247
        %1249 = vrot.lane.b32.xlu0 %v1154, 32
        %v1250 = vpop.permute.xlu0 %1249
        %v1251 = vsel %vm1221, %v1248, %v1250
        %v1252 = vsel %vm1221, %v1250, %v1248
        %v1253 = vsel %vm350, %v1252, 0.0
        %v1254 = vsel %vm351, %v1251, 0.0
        %v1257 = vcombine.low %v1253, %v1254
        %v1259 = vunpack.c.l.s4 1966171168
        %v1260 = vunpack.c.0.s8 %v1259
        %v1261 = vlaneseq
        %v1262 = vshrl.u32 %v1261, 7
        %v1263 = vsub.s32 %v1260, %v1262
        %v1264 = vrot.slane %v1257, %v1263
        %v1266 = vunpack.c.l.s4 1966171168
        %v1267 = vunpack.c.0.s8 %v1266
        %v1268 = vlaneseq
        %v1269 = vshrl.u32 %v1268, 7
        %v1270 = vsub.s32 %v1267, %v1269
        %v1271 = vrot.slane %v1264, %v1270
        %s1273 = scalar_lea.vmem [#allocation2], 3
        %1274 = vst.msk [vmem:[%s1273] ss:$8 sm:$0x3] %vm1185, %v1271
        %1275 = vst.msk [vmem:[%s1273] ss:$8 sm:$0x0] %vm1185, %v1271
        %1276 = vrot.lane.b32.xlu0 %v1125, 16
        %v1277 = vpop.permute.xlu0 %1276
        %1278 = vrot.lane.b32.xlu0 %v1134, 16
        %v1279 = vpop.permute.xlu0 %1278
        %v1280 = vsel %vm507, %v1277, %v1279
        %v1281 = vsel %vm507, %v1279, %v1277
        %v1282 = vsel %vm332, %v1281, 0.0
        %v1283 = vsel %vm333, %v1280, 0.0
        %v1286 = vcombine.low %v1282, %v1283
        %v1288 = vunpack.c.l.s4 1966171168
        %v1289 = vunpack.c.0.s8 %v1288
        %v1290 = vlaneseq
        %v1291 = vshrl.u32 %v1290, 7
        %v1292 = vsub.s32 %v1289, %v1291
        %v1293 = vrot.slane %v1286, %v1292
        %v1295 = vunpack.c.l.s4 1966171168
        %v1296 = vunpack.c.0.s8 %v1295
        %v1297 = vlaneseq
        %v1298 = vshrl.u32 %v1297, 7
        %v1299 = vsub.s32 %v1296, %v1298
        %v1300 = vrot.slane %v1293, %v1299
        %s1302 = scalar_lea.vmem [#allocation2], 4
        %1303 = vst.msk [vmem:[%s1302] ss:$8 sm:$0x3] %vm1185, %v1300
        %1304 = vst.msk [vmem:[%s1302] ss:$8 sm:$0x0] %vm1185, %v1300
        %1305 = vrot.lane.b32.xlu0 %v1153, 16
        %v1306 = vpop.permute.xlu0 %1305
        %1307 = vrot.lane.b32.xlu0 %v1154, 16
        %v1308 = vpop.permute.xlu0 %1307
        %v1309 = vsel %vm507, %v1306, %v1308
        %v1310 = vsel %vm507, %v1308, %v1306
        %v1311 = vsel %vm332, %v1310, 0.0
        %v1312 = vsel %vm333, %v1309, 0.0
        %v1315 = vcombine.low %v1311, %v1312
        %v1317 = vunpack.c.l.s4 1966171168
        %v1318 = vunpack.c.0.s8 %v1317
        %v1319 = vlaneseq
        %v1320 = vshrl.u32 %v1319, 7
        %v1321 = vsub.s32 %v1318, %v1320
        %v1322 = vrot.slane %v1315, %v1321
        %v1324 = vunpack.c.l.s4 1966171168
        %v1325 = vunpack.c.0.s8 %v1324
        %v1326 = vlaneseq
        %v1327 = vshrl.u32 %v1326, 7
        %v1328 = vsub.s32 %v1325, %v1327
        %v1329 = vrot.slane %v1322, %v1328
        %s1331 = scalar_lea.vmem [#allocation2], 5
        %1332 = vst.msk [vmem:[%s1331] ss:$8 sm:$0x3] %vm1185, %v1329
        %1333 = vst.msk [vmem:[%s1331] ss:$8 sm:$0x0] %vm1185, %v1329
        %v1336 = vcombine.low %v1125, %v1134
        %v1338 = vunpack.c.l.s4 1966171168
        %v1339 = vunpack.c.0.s8 %v1338
        %v1340 = vlaneseq
        %v1341 = vshrl.u32 %v1340, 7
        %v1342 = vsub.s32 %v1339, %v1341
        %v1343 = vrot.slane %v1336, %v1342
        %v1345 = vunpack.c.l.s4 1966171168
        %v1346 = vunpack.c.0.s8 %v1345
        %v1347 = vlaneseq
        %v1348 = vshrl.u32 %v1347, 7
        %v1349 = vsub.s32 %v1346, %v1348
        %v1350 = vrot.slane %v1343, %v1349
        %s1352 = scalar_lea.vmem [#allocation2], 6
        %1353 = vst.msk [vmem:[%s1352] ss:$8 sm:$0x3] %vm1185, %v1350
        %1354 = vst.msk [vmem:[%s1352] ss:$8 sm:$0x0] %vm1185, %v1350
        %v1357 = vcombine.low %v1153, %v1154
        %v1359 = vunpack.c.l.s4 1966171168
        %v1360 = vunpack.c.0.s8 %v1359
        %v1361 = vlaneseq
        %v1362 = vshrl.u32 %v1361, 7
        %v1363 = vsub.s32 %v1360, %v1362
        %v1364 = vrot.slane %v1357, %v1363
        %v1366 = vunpack.c.l.s4 1966171168
        %v1367 = vunpack.c.0.s8 %v1366
        %v1368 = vlaneseq
        %v1369 = vshrl.u32 %v1368, 7
        %v1370 = vsub.s32 %v1367, %v1369
        %v1371 = vrot.slane %v1364, %v1370
        %s1373 = scalar_lea.vmem [#allocation2], 7
        %1374 = vst.msk [vmem:[%s1373] ss:$8 sm:$0x3] %vm1185, %v1371
        %1375 = vst.msk [vmem:[%s1373] ss:$8 sm:$0x0] %vm1185, %v1371
        %1376 = vrot.lane.b32.xlu0 %v1125, 112
        %v1377 = vpop.permute.xlu0 %1376
        %1378 = vrot.lane.b32.xlu0 %v1134, 112
        %v1379 = vpop.permute.xlu0 %1378
        %v1380 = vsel %vm852, %v1377, %v1379
        %v1381 = vsel %vm852, %v1379, %v1377
        %v1382 = vsel %vm342, %v1380, 0.0
        %v1383 = vsel %vm343, %v1381, 0.0
        %v1386 = vcombine.low %v1382, %v1383
        %v1388 = vunpack.c.l.s4 1966171168
        %v1389 = vunpack.c.0.s8 %v1388
        %v1390 = vlaneseq
        %v1391 = vshrl.u32 %v1390, 7
        %v1392 = vsub.s32 %v1389, %v1391
        %v1393 = vrot.slane %v1386, %v1392
        %v1395 = vunpack.c.l.s4 1966171168
        %v1396 = vunpack.c.0.s8 %v1395
        %v1397 = vlaneseq
        %v1398 = vshrl.u32 %v1397, 7
        %v1399 = vsub.s32 %v1396, %v1398
        %v1400 = vrot.slane %v1393, %v1399
        %s1402 = scalar_lea.vmem [#allocation2], 16
        %1403 = vst.msk [vmem:[%s1402] ss:$8 sm:$0x3] %vm1185, %v1400
        %1404 = vst.msk [vmem:[%s1402] ss:$8 sm:$0x0] %vm1185, %v1400
        %1405 = vrot.lane.b32.xlu0 %v1153, 112
        %v1406 = vpop.permute.xlu0 %1405
        %1407 = vrot.lane.b32.xlu0 %v1154, 112
        %v1408 = vpop.permute.xlu0 %1407
        %v1409 = vsel %vm852, %v1406, %v1408
        %v1410 = vsel %vm852, %v1408, %v1406
        %v1411 = vsel %vm342, %v1409, 0.0
        %v1412 = vsel %vm343, %v1410, 0.0
        %v1415 = vcombine.low %v1411, %v1412
        %v1417 = vunpack.c.l.s4 1966171168
        %v1418 = vunpack.c.0.s8 %v1417
        %v1419 = vlaneseq
        %v1420 = vshrl.u32 %v1419, 7
        %v1421 = vsub.s32 %v1418, %v1420
        %v1422 = vrot.slane %v1415, %v1421
        %v1424 = vunpack.c.l.s4 1966171168
        %v1425 = vunpack.c.0.s8 %v1424
        %v1426 = vlaneseq
        %v1427 = vshrl.u32 %v1426, 7
        %v1428 = vsub.s32 %v1425, %v1427
        %v1429 = vrot.slane %v1422, %v1428
        %s1431 = scalar_lea.vmem [#allocation2], 17
        %1432 = vst.msk [vmem:[%s1431] ss:$8 sm:$0x3] %vm1185, %v1429
        %1433 = vst.msk [vmem:[%s1431] ss:$8 sm:$0x0] %vm1185, %v1429
        %1434 = vrot.lane.b32.xlu0 %v1125, 96
        %v1435 = vpop.permute.xlu0 %1434
        %1436 = vrot.lane.b32.xlu0 %v1134, 96
        %v1437 = vpop.permute.xlu0 %1436
        %vm1438 = vcmp.lt.s32.totalorder %v328, 96
        %v1439 = vsel %vm1438, %v1435, %v1437
        %v1440 = vsel %vm1438, %v1437, %v1435
        %v1441 = vsel %vm352, %v1439, 0.0
        %v1442 = vsel %vm353, %v1440, 0.0
        %v1445 = vcombine.low %v1441, %v1442
        %v1447 = vunpack.c.l.s4 1966171168
        %v1448 = vunpack.c.0.s8 %v1447
        %v1449 = vlaneseq
        %v1450 = vshrl.u32 %v1449, 7
        %v1451 = vsub.s32 %v1448, %v1450
        %v1452 = vrot.slane %v1445, %v1451
        %v1454 = vunpack.c.l.s4 1966171168
        %v1455 = vunpack.c.0.s8 %v1454
        %v1456 = vlaneseq
        %v1457 = vshrl.u32 %v1456, 7
        %v1458 = vsub.s32 %v1455, %v1457
        %v1459 = vrot.slane %v1452, %v1458
        %s1461 = scalar_lea.vmem [#allocation2], 18
        %1462 = vst.msk [vmem:[%s1461] ss:$8 sm:$0x3] %vm1185, %v1459
        %1463 = vst.msk [vmem:[%s1461] ss:$8 sm:$0x0] %vm1185, %v1459
        %1464 = vrot.lane.b32.xlu0 %v1153, 96
        %v1465 = vpop.permute.xlu0 %1464
        %1466 = vrot.lane.b32.xlu0 %v1154, 96
        %v1467 = vpop.permute.xlu0 %1466
        %v1468 = vsel %vm1438, %v1465, %v1467
        %v1469 = vsel %vm1438, %v1467, %v1465
        %v1470 = vsel %vm352, %v1468, 0.0
        %v1471 = vsel %vm353, %v1469, 0.0
        %v1474 = vcombine.low %v1470, %v1471
        %v1476 = vunpack.c.l.s4 1966171168
        %v1477 = vunpack.c.0.s8 %v1476
        %v1478 = vlaneseq
        %v1479 = vshrl.u32 %v1478, 7
        %v1480 = vsub.s32 %v1477, %v1479
        %v1481 = vrot.slane %v1474, %v1480
        %v1483 = vunpack.c.l.s4 1966171168
        %v1484 = vunpack.c.0.s8 %v1483
        %v1485 = vlaneseq
        %v1486 = vshrl.u32 %v1485, 7
        %v1487 = vsub.s32 %v1484, %v1486
        %v1488 = vrot.slane %v1481, %v1487
        %s1490 = scalar_lea.vmem [#allocation2], 19
        %1491 = vst.msk [vmem:[%s1490] ss:$8 sm:$0x3] %vm1185, %v1488
        %1492 = vst.msk [vmem:[%s1490] ss:$8 sm:$0x0] %vm1185, %v1488
        %1493 = vrot.lane.b32.xlu0 %v1125, 80
        %v1494 = vpop.permute.xlu0 %1493
        %1495 = vrot.lane.b32.xlu0 %v1134, 80
        %v1496 = vpop.permute.xlu0 %1495
        %vm1497 = vcmp.lt.s32.totalorder %v328, 80
        %v1498 = vsel %vm1497, %v1494, %v1496
        %v1499 = vsel %vm1497, %v1496, %v1494
        %v1500 = vsel %vm354, %v1498, 0.0
        %v1501 = vsel %vm355, %v1499, 0.0
        %v1504 = vcombine.low %v1500, %v1501
        %v1506 = vunpack.c.l.s4 1966171168
        %v1507 = vunpack.c.0.s8 %v1506
        %v1508 = vlaneseq
        %v1509 = vshrl.u32 %v1508, 7
        %v1510 = vsub.s32 %v1507, %v1509
        %v1511 = vrot.slane %v1504, %v1510
        %v1513 = vunpack.c.l.s4 1966171168
        %v1514 = vunpack.c.0.s8 %v1513
        %v1515 = vlaneseq
        %v1516 = vshrl.u32 %v1515, 7
        %v1517 = vsub.s32 %v1514, %v1516
        %v1518 = vrot.slane %v1511, %v1517
        %s1520 = scalar_lea.vmem [#allocation2], 20
        %1521 = vst.msk [vmem:[%s1520] ss:$8 sm:$0x3] %vm1185, %v1518
        %1522 = vst.msk [vmem:[%s1520] ss:$8 sm:$0x0] %vm1185, %v1518
        %1523 = vrot.lane.b32.xlu0 %v1153, 80
        %v1524 = vpop.permute.xlu0 %1523
        %1525 = vrot.lane.b32.xlu0 %v1154, 80
        %v1526 = vpop.permute.xlu0 %1525
        %v1527 = vsel %vm1497, %v1524, %v1526
        %v1528 = vsel %vm1497, %v1526, %v1524
        %v1529 = vsel %vm354, %v1527, 0.0
        %v1530 = vsel %vm355, %v1528, 0.0
        %v1533 = vcombine.low %v1529, %v1530
        %v1535 = vunpack.c.l.s4 1966171168
        %v1536 = vunpack.c.0.s8 %v1535
        %v1537 = vlaneseq
        %v1538 = vshrl.u32 %v1537, 7
        %v1539 = vsub.s32 %v1536, %v1538
        %v1540 = vrot.slane %v1533, %v1539
        %v1542 = vunpack.c.l.s4 1966171168
        %v1543 = vunpack.c.0.s8 %v1542
        %v1544 = vlaneseq
        %v1545 = vshrl.u32 %v1544, 7
        %v1546 = vsub.s32 %v1543, %v1545
        %v1547 = vrot.slane %v1540, %v1546
        %s1549 = scalar_lea.vmem [#allocation2], 21
        %1550 = vst.msk [vmem:[%s1549] ss:$8 sm:$0x3] %vm1185, %v1547
        %1551 = vst.msk [vmem:[%s1549] ss:$8 sm:$0x0] %vm1185, %v1547
        %v1552 = vld [vmem:[#allocation2] sm:$0xff]
        %v1553 = vld [vmem:[#allocation2 + $0x8] sm:$0xff]
        %v1554 = vld [vmem:[#allocation2 + $0x10] sm:$0x3f]
        %v1555 = vld [vmem:[#allocation2 + $0x18] sm:$0x3f]
        %1557 = vset.pattern.permute.xlu0 3
        %1558 = vperm.xlu0 %1557, %v384
        %v1559 = vpop.permute.xlu0 %1558
        %1562 = vset.pattern.permute.xlu0 3
        %1563 = vperm.xlu0 %1562, %v385
        %v1564 = vpop.permute.xlu0 %1563
        %v1566 = vmul.f32 %v1552, %v1559
        %v1567 = vmul.f32 %v1553, %v1559
        %v1568 = vmul.f32 %v1554, %v1564
        %v1569 = vmul.f32 %v1555, %v1564
        %1570 = vrot.lane.b32.xlu0 %v1552, 3
        %v1571 = vpop.permute.xlu0 %1570
        %1572 = vrot.lane.b32.xlu0 %v1554, 3
        %v1573 = vpop.permute.xlu0 %1572
        %1574 = vrot.lane.b32.xlu0 %v1553, 3
        %v1575 = vpop.permute.xlu0 %1574
        %1576 = vrot.lane.b32.xlu0 %v1555, 3
        %v1577 = vpop.permute.xlu0 %1576
        %vm1578 = vcmp.lt.s32.totalorder %v328, 3
        %v1579 = vsel %vm1578, %v1571, %v1575
        %v1580 = vsel %vm1578, %v1573, %v1577
        %v1581 = vsel %vm1578, %v1575, %v1571
        %v1582 = vsel %vm1578, %v1577, %v1573
        %v1583 = vsel %vm356, 1, 0
        %v1584 = vsel %vm357, 1, 0
        %vm1585 = vcmp.eq.s32.totalorder %v1583, 1
        %vm1586 = vcmp.eq.s32.totalorder %v1584, 1
        %v1587 = vsel %vm1585, %v1581, 0.0
        %v1588 = vsel %vm1586, %v1579, 0.0
        %v1589 = vsel %vm1585, %v1582, 0.0
        %v1590 = vsel %vm1586, %v1580, 0.0
        %1591 = vset.pattern.permute.xlu0 0
        %1592 = vperm.xlu0 %1591, %v384
        %v1593 = vpop.permute.xlu0 %1592
        %1595 = vset.pattern.permute.xlu0 0
        %1596 = vperm.xlu0 %1595, %v385
        %v1597 = vpop.permute.xlu0 %1596
        %v1599 = vmul.f32 %v1587, %v1593
        %v1600 = vmul.f32 %v1588, %v1593
        %v1601 = vmul.f32 %v1589, %v1597
        %v1602 = vmul.f32 %v1590, %v1597
        %v1603 = vadd.f32 %v1566, %v1599
        %v1604 = vadd.f32 %v1567, %v1600
        %v1605 = vadd.f32 %v1568, %v1601
        %v1606 = vadd.f32 %v1569, %v1602
        %1607 = vrot.lane.b32.xlu0 %v1552, 2
        %v1608 = vpop.permute.xlu0 %1607
        %1609 = vrot.lane.b32.xlu0 %v1554, 2
        %v1610 = vpop.permute.xlu0 %1609
        %1611 = vrot.lane.b32.xlu0 %v1553, 2
        %v1612 = vpop.permute.xlu0 %1611
        %1613 = vrot.lane.b32.xlu0 %v1555, 2
        %v1614 = vpop.permute.xlu0 %1613
        %vm1615 = vcmp.lt.s32.totalorder %v328, 2
        %v1616 = vsel %vm1615, %v1608, %v1612
        %v1617 = vsel %vm1615, %v1610, %v1614
        %v1618 = vsel %vm1615, %v1612, %v1608
        %v1619 = vsel %vm1615, %v1614, %v1610
        %v1620 = vsel %vm358, 1, 0
        %v1621 = vsel %vm359, 1, 0
        %vm1622 = vcmp.eq.s32.totalorder %v1620, 1
        %vm1623 = vcmp.eq.s32.totalorder %v1621, 1
        %v1624 = vsel %vm1622, %v1618, 0.0
        %v1625 = vsel %vm1623, %v1616, 0.0
        %v1626 = vsel %vm1622, %v1619, 0.0
        %v1627 = vsel %vm1623, %v1617, 0.0
        %1628 = vset.pattern.permute.xlu0 1
        %1629 = vperm.xlu0 %1628, %v384
        %v1630 = vpop.permute.xlu0 %1629
        %1632 = vset.pattern.permute.xlu0 1
        %1633 = vperm.xlu0 %1632, %v385
        %v1634 = vpop.permute.xlu0 %1633
        %v1636 = vmul.f32 %v1624, %v1630
        %v1637 = vmul.f32 %v1625, %v1630
        %v1638 = vmul.f32 %v1626, %v1634
        %v1639 = vmul.f32 %v1627, %v1634
        %v1640 = vadd.f32 %v1603, %v1636
        %v1641 = vadd.f32 %v1604, %v1637
        %v1642 = vadd.f32 %v1605, %v1638
        %v1643 = vadd.f32 %v1606, %v1639
        %1644 = vrot.lane.b32.xlu0 %v1552, 1
        %v1645 = vpop.permute.xlu0 %1644
        %1646 = vrot.lane.b32.xlu0 %v1554, 1
        %v1647 = vpop.permute.xlu0 %1646
        %1648 = vrot.lane.b32.xlu0 %v1553, 1
        %v1649 = vpop.permute.xlu0 %1648
        %1650 = vrot.lane.b32.xlu0 %v1555, 1
        %v1651 = vpop.permute.xlu0 %1650
        %v1652 = vsel %vm645, %v1645, %v1649
        %v1653 = vsel %vm645, %v1647, %v1651
        %v1654 = vsel %vm645, %v1649, %v1645
        %v1655 = vsel %vm645, %v1651, %v1647
        %v1656 = vsel %vm656, %v1654, 0.0
        %v1657 = vsel %vm657, %v1652, 0.0
        %v1658 = vsel %vm656, %v1655, 0.0
        %v1659 = vsel %vm657, %v1653, 0.0
        %1660 = vset.pattern.permute.xlu0 2
        %1661 = vperm.xlu0 %1660, %v384
        %v1662 = vpop.permute.xlu0 %1661
        %1664 = vset.pattern.permute.xlu0 2
        %1665 = vperm.xlu0 %1664, %v385
        %v1666 = vpop.permute.xlu0 %1665
        %v1668 = vmul.f32 %v1656, %v1662
        %v1669 = vmul.f32 %v1657, %v1662
        %v1670 = vmul.f32 %v1658, %v1666
        %v1671 = vmul.f32 %v1659, %v1666
        %v1672 = vadd.f32 %v1640, %v1668
        %v1673 = vadd.f32 %v1641, %v1669
        %v1674 = vadd.f32 %v1642, %v1670
        %v1675 = vadd.f32 %v1643, %v1671
        %1676 = vrot.lane.b32.xlu0 %v1552, 127
        %v1677 = vpop.permute.xlu0 %1676
        %1678 = vrot.lane.b32.xlu0 %v1554, 127
        %v1679 = vpop.permute.xlu0 %1678
        %1680 = vrot.lane.b32.xlu0 %v1553, 127
        %v1681 = vpop.permute.xlu0 %1680
        %1682 = vrot.lane.b32.xlu0 %v1555, 127
        %v1683 = vpop.permute.xlu0 %1682
        %v1684 = vsel %vm714, %v1677, %v1681
        %v1685 = vsel %vm714, %v1679, %v1683
        %v1686 = vsel %vm714, %v1681, %v1677
        %v1687 = vsel %vm714, %v1683, %v1679
        %v1688 = vsel %vm725, %v1684, 0.0
        %v1689 = vsel %vm726, %v1686, 0.0
        %v1690 = vsel %vm725, %v1685, 0.0
        %v1691 = vsel %vm726, %v1687, 0.0
        %1692 = vset.pattern.permute.xlu0 4
        %1693 = vperm.xlu0 %1692, %v384
        %v1694 = vpop.permute.xlu0 %1693
        %1696 = vset.pattern.permute.xlu0 4
        %1697 = vperm.xlu0 %1696, %v385
        %v1698 = vpop.permute.xlu0 %1697
        %v1700 = vmul.f32 %v1688, %v1694
        %v1701 = vmul.f32 %v1689, %v1694
        %v1702 = vmul.f32 %v1690, %v1698
        %v1703 = vmul.f32 %v1691, %v1698
        %v1704 = vadd.f32 %v1672, %v1700
        %v1705 = vadd.f32 %v1673, %v1701
        %v1706 = vadd.f32 %v1674, %v1702
        %v1707 = vadd.f32 %v1675, %v1703
        %1708 = vrot.lane.b32.xlu0 %v1552, 126
        %v1709 = vpop.permute.xlu0 %1708
        %1710 = vrot.lane.b32.xlu0 %v1554, 126
        %v1711 = vpop.permute.xlu0 %1710
        %1712 = vrot.lane.b32.xlu0 %v1553, 126
        %v1713 = vpop.permute.xlu0 %1712
        %1714 = vrot.lane.b32.xlu0 %v1555, 126
        %v1715 = vpop.permute.xlu0 %1714
        %vm1716 = vcmp.lt.s32.totalorder %v328, 126
        %v1717 = vsel %vm1716, %v1709, %v1713
        %v1718 = vsel %vm1716, %v1711, %v1715
        %v1719 = vsel %vm1716, %v1713, %v1709
        %v1720 = vsel %vm1716, %v1715, %v1711
        %v1721 = vsel %vm360, 1, 0
        %v1722 = vsel %vm361, 1, 0
        %vm1723 = vcmp.eq.s32.totalorder %v1721, 1
        %vm1724 = vcmp.eq.s32.totalorder %v1722, 1
        %v1725 = vsel %vm1723, %v1717, 0.0
        %v1726 = vsel %vm1724, %v1719, 0.0
        %v1727 = vsel %vm1723, %v1718, 0.0
        %v1728 = vsel %vm1724, %v1720, 0.0
        %1729 = vset.pattern.permute.xlu0 5
        %1730 = vperm.xlu0 %1729, %v384
        %v1731 = vpop.permute.xlu0 %1730
        %1733 = vset.pattern.permute.xlu0 5
        %1734 = vperm.xlu0 %1733, %v385
        %v1735 = vpop.permute.xlu0 %1734
        %v1737 = vmul.f32 %v1725, %v1731
        %v1738 = vmul.f32 %v1726, %v1731
        %v1739 = vmul.f32 %v1727, %v1735
        %v1740 = vmul.f32 %v1728, %v1735
        %v1741 = vadd.f32 %v1704, %v1737
        %v1742 = vadd.f32 %v1705, %v1738
        %v1743 = vadd.f32 %v1706, %v1739
        %v1744 = vadd.f32 %v1707, %v1740
        %1745 = vrot.lane.b32.xlu0 %v1552, 125
        %v1746 = vpop.permute.xlu0 %1745
        %1747 = vrot.lane.b32.xlu0 %v1554, 125
        %v1748 = vpop.permute.xlu0 %1747
        %1749 = vrot.lane.b32.xlu0 %v1553, 125
        %v1750 = vpop.permute.xlu0 %1749
        %1751 = vrot.lane.b32.xlu0 %v1555, 125
        %v1752 = vpop.permute.xlu0 %1751
        %vm1753 = vcmp.lt.s32.totalorder %v328, 125
        %v1754 = vsel %vm1753, %v1746, %v1750
        %v1755 = vsel %vm1753, %v1748, %v1752
        %v1756 = vsel %vm1753, %v1750, %v1746
        %v1757 = vsel %vm1753, %v1752, %v1748
        %v1758 = vsel %vm362, 1, 0
        %v1759 = vsel %vm363, 1, 0
        %vm1760 = vcmp.eq.s32.totalorder %v1758, 1
        %vm1761 = vcmp.eq.s32.totalorder %v1759, 1
        %v1762 = vsel %vm1760, %v1754, 0.0
        %v1763 = vsel %vm1761, %v1756, 0.0
        %v1764 = vsel %vm1760, %v1755, 0.0
        %v1765 = vsel %vm1761, %v1757, 0.0
        %1766 = vset.pattern.permute.xlu0 6
        %1767 = vperm.xlu0 %1766, %v384
        %v1768 = vpop.permute.xlu0 %1767
        %1770 = vset.pattern.permute.xlu0 6
        %1771 = vperm.xlu0 %1770, %v385
        %v1772 = vpop.permute.xlu0 %1771
        %v1774 = vmul.f32 %v1762, %v1768
        %v1775 = vmul.f32 %v1763, %v1768
        %v1776 = vmul.f32 %v1764, %v1772
        %v1777 = vmul.f32 %v1765, %v1772
        %v1778 = vadd.f32 %v1741, %v1774
        %v1779 = vadd.f32 %v1742, %v1775
        %v1780 = vadd.f32 %v1743, %v1776
        %v1781 = vadd.f32 %v1744, %v1777
        %vm1782 = vcmask 1045504
        %v1783 = vsel %vm1782, %v1780, 0.0
        %v1784 = vadd.f32 %v1778, %v1783
        %v1785 = vrot.slane %v1784, 4
        %v1786 = vadd.f32 %v1784, %v1785
        %v1787 = vrot.slane %v1786, 2
        %v1788 = vadd.f32 %v1786, %v1787
        %v1789 = vrot.slane %v1788, 1
        %v1790 = vadd.f32 %v1788, %v1789
        %v1791 = vsel %vm1782, %v1781, 0.0
        %v1792 = vadd.f32 %v1779, %v1791
        %v1793 = vrot.slane %v1792, 4
        %v1794 = vadd.f32 %v1792, %v1793
        %v1795 = vrot.slane %v1794, 2
        %v1796 = vadd.f32 %v1794, %v1795
        %v1797 = vrot.slane %v1796, 1
        %v1798 = vadd.f32 %v1796, %v1797
        %v1799 = vxor.u32 %v1790, 2147483648
        %v1800 = vxor.u32 %v1798, 2147483648
        %v1801 = vmul.f32 %v1799, 1.442695
        %v1802 = vpow.pop %v1801
        %v1803 = vmul.f32 %v1800, 1.442695
        %v1804 = vpow.pop %v1803
        %v1805 = vadd.f32 %v1802, 1.0
        %v1806 = vadd.f32 %v1804, 1.0
        %v1807 = vrcp.pop %v1805
        %v1808 = vmul.f32 1.0, %v1807
        %v1809 = vrcp.pop %v1806
        %v1810 = vmul.f32 1.0, %v1809
        %v1811 = vmul.f32 %v1109, %v1808
        %v1812 = vmul.f32 %v1110, %v1810
        %v1813 = vmul.f32 %v1111, %v1808
        %v1814 = vmul.f32 %v1112, %v1810
        %v1815 = vmul.f32 %v1113, %v1808
        %v1816 = vmul.f32 %v1114, %v1810
        %v1817 = vmul.f32 %v1115, %v1808
        %v1818 = vmul.f32 %v1116, %v1810
        %1820 = vset.pattern.permute.xlu0 0
        %1821 = vperm.xlu0 %1820, %v374
        %v1822 = vpop.permute.xlu0 %1821
        %1825 = vset.pattern.permute.xlu0 0
        %1826 = vperm.xlu0 %1825, %v375
        %v1827 = vpop.permute.xlu0 %1826
        %vm1829 = vcmask 261120
        %v1831 = vsel %vm1829, %v372, 0
        %v1834 = vsel %vm1829, %v373, 0
        %1836 = vmatprep.subr.mxu0 %v1812
        %1837 = vmatpush1.msra.mxu0 %v1811
        %1838 = vmatprep.subr.mxu0 %v1814
        %1839 = vmatpush1.msra.mxu0 %v1813
        %1840 = vmatprep.subr.mxu0 %v1816
        %1841 = vmatpush1.msra.mxu0 %v1815
        %1842 = vmatprep.subr.mxu0 %v1818
        %1843 = vmatpush1.msra.mxu0 %v1817
        %1844 = vmatprep.subr.mxu0 0.0
        %1845 = vmatpush1.msra.mxu0 0.0
        %1846 = vmatprep.subr.mxu0 0.0
        %1847 = vmatpush1.msra.mxu0 0.0
        %1848 = vmatprep.subr.mxu0 0.0
        %1849 = vmatpush1.msra.mxu0 0.0
        %1850 = vmatprep.subr.mxu0 0.0
        %1851 = vmatpush1.msra.mxu0 0.0
        %1852 = vmatprep.subr.mxu0 0.0
        %1853 = vmatpush1.msra.mxu0 0.0
        %1854 = vmatprep.subr.mxu0 0.0
        %1855 = vmatpush1.msra.mxu0 0.0
        %1856 = vmatprep.subr.mxu0 0.0
        %1857 = vmatpush1.msra.mxu0 0.0
        %1858 = vmatprep.subr.mxu0 0.0
        %1859 = vmatpush1.msra.mxu0 0.0
        %1860 = vmatprep.subr.mxu0 0.0
        %1861 = vmatpush1.msra.mxu0 0.0
        %1862 = vmatprep.subr.mxu0 0.0
        %1863 = vmatpush1.msra.mxu0 0.0
        %1864 = vmatprep.subr.mxu0 0.0
        %1865 = vmatpush1.msra.mxu0 0.0
        %1866 = vmatprep.subr.mxu0 0.0
        %1867 = vmatpush1.msra.mxu0 0.0
        %1868 = vmatprep.subr.mxu0 0.0
        %1869 = vmatpush1.msra.mxu0 0.0
        %1870 = vmatprep.subr.mxu0 0.0
        %1871 = vmatpush1.msra.mxu0 0.0
        %1872 = vmatprep.subr.mxu0 0.0
        %1873 = vmatpush1.msra.mxu0 0.0
        %1874 = vmatprep.subr.mxu0 0.0
        %1875 = vmatpush1.msra.mxu0 0.0
        %1876 = vmatprep.subr.mxu0 0.0
        %1877 = vmatpush1.msra.mxu0 0.0
        %1878 = vmatprep.subr.mxu0 0.0
        %1879 = vmatpush1.msra.mxu0 0.0
        %1880 = vmatprep.subr.mxu0 0.0
        %1881 = vmatpush1.msra.mxu0 0.0
        %1882 = vmatprep.subr.mxu0 0.0
        %1883 = vmatpush1.msra.mxu0 0.0
        %1884 = vmatprep.subr.mxu0 0.0
        %1885 = vmatpush1.msra.mxu0 0.0
        %1886 = vmatprep.subr.mxu0 0.0
        %1887 = vmatpush1.msra.mxu0 0.0
        %1888 = vmatprep.subr.mxu0 0.0
        %1889 = vmatpush1.msra.mxu0 0.0
        %1890 = vmatprep.subr.mxu0 0.0
        %1891 = vmatpush1.msra.mxu0 0.0
        %1892 = vmatprep.subr.mxu0 0.0
        %1893 = vmatpush1.msra.mxu0 0.0
        %1894 = vmatprep.subr.mxu0 0.0
        %1895 = vmatpush1.msra.mxu0 0.0
        %1896 = vmatprep.subr.mxu0 0.0
        %1897 = vmatpush1.msra.mxu0 0.0
        %1898 = vmatprep.subr.mxu0 0.0
        %1899 = vmatpush1.msra.mxu0 0.0
        %1900 = vmatprep.mubr.f32.mxu0 0.0
        %1901 = vmatmul.mubr.f32.gmra.mrb[0].mxu0 %v1831
        %v1902 = vpop.f32.mrb[0].mxu0
        %v1903 = vadd.f32 %v1822, %v1902
        %v1904 = vpop.f32.mrb[0].mxu0
        %v1905 = vadd.f32 %v1822, %v1904
        %1906 = vmatprep.mubr.f32.mxu0 0.0
        %1907 = vmatmul.mubr.f32.gmra.mrb[0].mxu0 %v1834
        %v1908 = vpop.f32.mrb[0].mxu0
        %v1909 = vadd.f32 %v1827, %v1908
        %v1910 = vpop.f32.mrb[0].mxu0
        %v1911 = vadd.f32 %v1827, %v1910
        %1912 = vdwg.mxu0
        %1913 = vst [vmem:[%s324] sm:$0xff] %v1903
        %1914 = vst [vmem:[%s324 + $0x8] sm:$0xff] %v1905
        %1915 = vst [vmem:[%s324 + $0x10] sm:$0xff] %v1909
        %1916 = vst [vmem:[%s324 + $0x18] sm:$0xff] %v1911
        %s1917 = scalar_lea.vmem %s292, 64 [#allocation3]
        %v1918 = vld [vmem:[%s1917] sm:$0xff]
        %v1919 = vld [vmem:[%s1917 + $0x8] sm:$0xff]
        %v1920 = vld [vmem:[%s1917 + $0x10] sm:$0xff]
        %v1921 = vld [vmem:[%s1917 + $0x18] sm:$0xff]
        %v1922 = vld [vmem:[%s1917 + $0x20] sm:$0xff]
        %v1923 = vld [vmem:[%s1917 + $0x28] sm:$0xff]
        %v1924 = vld [vmem:[%s1917 + $0x30] sm:$0xff]
        %v1925 = vld [vmem:[%s1917 + $0x38] sm:$0xff]
        %v1926 = vmul.f32 %v1918, %v397
        %v1927 = vmul.f32 %v1919, %v397
        %v1928 = vmul.f32 %v1920, %v402
        %v1929 = vmul.f32 %v1921, %v402
        %v1930 = vmul.f32 %v1922, %v407
        %v1931 = vmul.f32 %v1923, %v407
        %v1932 = vmul.f32 %v1924, %v412
        %v1933 = vmul.f32 %v1925, %v412
        %1934 = vrot.lane.b32.xlu0 %v1918, 17
        %v1935 = vpop.permute.xlu0 %1934
        %1936 = vrot.lane.b32.xlu0 %v1920, 17
        %v1937 = vpop.permute.xlu0 %1936
        %1938 = vrot.lane.b32.xlu0 %v1922, 17
        %v1939 = vpop.permute.xlu0 %1938
        %1940 = vrot.lane.b32.xlu0 %v1924, 17
        %v1941 = vpop.permute.xlu0 %1940
        %1942 = vrot.lane.b32.xlu0 %v1919, 17
        %v1943 = vpop.permute.xlu0 %1942
        %1944 = vrot.lane.b32.xlu0 %v1921, 17
        %v1945 = vpop.permute.xlu0 %1944
        %1946 = vrot.lane.b32.xlu0 %v1923, 17
        %v1947 = vpop.permute.xlu0 %1946
        %1948 = vrot.lane.b32.xlu0 %v1925, 17
        %v1949 = vpop.permute.xlu0 %1948
        %v1950 = vsel %vm438, %v1935, %v1943
        %v1951 = vsel %vm438, %v1937, %v1945
        %v1952 = vsel %vm438, %v1939, %v1947
        %v1953 = vsel %vm438, %v1941, %v1949
        %v1954 = vsel %vm438, %v1943, %v1935
        %v1955 = vsel %vm438, %v1945, %v1937
        %v1956 = vsel %vm438, %v1947, %v1939
        %v1957 = vsel %vm438, %v1949, %v1941
        %v1958 = vsel %vm449, %v1954, 0.0
        %v1959 = vsel %vm450, %v1950, 0.0
        %v1960 = vsel %vm449, %v1955, 0.0
        %v1961 = vsel %vm450, %v1951, 0.0
        %v1962 = vsel %vm449, %v1956, 0.0
        %v1963 = vsel %vm450, %v1952, 0.0
        %v1964 = vsel %vm449, %v1957, 0.0
        %v1965 = vsel %vm450, %v1953, 0.0
        %v1966 = vmul.f32 %v1958, %v461
        %v1967 = vmul.f32 %v1959, %v461
        %v1968 = vmul.f32 %v1960, %v465
        %v1969 = vmul.f32 %v1961, %v465
        %v1970 = vmul.f32 %v1962, %v469
        %v1971 = vmul.f32 %v1963, %v469
        %v1972 = vmul.f32 %v1964, %v473
        %v1973 = vmul.f32 %v1965, %v473
        %v1974 = vadd.f32 %v1926, %v1966
        %v1975 = vadd.f32 %v1927, %v1967
        %v1976 = vadd.f32 %v1928, %v1968
        %v1977 = vadd.f32 %v1929, %v1969
        %v1978 = vadd.f32 %v1930, %v1970
        %v1979 = vadd.f32 %v1931, %v1971
        %v1980 = vadd.f32 %v1932, %v1972
        %v1981 = vadd.f32 %v1933, %v1973
        %1982 = vrot.lane.b32.xlu0 %v1918, 16
        %v1983 = vpop.permute.xlu0 %1982
        %1984 = vrot.lane.b32.xlu0 %v1920, 16
        %v1985 = vpop.permute.xlu0 %1984
        %1986 = vrot.lane.b32.xlu0 %v1922, 16
        %v1987 = vpop.permute.xlu0 %1986
        %1988 = vrot.lane.b32.xlu0 %v1924, 16
        %v1989 = vpop.permute.xlu0 %1988
        %1990 = vrot.lane.b32.xlu0 %v1919, 16
        %v1991 = vpop.permute.xlu0 %1990
        %1992 = vrot.lane.b32.xlu0 %v1921, 16
        %v1993 = vpop.permute.xlu0 %1992
        %1994 = vrot.lane.b32.xlu0 %v1923, 16
        %v1995 = vpop.permute.xlu0 %1994
        %1996 = vrot.lane.b32.xlu0 %v1925, 16
        %v1997 = vpop.permute.xlu0 %1996
        %v1998 = vsel %vm507, %v1983, %v1991
        %v1999 = vsel %vm507, %v1985, %v1993
        %v2000 = vsel %vm507, %v1987, %v1995
        %v2001 = vsel %vm507, %v1989, %v1997
        %v2002 = vsel %vm507, %v1991, %v1983
        %v2003 = vsel %vm507, %v1993, %v1985
        %v2004 = vsel %vm507, %v1995, %v1987
        %v2005 = vsel %vm507, %v1997, %v1989
        %v2006 = vsel %vm518, %v2002, 0.0
        %v2007 = vsel %vm519, %v1998, 0.0
        %v2008 = vsel %vm518, %v2003, 0.0
        %v2009 = vsel %vm519, %v1999, 0.0
        %v2010 = vsel %vm518, %v2004, 0.0
        %v2011 = vsel %vm519, %v2000, 0.0
        %v2012 = vsel %vm518, %v2005, 0.0
        %v2013 = vsel %vm519, %v2001, 0.0
        %v2014 = vmul.f32 %v2006, %v530
        %v2015 = vmul.f32 %v2007, %v530
        %v2016 = vmul.f32 %v2008, %v534
        %v2017 = vmul.f32 %v2009, %v534
        %v2018 = vmul.f32 %v2010, %v538
        %v2019 = vmul.f32 %v2011, %v538
        %v2020 = vmul.f32 %v2012, %v542
        %v2021 = vmul.f32 %v2013, %v542
        %v2022 = vadd.f32 %v1974, %v2014
        %v2023 = vadd.f32 %v1975, %v2015
        %v2024 = vadd.f32 %v1976, %v2016
        %v2025 = vadd.f32 %v1977, %v2017
        %v2026 = vadd.f32 %v1978, %v2018
        %v2027 = vadd.f32 %v1979, %v2019
        %v2028 = vadd.f32 %v1980, %v2020
        %v2029 = vadd.f32 %v1981, %v2021
        %2030 = vrot.lane.b32.xlu0 %v1918, 15
        %v2031 = vpop.permute.xlu0 %2030
        %2032 = vrot.lane.b32.xlu0 %v1920, 15
        %v2033 = vpop.permute.xlu0 %2032
        %2034 = vrot.lane.b32.xlu0 %v1922, 15
        %v2035 = vpop.permute.xlu0 %2034
        %2036 = vrot.lane.b32.xlu0 %v1924, 15
        %v2037 = vpop.permute.xlu0 %2036
        %2038 = vrot.lane.b32.xlu0 %v1919, 15
        %v2039 = vpop.permute.xlu0 %2038
        %2040 = vrot.lane.b32.xlu0 %v1921, 15
        %v2041 = vpop.permute.xlu0 %2040
        %2042 = vrot.lane.b32.xlu0 %v1923, 15
        %v2043 = vpop.permute.xlu0 %2042
        %2044 = vrot.lane.b32.xlu0 %v1925, 15
        %v2045 = vpop.permute.xlu0 %2044
        %v2046 = vsel %vm576, %v2031, %v2039
        %v2047 = vsel %vm576, %v2033, %v2041
        %v2048 = vsel %vm576, %v2035, %v2043
        %v2049 = vsel %vm576, %v2037, %v2045
        %v2050 = vsel %vm576, %v2039, %v2031
        %v2051 = vsel %vm576, %v2041, %v2033
        %v2052 = vsel %vm576, %v2043, %v2035
        %v2053 = vsel %vm576, %v2045, %v2037
        %v2054 = vsel %vm587, %v2050, 0.0
        %v2055 = vsel %vm588, %v2046, 0.0
        %v2056 = vsel %vm587, %v2051, 0.0
        %v2057 = vsel %vm588, %v2047, 0.0
        %v2058 = vsel %vm587, %v2052, 0.0
        %v2059 = vsel %vm588, %v2048, 0.0
        %v2060 = vsel %vm587, %v2053, 0.0
        %v2061 = vsel %vm588, %v2049, 0.0
        %v2062 = vmul.f32 %v2054, %v599
        %v2063 = vmul.f32 %v2055, %v599
        %v2064 = vmul.f32 %v2056, %v603
        %v2065 = vmul.f32 %v2057, %v603
        %v2066 = vmul.f32 %v2058, %v607
        %v2067 = vmul.f32 %v2059, %v607
        %v2068 = vmul.f32 %v2060, %v611
        %v2069 = vmul.f32 %v2061, %v611
        %v2070 = vadd.f32 %v2022, %v2062
        %v2071 = vadd.f32 %v2023, %v2063
        %v2072 = vadd.f32 %v2024, %v2064
        %v2073 = vadd.f32 %v2025, %v2065
        %v2074 = vadd.f32 %v2026, %v2066
        %v2075 = vadd.f32 %v2027, %v2067
        %v2076 = vadd.f32 %v2028, %v2068
        %v2077 = vadd.f32 %v2029, %v2069
        %2078 = vrot.lane.b32.xlu0 %v1918, 1
        %v2079 = vpop.permute.xlu0 %2078
        %2080 = vrot.lane.b32.xlu0 %v1920, 1
        %v2081 = vpop.permute.xlu0 %2080
        %2082 = vrot.lane.b32.xlu0 %v1922, 1
        %v2083 = vpop.permute.xlu0 %2082
        %2084 = vrot.lane.b32.xlu0 %v1924, 1
        %v2085 = vpop.permute.xlu0 %2084
        %2086 = vrot.lane.b32.xlu0 %v1919, 1
        %v2087 = vpop.permute.xlu0 %2086
        %2088 = vrot.lane.b32.xlu0 %v1921, 1
        %v2089 = vpop.permute.xlu0 %2088
        %2090 = vrot.lane.b32.xlu0 %v1923, 1
        %v2091 = vpop.permute.xlu0 %2090
        %2092 = vrot.lane.b32.xlu0 %v1925, 1
        %v2093 = vpop.permute.xlu0 %2092
        %v2094 = vsel %vm645, %v2079, %v2087
        %v2095 = vsel %vm645, %v2081, %v2089
        %v2096 = vsel %vm645, %v2083, %v2091
        %v2097 = vsel %vm645, %v2085, %v2093
        %v2098 = vsel %vm645, %v2087, %v2079
        %v2099 = vsel %vm645, %v2089, %v2081
        %v2100 = vsel %vm645, %v2091, %v2083
        %v2101 = vsel %vm645, %v2093, %v2085
        %v2102 = vsel %vm656, %v2098, 0.0
        %v2103 = vsel %vm657, %v2094, 0.0
        %v2104 = vsel %vm656, %v2099, 0.0
        %v2105 = vsel %vm657, %v2095, 0.0
        %v2106 = vsel %vm656, %v2100, 0.0
        %v2107 = vsel %vm657, %v2096, 0.0
        %v2108 = vsel %vm656, %v2101, 0.0
        %v2109 = vsel %vm657, %v2097, 0.0
        %v2110 = vmul.f32 %v2102, %v668
        %v2111 = vmul.f32 %v2103, %v668
        %v2112 = vmul.f32 %v2104, %v672
        %v2113 = vmul.f32 %v2105, %v672
        %v2114 = vmul.f32 %v2106, %v676
        %v2115 = vmul.f32 %v2107, %v676
        %v2116 = vmul.f32 %v2108, %v680
        %v2117 = vmul.f32 %v2109, %v680
        %v2118 = vadd.f32 %v2070, %v2110
        %v2119 = vadd.f32 %v2071, %v2111
        %v2120 = vadd.f32 %v2072, %v2112
        %v2121 = vadd.f32 %v2073, %v2113
        %v2122 = vadd.f32 %v2074, %v2114
        %v2123 = vadd.f32 %v2075, %v2115
        %v2124 = vadd.f32 %v2076, %v2116
        %v2125 = vadd.f32 %v2077, %v2117
        %2126 = vrot.lane.b32.xlu0 %v1918, 127
        %v2127 = vpop.permute.xlu0 %2126
        %2128 = vrot.lane.b32.xlu0 %v1920, 127
        %v2129 = vpop.permute.xlu0 %2128
        %2130 = vrot.lane.b32.xlu0 %v1922, 127
        %v2131 = vpop.permute.xlu0 %2130
        %2132 = vrot.lane.b32.xlu0 %v1924, 127
        %v2133 = vpop.permute.xlu0 %2132
        %2134 = vrot.lane.b32.xlu0 %v1919, 127
        %v2135 = vpop.permute.xlu0 %2134
        %2136 = vrot.lane.b32.xlu0 %v1921, 127
        %v2137 = vpop.permute.xlu0 %2136
        %2138 = vrot.lane.b32.xlu0 %v1923, 127
        %v2139 = vpop.permute.xlu0 %2138
        %2140 = vrot.lane.b32.xlu0 %v1925, 127
        %v2141 = vpop.permute.xlu0 %2140
        %v2142 = vsel %vm714, %v2127, %v2135
        %v2143 = vsel %vm714, %v2129, %v2137
        %v2144 = vsel %vm714, %v2131, %v2139
        %v2145 = vsel %vm714, %v2133, %v2141
        %v2146 = vsel %vm714, %v2135, %v2127
        %v2147 = vsel %vm714, %v2137, %v2129
        %v2148 = vsel %vm714, %v2139, %v2131
        %v2149 = vsel %vm714, %v2141, %v2133
        %v2150 = vsel %vm725, %v2142, 0.0
        %v2151 = vsel %vm726, %v2146, 0.0
        %v2152 = vsel %vm725, %v2143, 0.0
        %v2153 = vsel %vm726, %v2147, 0.0
        %v2154 = vsel %vm725, %v2144, 0.0
        %v2155 = vsel %vm726, %v2148, 0.0
        %v2156 = vsel %vm725, %v2145, 0.0
        %v2157 = vsel %vm726, %v2149, 0.0
        %v2158 = vmul.f32 %v2150, %v737
        %v2159 = vmul.f32 %v2151, %v737
        %v2160 = vmul.f32 %v2152, %v741
        %v2161 = vmul.f32 %v2153, %v741
        %v2162 = vmul.f32 %v2154, %v745
        %v2163 = vmul.f32 %v2155, %v745
        %v2164 = vmul.f32 %v2156, %v749
        %v2165 = vmul.f32 %v2157, %v749
        %v2166 = vadd.f32 %v2118, %v2158
        %v2167 = vadd.f32 %v2119, %v2159
        %v2168 = vadd.f32 %v2120, %v2160
        %v2169 = vadd.f32 %v2121, %v2161
        %v2170 = vadd.f32 %v2122, %v2162
        %v2171 = vadd.f32 %v2123, %v2163
        %v2172 = vadd.f32 %v2124, %v2164
        %v2173 = vadd.f32 %v2125, %v2165
        %2174 = vrot.lane.b32.xlu0 %v1918, 113
        %v2175 = vpop.permute.xlu0 %2174
        %2176 = vrot.lane.b32.xlu0 %v1920, 113
        %v2177 = vpop.permute.xlu0 %2176
        %2178 = vrot.lane.b32.xlu0 %v1922, 113
        %v2179 = vpop.permute.xlu0 %2178
        %2180 = vrot.lane.b32.xlu0 %v1924, 113
        %v2181 = vpop.permute.xlu0 %2180
        %2182 = vrot.lane.b32.xlu0 %v1919, 113
        %v2183 = vpop.permute.xlu0 %2182
        %2184 = vrot.lane.b32.xlu0 %v1921, 113
        %v2185 = vpop.permute.xlu0 %2184
        %2186 = vrot.lane.b32.xlu0 %v1923, 113
        %v2187 = vpop.permute.xlu0 %2186
        %2188 = vrot.lane.b32.xlu0 %v1925, 113
        %v2189 = vpop.permute.xlu0 %2188
        %v2190 = vsel %vm783, %v2175, %v2183
        %v2191 = vsel %vm783, %v2177, %v2185
        %v2192 = vsel %vm783, %v2179, %v2187
        %v2193 = vsel %vm783, %v2181, %v2189
        %v2194 = vsel %vm783, %v2183, %v2175
        %v2195 = vsel %vm783, %v2185, %v2177
        %v2196 = vsel %vm783, %v2187, %v2179
        %v2197 = vsel %vm783, %v2189, %v2181
        %v2198 = vsel %vm794, %v2190, 0.0
        %v2199 = vsel %vm795, %v2194, 0.0
        %v2200 = vsel %vm794, %v2191, 0.0
        %v2201 = vsel %vm795, %v2195, 0.0
        %v2202 = vsel %vm794, %v2192, 0.0
        %v2203 = vsel %vm795, %v2196, 0.0
        %v2204 = vsel %vm794, %v2193, 0.0
        %v2205 = vsel %vm795, %v2197, 0.0
        %v2206 = vmul.f32 %v2198, %v806
        %v2207 = vmul.f32 %v2199, %v806
        %v2208 = vmul.f32 %v2200, %v810
        %v2209 = vmul.f32 %v2201, %v810
        %v2210 = vmul.f32 %v2202, %v814
        %v2211 = vmul.f32 %v2203, %v814
        %v2212 = vmul.f32 %v2204, %v818
        %v2213 = vmul.f32 %v2205, %v818
        %v2214 = vadd.f32 %v2166, %v2206
        %v2215 = vadd.f32 %v2167, %v2207
        %v2216 = vadd.f32 %v2168, %v2208
        %v2217 = vadd.f32 %v2169, %v2209
        %v2218 = vadd.f32 %v2170, %v2210
        %v2219 = vadd.f32 %v2171, %v2211
        %v2220 = vadd.f32 %v2172, %v2212
        %v2221 = vadd.f32 %v2173, %v2213
        %2222 = vrot.lane.b32.xlu0 %v1918, 112
        %v2223 = vpop.permute.xlu0 %2222
        %2224 = vrot.lane.b32.xlu0 %v1920, 112
        %v2225 = vpop.permute.xlu0 %2224
        %2226 = vrot.lane.b32.xlu0 %v1922, 112
        %v2227 = vpop.permute.xlu0 %2226
        %2228 = vrot.lane.b32.xlu0 %v1924, 112
        %v2229 = vpop.permute.xlu0 %2228
        %2230 = vrot.lane.b32.xlu0 %v1919, 112
        %v2231 = vpop.permute.xlu0 %2230
        %2232 = vrot.lane.b32.xlu0 %v1921, 112
        %v2233 = vpop.permute.xlu0 %2232
        %2234 = vrot.lane.b32.xlu0 %v1923, 112
        %v2235 = vpop.permute.xlu0 %2234
        %2236 = vrot.lane.b32.xlu0 %v1925, 112
        %v2237 = vpop.permute.xlu0 %2236
        %v2238 = vsel %vm852, %v2223, %v2231
        %v2239 = vsel %vm852, %v2225, %v2233
        %v2240 = vsel %vm852, %v2227, %v2235
        %v2241 = vsel %vm852, %v2229, %v2237
        %v2242 = vsel %vm852, %v2231, %v2223
        %v2243 = vsel %vm852, %v2233, %v2225
        %v2244 = vsel %vm852, %v2235, %v2227
        %v2245 = vsel %vm852, %v2237, %v2229
        %v2246 = vsel %vm863, %v2238, 0.0
        %v2247 = vsel %vm864, %v2242, 0.0
        %v2248 = vsel %vm863, %v2239, 0.0
        %v2249 = vsel %vm864, %v2243, 0.0
        %v2250 = vsel %vm863, %v2240, 0.0
        %v2251 = vsel %vm864, %v2244, 0.0
        %v2252 = vsel %vm863, %v2241, 0.0
        %v2253 = vsel %vm864, %v2245, 0.0
        %v2254 = vmul.f32 %v2246, %v875
        %v2255 = vmul.f32 %v2247, %v875
        %v2256 = vmul.f32 %v2248, %v879
        %v2257 = vmul.f32 %v2249, %v879
        %v2258 = vmul.f32 %v2250, %v883
        %v2259 = vmul.f32 %v2251, %v883
        %v2260 = vmul.f32 %v2252, %v887
        %v2261 = vmul.f32 %v2253, %v887
        %v2262 = vadd.f32 %v2214, %v2254
        %v2263 = vadd.f32 %v2215, %v2255
        %v2264 = vadd.f32 %v2216, %v2256
        %v2265 = vadd.f32 %v2217, %v2257
        %v2266 = vadd.f32 %v2218, %v2258
        %v2267 = vadd.f32 %v2219, %v2259
        %v2268 = vadd.f32 %v2220, %v2260
        %v2269 = vadd.f32 %v2221, %v2261
        %2270 = vrot.lane.b32.xlu0 %v1918, 111
        %v2271 = vpop.permute.xlu0 %2270
        %2272 = vrot.lane.b32.xlu0 %v1920, 111
        %v2273 = vpop.permute.xlu0 %2272
        %2274 = vrot.lane.b32.xlu0 %v1922, 111
        %v2275 = vpop.permute.xlu0 %2274
        %2276 = vrot.lane.b32.xlu0 %v1924, 111
        %v2277 = vpop.permute.xlu0 %2276
        %2278 = vrot.lane.b32.xlu0 %v1919, 111
        %v2279 = vpop.permute.xlu0 %2278
        %2280 = vrot.lane.b32.xlu0 %v1921, 111
        %v2281 = vpop.permute.xlu0 %2280
        %2282 = vrot.lane.b32.xlu0 %v1923, 111
        %v2283 = vpop.permute.xlu0 %2282
        %2284 = vrot.lane.b32.xlu0 %v1925, 111
        %v2285 = vpop.permute.xlu0 %2284
        %v2286 = vsel %vm921, %v2271, %v2279
        %v2287 = vsel %vm921, %v2273, %v2281
        %v2288 = vsel %vm921, %v2275, %v2283
        %v2289 = vsel %vm921, %v2277, %v2285
        %v2290 = vsel %vm921, %v2279, %v2271
        %v2291 = vsel %vm921, %v2281, %v2273
        %v2292 = vsel %vm921, %v2283, %v2275
        %v2293 = vsel %vm921, %v2285, %v2277
        %v2294 = vsel %vm932, %v2286, 0.0
        %v2295 = vsel %vm933, %v2290, 0.0
        %v2296 = vsel %vm932, %v2287, 0.0
        %v2297 = vsel %vm933, %v2291, 0.0
        %v2298 = vsel %vm932, %v2288, 0.0
        %v2299 = vsel %vm933, %v2292, 0.0
        %v2300 = vsel %vm932, %v2289, 0.0
        %v2301 = vsel %vm933, %v2293, 0.0
        %v2302 = vmul.f32 %v2294, %v944
        %v2303 = vmul.f32 %v2295, %v944
        %v2304 = vmul.f32 %v2296, %v948
        %v2305 = vmul.f32 %v2297, %v948
        %v2306 = vmul.f32 %v2298, %v952
        %v2307 = vmul.f32 %v2299, %v952
        %v2308 = vmul.f32 %v2300, %v956
        %v2309 = vmul.f32 %v2301, %v956
        %v2310 = vadd.f32 %v2262, %v2302
        %v2311 = vadd.f32 %v2263, %v2303
        %v2312 = vadd.f32 %v2264, %v2304
        %v2313 = vadd.f32 %v2265, %v2305
        %v2314 = vadd.f32 %v2266, %v2306
        %v2315 = vadd.f32 %v2267, %v2307
        %v2316 = vadd.f32 %v2268, %v2308
        %v2317 = vadd.f32 %v2269, %v2309
        %v2318 = vadd.f32 %v2310, %v977
        %v2319 = vadd.f32 %v2311, %v977
        %v2320 = vadd.f32 %v2312, %v982
        %v2321 = vadd.f32 %v2313, %v982
        %v2322 = vadd.f32 %v2314, %v987
        %v2323 = vadd.f32 %v2315, %v987
        %v2324 = vadd.f32 %v2316, %v992
        %v2325 = vadd.f32 %v2317, %v992
        %v2326 = vadd.f32 %v2318, 3.0
        %v2327 = vadd.f32 %v2319, 3.0
        %v2328 = vadd.f32 %v2320, 3.0
        %v2329 = vadd.f32 %v2321, 3.0
        %v2330 = vadd.f32 %v2322, 3.0
        %v2331 = vadd.f32 %v2323, 3.0
        %v2332 = vadd.f32 %v2324, 3.0
        %v2333 = vadd.f32 %v2325, 3.0
        %v2334 = vmax.f32 %v2326, 0.0
        %v2335 = vmax.f32 %v2327, 0.0
        %v2336 = vmax.f32 %v2328, 0.0
        %v2337 = vmax.f32 %v2329, 0.0
        %v2338 = vmax.f32 %v2330, 0.0
        %v2339 = vmax.f32 %v2331, 0.0
        %v2340 = vmax.f32 %v2332, 0.0
        %v2341 = vmax.f32 %v2333, 0.0
        %v2342 = vmin.f32 %v2334, 6.0
        %v2343 = vmin.f32 %v2335, 6.0
        %v2344 = vmin.f32 %v2336, 6.0
        %v2345 = vmin.f32 %v2337, 6.0
        %v2346 = vmin.f32 %v2338, 6.0
        %v2347 = vmin.f32 %v2339, 6.0
        %v2348 = vmin.f32 %v2340, 6.0
        %v2349 = vmin.f32 %v2341, 6.0
        %v2350 = vmul.f32 %v2318, %v2342
        %v2351 = vmul.f32 %v2319, %v2343
        %v2352 = vmul.f32 %v2320, %v2344
        %v2353 = vmul.f32 %v2321, %v2345
        %v2354 = vmul.f32 %v2322, %v2346
        %v2355 = vmul.f32 %v2323, %v2347
        %v2356 = vmul.f32 %v2324, %v2348
        %v2357 = vmul.f32 %v2325, %v2349
        %v2358 = vmul.f32 %v2350, 0.16666667
        %v2359 = vmul.f32 %v2351, 0.16666667
        %v2360 = vmul.f32 %v2352, 0.16666667
        %v2361 = vmul.f32 %v2353, 0.16666667
        %v2362 = vmul.f32 %v2354, 0.16666667
        %v2363 = vmul.f32 %v2355, 0.16666667
        %v2364 = vmul.f32 %v2356, 0.16666667
        %v2365 = vmul.f32 %v2357, 0.16666667
        %v2366 = vadd.f32 %v2358, %v2359
        %2367 = vadd.xlane.f32.xlu0 %v2366
        %v2368 = vpop.xlane.xlu0 %2367
        %v2369 = vadd.f32 %v2360, %v2361
        %2370 = vadd.xlane.f32.xlu0 %v2369
        %v2371 = vpop.xlane.xlu0 %2370
        %v2372 = vadd.f32 %v2362, %v2363
        %2373 = vadd.xlane.f32.xlu0 %v2372
        %v2374 = vpop.xlane.xlu0 %2373
        %v2375 = vadd.f32 %v2364, %v2365
        %2376 = vadd.xlane.f32.xlu0 %v2375
        %v2377 = vpop.xlane.xlu0 %2376
        %v2378 = vmul.f32 %v2368, 0.00390625
        %v2379 = vmul.f32 %v2371, 0.00390625
        %v2380 = vmul.f32 %v2374, 0.00390625
        %v2381 = vmul.f32 %v2377, 0.00390625
        %v2382 = vmul.f32 %v2378, %v376
        %v2383 = vmul.f32 %v2379, %v377
        %v2384 = vmul.f32 %v2380, %v378
        %v2385 = vmul.f32 %v2381, %v379
        %v2386 = vsel %vm1062, %v2382, 0.0
        %v2387 = vsel %vm1062, %v2383, 0.0
        %v2388 = vadd.f32 %v2386, %v2387
        %v2389 = vsel %vm1062, %v2384, 0.0
        %v2390 = vadd.f32 %v2388, %v2389
        %v2391 = vsel %vm1062, %v2385, 0.0
        %v2392 = vadd.f32 %v2390, %v2391
        %v2393 = vrot.slane %v2392, 4
        %v2394 = vadd.f32 %v2392, %v2393
        %v2395 = vrot.slane %v2394, 2
        %v2396 = vadd.f32 %v2394, %v2395
        %v2397 = vrot.slane %v2396, 1
        %v2398 = vadd.f32 %v2396, %v2397
        %v2399 = vmax.f32 %v2398, 0.0
        %v2400 = vmul.f32 %v380, %v2399
        %v2401 = vmul.f32 %v381, %v2399
        %v2402 = vmul.f32 %v382, %v2399
        %v2403 = vmul.f32 %v383, %v2399
        %v2404 = vsel %vm1062, %v2400, 0.0
        %2405 = vadd.xlane.f32.xlu0 %v2404
        %v2406 = vpop.xlane.xlu0 %2405
        %v2407 = vsel %vm1062, %v2401, 0.0
        %2408 = vadd.xlane.f32.xlu0 %v2407
        %v2409 = vpop.xlane.xlu0 %2408
        %v2410 = vsel %vm1062, %v2402, 0.0
        %2411 = vadd.xlane.f32.xlu0 %v2410
        %v2412 = vpop.xlane.xlu0 %2411
        %v2413 = vsel %vm1062, %v2403, 0.0
        %2414 = vadd.xlane.f32.xlu0 %v2413
        %v2415 = vpop.xlane.xlu0 %2414
        %v2416 = vadd.f32 %v2406, 3.0
        %v2417 = vadd.f32 %v2409, 3.0
        %v2418 = vadd.f32 %v2412, 3.0
        %v2419 = vadd.f32 %v2415, 3.0
        %v2420 = vmax.f32 %v2416, 0.0
        %v2421 = vmax.f32 %v2417, 0.0
        %v2422 = vmax.f32 %v2418, 0.0
        %v2423 = vmax.f32 %v2419, 0.0
        %v2424 = vmin.f32 %v2420, 6.0
        %v2425 = vmin.f32 %v2421, 6.0
        %v2426 = vmin.f32 %v2422, 6.0
        %v2427 = vmin.f32 %v2423, 6.0
        %v2428 = vmul.f32 %v2424, 0.16666667
        %v2429 = vmul.f32 %v2425, 0.16666667
        %v2430 = vmul.f32 %v2426, 0.16666667
        %v2431 = vmul.f32 %v2427, 0.16666667
        %v2432 = vmul.f32 %v2358, %v2428
        %v2433 = vmul.f32 %v2359, %v2428
        %v2434 = vmul.f32 %v2360, %v2429
        %v2435 = vmul.f32 %v2361, %v2429
        %v2436 = vmul.f32 %v2362, %v2430
        %v2437 = vmul.f32 %v2363, %v2430
        %v2438 = vmul.f32 %v2364, %v2431
        %v2439 = vmul.f32 %v2365, %v2431
        %v2440 = vmax.f32 %v2432, %v2436
        %v2441 = vmax.f32 %v2434, %v2438
        %v2442 = vmax.f32 %v2440, %v2441
        %v2443 = vrot.slane %v2442, 4
        %v2444 = vmax.f32 %v2442, %v2443
        %v2445 = vrot.slane %v2444, 2
        %v2446 = vmax.f32 %v2444, %v2445
        %v2447 = vrot.slane %v2446, 1
        %v2448 = vmax.f32 %v2446, %v2447
        %v2449 = vmax.f32 %v2433, %v2437
        %v2450 = vmax.f32 %v2435, %v2439
        %v2451 = vmax.f32 %v2449, %v2450
        %v2452 = vrot.slane %v2451, 4
        %v2453 = vmax.f32 %v2451, %v2452
        %v2454 = vrot.slane %v2453, 2
        %v2455 = vmax.f32 %v2453, %v2454
        %v2456 = vrot.slane %v2455, 1
        %v2457 = vmax.f32 %v2455, %v2456
        %v2458 = vadd.f32 %v2432, %v2434
        %v2459 = vadd.f32 %v2458, %v2436
        %v2460 = vadd.f32 %v2459, %v2438
        %v2461 = vrot.slane %v2460, 4
        %v2462 = vadd.f32 %v2460, %v2461
        %v2463 = vrot.slane %v2462, 2
        %v2464 = vadd.f32 %v2462, %v2463
        %v2465 = vrot.slane %v2464, 1
        %v2466 = vadd.f32 %v2464, %v2465
        %v2467 = vadd.f32 %v2433, %v2435
        %v2468 = vadd.f32 %v2467, %v2437
        %v2469 = vadd.f32 %v2468, %v2439
        %v2470 = vrot.slane %v2469, 4
        %v2471 = vadd.f32 %v2469, %v2470
        %v2472 = vrot.slane %v2471, 2
        %v2473 = vadd.f32 %v2471, %v2472
        %v2474 = vrot.slane %v2473, 1
        %v2475 = vadd.f32 %v2473, %v2474
        %v2476 = vmul.f32 %v2466, 0.03125
        %v2477 = vmul.f32 %v2475, 0.03125
        %2478 = vrot.lane.b32.xlu0 %v2448, 48
        %v2479 = vpop.permute.xlu0 %2478
        %2480 = vrot.lane.b32.xlu0 %v2457, 48
        %v2481 = vpop.permute.xlu0 %2480
        %v2482 = vsel %vm1159, %v2479, %v2481
        %v2483 = vsel %vm1159, %v2481, %v2479
        %v2484 = vsel %vm348, %v2483, 0.0
        %v2485 = vsel %vm349, %v2482, 0.0
        %v2488 = vcombine.low %v2484, %v2485
        %v2490 = vunpack.c.l.s4 1966171168
        %v2491 = vunpack.c.0.s8 %v2490
        %v2492 = vlaneseq
        %v2493 = vshrl.u32 %v2492, 7
        %v2494 = vsub.s32 %v2491, %v2493
        %v2495 = vrot.slane %v2488, %v2494
        %v2497 = vunpack.c.l.s4 1966171168
        %v2498 = vunpack.c.0.s8 %v2497
        %v2499 = vlaneseq
        %v2500 = vshrl.u32 %v2499, 7
        %v2501 = vsub.s32 %v2498, %v2500
        %v2502 = vrot.slane %v2495, %v2501
        %2504 = vst.msk [vmem:[#allocation2] ss:$8 sm:$0x3] %vm1185, %v2502
        %2505 = vst.msk [vmem:[#allocation2] ss:$8 sm:$0x0] %vm1185, %v2502
        %2506 = vrot.lane.b32.xlu0 %v2476, 48
        %v2507 = vpop.permute.xlu0 %2506
        %2508 = vrot.lane.b32.xlu0 %v2477, 48
        %v2509 = vpop.permute.xlu0 %2508
        %v2510 = vsel %vm1159, %v2507, %v2509
        %v2511 = vsel %vm1159, %v2509, %v2507
        %v2512 = vsel %vm348, %v2511, 0.0
        %v2513 = vsel %vm349, %v2510, 0.0
        %v2516 = vcombine.low %v2512, %v2513
        %v2518 = vunpack.c.l.s4 1966171168
        %v2519 = vunpack.c.0.s8 %v2518
        %v2520 = vlaneseq
        %v2521 = vshrl.u32 %v2520, 7
        %v2522 = vsub.s32 %v2519, %v2521
        %v2523 = vrot.slane %v2516, %v2522
        %v2525 = vunpack.c.l.s4 1966171168
        %v2526 = vunpack.c.0.s8 %v2525
        %v2527 = vlaneseq
        %v2528 = vshrl.u32 %v2527, 7
        %v2529 = vsub.s32 %v2526, %v2528
        %v2530 = vrot.slane %v2523, %v2529
        %2532 = vst.msk [vmem:[%s1214] ss:$8 sm:$0x3] %vm1185, %v2530
        %2533 = vst.msk [vmem:[%s1214] ss:$8 sm:$0x0] %vm1185, %v2530
        %2534 = vrot.lane.b32.xlu0 %v2448, 32
        %v2535 = vpop.permute.xlu0 %2534
        %2536 = vrot.lane.b32.xlu0 %v2457, 32
        %v2537 = vpop.permute.xlu0 %2536
        %v2538 = vsel %vm1221, %v2535, %v2537
        %v2539 = vsel %vm1221, %v2537, %v2535
        %v2540 = vsel %vm350, %v2539, 0.0
        %v2541 = vsel %vm351, %v2538, 0.0
        %v2544 = vcombine.low %v2540, %v2541
        %v2546 = vunpack.c.l.s4 1966171168
        %v2547 = vunpack.c.0.s8 %v2546
        %v2548 = vlaneseq
        %v2549 = vshrl.u32 %v2548, 7
        %v2550 = vsub.s32 %v2547, %v2549
        %v2551 = vrot.slane %v2544, %v2550
        %v2553 = vunpack.c.l.s4 1966171168
        %v2554 = vunpack.c.0.s8 %v2553
        %v2555 = vlaneseq
        %v2556 = vshrl.u32 %v2555, 7
        %v2557 = vsub.s32 %v2554, %v2556
        %v2558 = vrot.slane %v2551, %v2557
        %2560 = vst.msk [vmem:[%s1244] ss:$8 sm:$0x3] %vm1185, %v2558
        %2561 = vst.msk [vmem:[%s1244] ss:$8 sm:$0x0] %vm1185, %v2558
        %2562 = vrot.lane.b32.xlu0 %v2476, 32
        %v2563 = vpop.permute.xlu0 %2562
        %2564 = vrot.lane.b32.xlu0 %v2477, 32
        %v2565 = vpop.permute.xlu0 %2564
        %v2566 = vsel %vm1221, %v2563, %v2565
        %v2567 = vsel %vm1221, %v2565, %v2563
        %v2568 = vsel %vm350, %v2567, 0.0
        %v2569 = vsel %vm351, %v2566, 0.0
        %v2572 = vcombine.low %v2568, %v2569
        %v2574 = vunpack.c.l.s4 1966171168
        %v2575 = vunpack.c.0.s8 %v2574
        %v2576 = vlaneseq
        %v2577 = vshrl.u32 %v2576, 7
        %v2578 = vsub.s32 %v2575, %v2577
        %v2579 = vrot.slane %v2572, %v2578
        %v2581 = vunpack.c.l.s4 1966171168
        %v2582 = vunpack.c.0.s8 %v2581
        %v2583 = vlaneseq
        %v2584 = vshrl.u32 %v2583, 7
        %v2585 = vsub.s32 %v2582, %v2584
        %v2586 = vrot.slane %v2579, %v2585
        %2588 = vst.msk [vmem:[%s1273] ss:$8 sm:$0x3] %vm1185, %v2586
        %2589 = vst.msk [vmem:[%s1273] ss:$8 sm:$0x0] %vm1185, %v2586
        %2590 = vrot.lane.b32.xlu0 %v2448, 16
        %v2591 = vpop.permute.xlu0 %2590
        %2592 = vrot.lane.b32.xlu0 %v2457, 16
        %v2593 = vpop.permute.xlu0 %2592
        %v2594 = vsel %vm507, %v2591, %v2593
        %v2595 = vsel %vm507, %v2593, %v2591
        %v2596 = vsel %vm332, %v2595, 0.0
        %v2597 = vsel %vm333, %v2594, 0.0
        %v2600 = vcombine.low %v2596, %v2597
        %v2602 = vunpack.c.l.s4 1966171168
        %v2603 = vunpack.c.0.s8 %v2602
        %v2604 = vlaneseq
        %v2605 = vshrl.u32 %v2604, 7
        %v2606 = vsub.s32 %v2603, %v2605
        %v2607 = vrot.slane %v2600, %v2606
        %v2609 = vunpack.c.l.s4 1966171168
        %v2610 = vunpack.c.0.s8 %v2609
        %v2611 = vlaneseq
        %v2612 = vshrl.u32 %v2611, 7
        %v2613 = vsub.s32 %v2610, %v2612
        %v2614 = vrot.slane %v2607, %v2613
        %2616 = vst.msk [vmem:[%s1302] ss:$8 sm:$0x3] %vm1185, %v2614
        %2617 = vst.msk [vmem:[%s1302] ss:$8 sm:$0x0] %vm1185, %v2614
        %2618 = vrot.lane.b32.xlu0 %v2476, 16
        %v2619 = vpop.permute.xlu0 %2618
        %2620 = vrot.lane.b32.xlu0 %v2477, 16
        %v2621 = vpop.permute.xlu0 %2620
        %v2622 = vsel %vm507, %v2619, %v2621
        %v2623 = vsel %vm507, %v2621, %v2619
        %v2624 = vsel %vm332, %v2623, 0.0
        %v2625 = vsel %vm333, %v2622, 0.0
        %v2628 = vcombine.low %v2624, %v2625
        %v2630 = vunpack.c.l.s4 1966171168
        %v2631 = vunpack.c.0.s8 %v2630
        %v2632 = vlaneseq
        %v2633 = vshrl.u32 %v2632, 7
        %v2634 = vsub.s32 %v2631, %v2633
        %v2635 = vrot.slane %v2628, %v2634
        %v2637 = vunpack.c.l.s4 1966171168
        %v2638 = vunpack.c.0.s8 %v2637
        %v2639 = vlaneseq
        %v2640 = vshrl.u32 %v2639, 7
        %v2641 = vsub.s32 %v2638, %v2640
        %v2642 = vrot.slane %v2635, %v2641
        %2644 = vst.msk [vmem:[%s1331] ss:$8 sm:$0x3] %vm1185, %v2642
        %2645 = vst.msk [vmem:[%s1331] ss:$8 sm:$0x0] %vm1185, %v2642
        %v2648 = vcombine.low %v2448, %v2457
        %v2650 = vunpack.c.l.s4 1966171168
        %v2651 = vunpack.c.0.s8 %v2650
        %v2652 = vlaneseq
        %v2653 = vshrl.u32 %v2652, 7
        %v2654 = vsub.s32 %v2651, %v2653
        %v2655 = vrot.slane %v2648, %v2654
        %v2657 = vunpack.c.l.s4 1966171168
        %v2658 = vunpack.c.0.s8 %v2657
        %v2659 = vlaneseq
        %v2660 = vshrl.u32 %v2659, 7
        %v2661 = vsub.s32 %v2658, %v2660
        %v2662 = vrot.slane %v2655, %v2661
        %2664 = vst.msk [vmem:[%s1352] ss:$8 sm:$0x3] %vm1185, %v2662
        %2665 = vst.msk [vmem:[%s1352] ss:$8 sm:$0x0] %vm1185, %v2662
        %v2668 = vcombine.low %v2476, %v2477
        %v2670 = vunpack.c.l.s4 1966171168
        %v2671 = vunpack.c.0.s8 %v2670
        %v2672 = vlaneseq
        %v2673 = vshrl.u32 %v2672, 7
        %v2674 = vsub.s32 %v2671, %v2673
        %v2675 = vrot.slane %v2668, %v2674
        %v2677 = vunpack.c.l.s4 1966171168
        %v2678 = vunpack.c.0.s8 %v2677
        %v2679 = vlaneseq
        %v2680 = vshrl.u32 %v2679, 7
        %v2681 = vsub.s32 %v2678, %v2680
        %v2682 = vrot.slane %v2675, %v2681
        %2684 = vst.msk [vmem:[%s1373] ss:$8 sm:$0x3] %vm1185, %v2682
        %2685 = vst.msk [vmem:[%s1373] ss:$8 sm:$0x0] %vm1185, %v2682
        %2686 = vrot.lane.b32.xlu0 %v2448, 112
        %v2687 = vpop.permute.xlu0 %2686
        %2688 = vrot.lane.b32.xlu0 %v2457, 112
        %v2689 = vpop.permute.xlu0 %2688
        %v2690 = vsel %vm852, %v2687, %v2689
        %v2691 = vsel %vm852, %v2689, %v2687
        %v2692 = vsel %vm342, %v2690, 0.0
        %v2693 = vsel %vm343, %v2691, 0.0
        %v2696 = vcombine.low %v2692, %v2693
        %v2698 = vunpack.c.l.s4 1966171168
        %v2699 = vunpack.c.0.s8 %v2698
        %v2700 = vlaneseq
        %v2701 = vshrl.u32 %v2700, 7
        %v2702 = vsub.s32 %v2699, %v2701
        %v2703 = vrot.slane %v2696, %v2702
        %v2705 = vunpack.c.l.s4 1966171168
        %v2706 = vunpack.c.0.s8 %v2705
        %v2707 = vlaneseq
        %v2708 = vshrl.u32 %v2707, 7
        %v2709 = vsub.s32 %v2706, %v2708
        %v2710 = vrot.slane %v2703, %v2709
        %2712 = vst.msk [vmem:[%s1402] ss:$8 sm:$0x3] %vm1185, %v2710
        %2713 = vst.msk [vmem:[%s1402] ss:$8 sm:$0x0] %vm1185, %v2710
        %2714 = vrot.lane.b32.xlu0 %v2476, 112
        %v2715 = vpop.permute.xlu0 %2714
        %2716 = vrot.lane.b32.xlu0 %v2477, 112
        %v2717 = vpop.permute.xlu0 %2716
        %v2718 = vsel %vm852, %v2715, %v2717
        %v2719 = vsel %vm852, %v2717, %v2715
        %v2720 = vsel %vm342, %v2718, 0.0
        %v2721 = vsel %vm343, %v2719, 0.0
        %v2724 = vcombine.low %v2720, %v2721
        %v2726 = vunpack.c.l.s4 1966171168
        %v2727 = vunpack.c.0.s8 %v2726
        %v2728 = vlaneseq
        %v2729 = vshrl.u32 %v2728, 7
        %v2730 = vsub.s32 %v2727, %v2729
        %v2731 = vrot.slane %v2724, %v2730
        %v2733 = vunpack.c.l.s4 1966171168
        %v2734 = vunpack.c.0.s8 %v2733
        %v2735 = vlaneseq
        %v2736 = vshrl.u32 %v2735, 7
        %v2737 = vsub.s32 %v2734, %v2736
        %v2738 = vrot.slane %v2731, %v2737
        %2740 = vst.msk [vmem:[%s1431] ss:$8 sm:$0x3] %vm1185, %v2738
        %2741 = vst.msk [vmem:[%s1431] ss:$8 sm:$0x0] %vm1185, %v2738
        %2742 = vrot.lane.b32.xlu0 %v2448, 96
        %v2743 = vpop.permute.xlu0 %2742
        %2744 = vrot.lane.b32.xlu0 %v2457, 96
        %v2745 = vpop.permute.xlu0 %2744
        %v2746 = vsel %vm1438, %v2743, %v2745
        %v2747 = vsel %vm1438, %v2745, %v2743
        %v2748 = vsel %vm352, %v2746, 0.0
        %v2749 = vsel %vm353, %v2747, 0.0
        %v2752 = vcombine.low %v2748, %v2749
        %v2754 = vunpack.c.l.s4 1966171168
        %v2755 = vunpack.c.0.s8 %v2754
        %v2756 = vlaneseq
        %v2757 = vshrl.u32 %v2756, 7
        %v2758 = vsub.s32 %v2755, %v2757
        %v2759 = vrot.slane %v2752, %v2758
        %v2761 = vunpack.c.l.s4 1966171168
        %v2762 = vunpack.c.0.s8 %v2761
        %v2763 = vlaneseq
        %v2764 = vshrl.u32 %v2763, 7
        %v2765 = vsub.s32 %v2762, %v2764
        %v2766 = vrot.slane %v2759, %v2765
        %2768 = vst.msk [vmem:[%s1461] ss:$8 sm:$0x3] %vm1185, %v2766
        %2769 = vst.msk [vmem:[%s1461] ss:$8 sm:$0x0] %vm1185, %v2766
        %2770 = vrot.lane.b32.xlu0 %v2476, 96
        %v2771 = vpop.permute.xlu0 %2770
        %2772 = vrot.lane.b32.xlu0 %v2477, 96
        %v2773 = vpop.permute.xlu0 %2772
        %v2774 = vsel %vm1438, %v2771, %v2773
        %v2775 = vsel %vm1438, %v2773, %v2771
        %v2776 = vsel %vm352, %v2774, 0.0
        %v2777 = vsel %vm353, %v2775, 0.0
        %v2780 = vcombine.low %v2776, %v2777
        %v2782 = vunpack.c.l.s4 1966171168
        %v2783 = vunpack.c.0.s8 %v2782
        %v2784 = vlaneseq
        %v2785 = vshrl.u32 %v2784, 7
        %v2786 = vsub.s32 %v2783, %v2785
        %v2787 = vrot.slane %v2780, %v2786
        %v2789 = vunpack.c.l.s4 1966171168
        %v2790 = vunpack.c.0.s8 %v2789
        %v2791 = vlaneseq
        %v2792 = vshrl.u32 %v2791, 7
        %v2793 = vsub.s32 %v2790, %v2792
        %v2794 = vrot.slane %v2787, %v2793
        %2796 = vst.msk [vmem:[%s1490] ss:$8 sm:$0x3] %vm1185, %v2794
        %2797 = vst.msk [vmem:[%s1490] ss:$8 sm:$0x0] %vm1185, %v2794
        %2798 = vrot.lane.b32.xlu0 %v2448, 80
        %v2799 = vpop.permute.xlu0 %2798
        %2800 = vrot.lane.b32.xlu0 %v2457, 80
        %v2801 = vpop.permute.xlu0 %2800
        %v2802 = vsel %vm1497, %v2799, %v2801
        %v2803 = vsel %vm1497, %v2801, %v2799
        %v2804 = vsel %vm354, %v2802, 0.0
        %v2805 = vsel %vm355, %v2803, 0.0
        %v2808 = vcombine.low %v2804, %v2805
        %v2810 = vunpack.c.l.s4 1966171168
        %v2811 = vunpack.c.0.s8 %v2810
        %v2812 = vlaneseq
        %v2813 = vshrl.u32 %v2812, 7
        %v2814 = vsub.s32 %v2811, %v2813
        %v2815 = vrot.slane %v2808, %v2814
        %v2817 = vunpack.c.l.s4 1966171168
        %v2818 = vunpack.c.0.s8 %v2817
        %v2819 = vlaneseq
        %v2820 = vshrl.u32 %v2819, 7
        %v2821 = vsub.s32 %v2818, %v2820
        %v2822 = vrot.slane %v2815, %v2821
        %2824 = vst.msk [vmem:[%s1520] ss:$8 sm:$0x3] %vm1185, %v2822
        %2825 = vst.msk [vmem:[%s1520] ss:$8 sm:$0x0] %vm1185, %v2822
        %2826 = vrot.lane.b32.xlu0 %v2476, 80
        %v2827 = vpop.permute.xlu0 %2826
        %2828 = vrot.lane.b32.xlu0 %v2477, 80
        %v2829 = vpop.permute.xlu0 %2828
        %v2830 = vsel %vm1497, %v2827, %v2829
        %v2831 = vsel %vm1497, %v2829, %v2827
        %v2832 = vsel %vm354, %v2830, 0.0
        %v2833 = vsel %vm355, %v2831, 0.0
        %v2836 = vcombine.low %v2832, %v2833
        %v2838 = vunpack.c.l.s4 1966171168
        %v2839 = vunpack.c.0.s8 %v2838
        %v2840 = vlaneseq
        %v2841 = vshrl.u32 %v2840, 7
        %v2842 = vsub.s32 %v2839, %v2841
        %v2843 = vrot.slane %v2836, %v2842
        %v2845 = vunpack.c.l.s4 1966171168
        %v2846 = vunpack.c.0.s8 %v2845
        %v2847 = vlaneseq
        %v2848 = vshrl.u32 %v2847, 7
        %v2849 = vsub.s32 %v2846, %v2848
        %v2850 = vrot.slane %v2843, %v2849
        %2852 = vst.msk [vmem:[%s1549] ss:$8 sm:$0x3] %vm1185, %v2850
        %2853 = vst.msk [vmem:[%s1549] ss:$8 sm:$0x0] %vm1185, %v2850
        %v2854 = vld [vmem:[#allocation2] sm:$0xff]
        %v2855 = vld [vmem:[#allocation2 + $0x8] sm:$0xff]
        %v2856 = vld [vmem:[#allocation2 + $0x10] sm:$0x3f]
        %v2857 = vld [vmem:[#allocation2 + $0x18] sm:$0x3f]
        %v2858 = vmul.f32 %v2854, %v1559
        %v2859 = vmul.f32 %v2855, %v1559
        %v2860 = vmul.f32 %v2856, %v1564
        %v2861 = vmul.f32 %v2857, %v1564
        %2862 = vrot.lane.b32.xlu0 %v2854, 3
        %v2863 = vpop.permute.xlu0 %2862
        %2864 = vrot.lane.b32.xlu0 %v2856, 3
        %v2865 = vpop.permute.xlu0 %2864
        %2866 = vrot.lane.b32.xlu0 %v2855, 3
        %v2867 = vpop.permute.xlu0 %2866
        %2868 = vrot.lane.b32.xlu0 %v2857, 3
        %v2869 = vpop.permute.xlu0 %2868
        %v2870 = vsel %vm1578, %v2863, %v2867
        %v2871 = vsel %vm1578, %v2865, %v2869
        %v2872 = vsel %vm1578, %v2867, %v2863
        %v2873 = vsel %vm1578, %v2869, %v2865
        %v2874 = vsel %vm1585, %v2872, 0.0
        %v2875 = vsel %vm1586, %v2870, 0.0
        %v2876 = vsel %vm1585, %v2873, 0.0
        %v2877 = vsel %vm1586, %v2871, 0.0
        %v2878 = vmul.f32 %v2874, %v1593
        %v2879 = vmul.f32 %v2875, %v1593
        %v2880 = vmul.f32 %v2876, %v1597
        %v2881 = vmul.f32 %v2877, %v1597
        %v2882 = vadd.f32 %v2858, %v2878
        %v2883 = vadd.f32 %v2859, %v2879
        %v2884 = vadd.f32 %v2860, %v2880
        %v2885 = vadd.f32 %v2861, %v2881
        %2886 = vrot.lane.b32.xlu0 %v2854, 2
        %v2887 = vpop.permute.xlu0 %2886
        %2888 = vrot.lane.b32.xlu0 %v2856, 2
        %v2889 = vpop.permute.xlu0 %2888
        %2890 = vrot.lane.b32.xlu0 %v2855, 2
        %v2891 = vpop.permute.xlu0 %2890
        %2892 = vrot.lane.b32.xlu0 %v2857, 2
        %v2893 = vpop.permute.xlu0 %2892
        %v2894 = vsel %vm1615, %v2887, %v2891
        %v2895 = vsel %vm1615, %v2889, %v2893
        %v2896 = vsel %vm1615, %v2891, %v2887
        %v2897 = vsel %vm1615, %v2893, %v2889
        %v2898 = vsel %vm1622, %v2896, 0.0
        %v2899 = vsel %vm1623, %v2894, 0.0
        %v2900 = vsel %vm1622, %v2897, 0.0
        %v2901 = vsel %vm1623, %v2895, 0.0
        %v2902 = vmul.f32 %v2898, %v1630
        %v2903 = vmul.f32 %v2899, %v1630
        %v2904 = vmul.f32 %v2900, %v1634
        %v2905 = vmul.f32 %v2901, %v1634
        %v2906 = vadd.f32 %v2882, %v2902
        %v2907 = vadd.f32 %v2883, %v2903
        %v2908 = vadd.f32 %v2884, %v2904
        %v2909 = vadd.f32 %v2885, %v2905
        %2910 = vrot.lane.b32.xlu0 %v2854, 1
        %v2911 = vpop.permute.xlu0 %2910
        %2912 = vrot.lane.b32.xlu0 %v2856, 1
        %v2913 = vpop.permute.xlu0 %2912
        %2914 = vrot.lane.b32.xlu0 %v2855, 1
        %v2915 = vpop.permute.xlu0 %2914
        %2916 = vrot.lane.b32.xlu0 %v2857, 1
        %v2917 = vpop.permute.xlu0 %2916
        %v2918 = vsel %vm645, %v2911, %v2915
        %v2919 = vsel %vm645, %v2913, %v2917
        %v2920 = vsel %vm645, %v2915, %v2911
        %v2921 = vsel %vm645, %v2917, %v2913
        %v2922 = vsel %vm656, %v2920, 0.0
        %v2923 = vsel %vm657, %v2918, 0.0
        %v2924 = vsel %vm656, %v2921, 0.0
        %v2925 = vsel %vm657, %v2919, 0.0
        %v2926 = vmul.f32 %v2922, %v1662
        %v2927 = vmul.f32 %v2923, %v1662
        %v2928 = vmul.f32 %v2924, %v1666
        %v2929 = vmul.f32 %v2925, %v1666
        %v2930 = vadd.f32 %v2906, %v2926
        %v2931 = vadd.f32 %v2907, %v2927
        %v2932 = vadd.f32 %v2908, %v2928
        %v2933 = vadd.f32 %v2909, %v2929
        %2934 = vrot.lane.b32.xlu0 %v2854, 127
        %v2935 = vpop.permute.xlu0 %2934
        %2936 = vrot.lane.b32.xlu0 %v2856, 127
        %v2937 = vpop.permute.xlu0 %2936
        %2938 = vrot.lane.b32.xlu0 %v2855, 127
        %v2939 = vpop.permute.xlu0 %2938
        %2940 = vrot.lane.b32.xlu0 %v2857, 127
        %v2941 = vpop.permute.xlu0 %2940
        %v2942 = vsel %vm714, %v2935, %v2939
        %v2943 = vsel %vm714, %v2937, %v2941
        %v2944 = vsel %vm714, %v2939, %v2935
        %v2945 = vsel %vm714, %v2941, %v2937
        %v2946 = vsel %vm725, %v2942, 0.0
        %v2947 = vsel %vm726, %v2944, 0.0
        %v2948 = vsel %vm725, %v2943, 0.0
        %v2949 = vsel %vm726, %v2945, 0.0
        %v2950 = vmul.f32 %v2946, %v1694
        %v2951 = vmul.f32 %v2947, %v1694
        %v2952 = vmul.f32 %v2948, %v1698
        %v2953 = vmul.f32 %v2949, %v1698
        %v2954 = vadd.f32 %v2930, %v2950
        %v2955 = vadd.f32 %v2931, %v2951
        %v2956 = vadd.f32 %v2932, %v2952
        %v2957 = vadd.f32 %v2933, %v2953
        %2958 = vrot.lane.b32.xlu0 %v2854, 126
        %v2959 = vpop.permute.xlu0 %2958
        %2960 = vrot.lane.b32.xlu0 %v2856, 126
        %v2961 = vpop.permute.xlu0 %2960
        %2962 = vrot.lane.b32.xlu0 %v2855, 126
        %v2963 = vpop.permute.xlu0 %2962
        %2964 = vrot.lane.b32.xlu0 %v2857, 126
        %v2965 = vpop.permute.xlu0 %2964
        %v2966 = vsel %vm1716, %v2959, %v2963
        %v2967 = vsel %vm1716, %v2961, %v2965
        %v2968 = vsel %vm1716, %v2963, %v2959
        %v2969 = vsel %vm1716, %v2965, %v2961
        %v2970 = vsel %vm1723, %v2966, 0.0
        %v2971 = vsel %vm1724, %v2968, 0.0
        %v2972 = vsel %vm1723, %v2967, 0.0
        %v2973 = vsel %vm1724, %v2969, 0.0
        %v2974 = vmul.f32 %v2970, %v1731
        %v2975 = vmul.f32 %v2971, %v1731
        %v2976 = vmul.f32 %v2972, %v1735
        %v2977 = vmul.f32 %v2973, %v1735
        %v2978 = vadd.f32 %v2954, %v2974
        %v2979 = vadd.f32 %v2955, %v2975
        %v2980 = vadd.f32 %v2956, %v2976
        %v2981 = vadd.f32 %v2957, %v2977
        %2982 = vrot.lane.b32.xlu0 %v2854, 125
        %v2983 = vpop.permute.xlu0 %2982
        %2984 = vrot.lane.b32.xlu0 %v2856, 125
        %v2985 = vpop.permute.xlu0 %2984
        %2986 = vrot.lane.b32.xlu0 %v2855, 125
        %v2987 = vpop.permute.xlu0 %2986
        %2988 = vrot.lane.b32.xlu0 %v2857, 125
        %v2989 = vpop.permute.xlu0 %2988
        %v2990 = vsel %vm1753, %v2983, %v2987
        %v2991 = vsel %vm1753, %v2985, %v2989
        %v2992 = vsel %vm1753, %v2987, %v2983
        %v2993 = vsel %vm1753, %v2989, %v2985
        %v2994 = vsel %vm1760, %v2990, 0.0
        %v2995 = vsel %vm1761, %v2992, 0.0
        %v2996 = vsel %vm1760, %v2991, 0.0
        %v2997 = vsel %vm1761, %v2993, 0.0
        %v2998 = vmul.f32 %v2994, %v1768
        %v2999 = vmul.f32 %v2995, %v1768
        %v3000 = vmul.f32 %v2996, %v1772
        %v3001 = vmul.f32 %v2997, %v1772
        %v3002 = vadd.f32 %v2978, %v2998
        %v3003 = vadd.f32 %v2979, %v2999
        %v3004 = vadd.f32 %v2980, %v3000
        %v3005 = vadd.f32 %v2981, %v3001
        %v3006 = vsel %vm1782, %v3004, 0.0
        %v3007 = vadd.f32 %v3002, %v3006
        %v3008 = vrot.slane %v3007, 4
        %v3009 = vadd.f32 %v3007, %v3008
        %v3010 = vrot.slane %v3009, 2
        %v3011 = vadd.f32 %v3009, %v3010
        %v3012 = vrot.slane %v3011, 1
        %v3013 = vadd.f32 %v3011, %v3012
        %v3014 = vsel %vm1782, %v3005, 0.0
        %v3015 = vadd.f32 %v3003, %v3014
        %v3016 = vrot.slane %v3015, 4
        %v3017 = vadd.f32 %v3015, %v3016
        %v3018 = vrot.slane %v3017, 2
        %v3019 = vadd.f32 %v3017, %v3018
        %v3020 = vrot.slane %v3019, 1
        %v3021 = vadd.f32 %v3019, %v3020
        %v3022 = vxor.u32 %v3013, 2147483648
        %v3023 = vxor.u32 %v3021, 2147483648
        %v3024 = vmul.f32 %v3022, 1.442695
        %v3025 = vpow.pop %v3024
        %v3026 = vmul.f32 %v3023, 1.442695
        %v3027 = vpow.pop %v3026
        %v3028 = vadd.f32 %v3025, 1.0
        %v3029 = vadd.f32 %v3027, 1.0
        %v3030 = vrcp.pop %v3028
        %v3031 = vmul.f32 1.0, %v3030
        %v3032 = vrcp.pop %v3029
        %v3033 = vmul.f32 1.0, %v3032
        %v3034 = vmul.f32 %v2432, %v3031
        %v3035 = vmul.f32 %v2433, %v3033
        %v3036 = vmul.f32 %v2434, %v3031
        %v3037 = vmul.f32 %v2435, %v3033
        %v3038 = vmul.f32 %v2436, %v3031
        %v3039 = vmul.f32 %v2437, %v3033
        %v3040 = vmul.f32 %v2438, %v3031
        %v3041 = vmul.f32 %v2439, %v3033
        %3042 = vmatprep.subr.mxu0 %v3035
        %3043 = vmatpush1.msra.mxu0 %v3034
        %3044 = vmatprep.subr.mxu0 %v3037
        %3045 = vmatpush1.msra.mxu0 %v3036
        %3046 = vmatprep.subr.mxu0 %v3039
        %3047 = vmatpush1.msra.mxu0 %v3038
        %3048 = vmatprep.subr.mxu0 %v3041
        %3049 = vmatpush1.msra.mxu0 %v3040
        %3050 = vmatprep.subr.mxu0 0.0
        %3051 = vmatpush1.msra.mxu0 0.0
        %3052 = vmatprep.subr.mxu0 0.0
        %3053 = vmatpush1.msra.mxu0 0.0
        %3054 = vmatprep.subr.mxu0 0.0
        %3055 = vmatpush1.msra.mxu0 0.0
        %3056 = vmatprep.subr.mxu0 0.0
        %3057 = vmatpush1.msra.mxu0 0.0
        %3058 = vmatprep.subr.mxu0 0.0
        %3059 = vmatpush1.msra.mxu0 0.0
        %3060 = vmatprep.subr.mxu0 0.0
        %3061 = vmatpush1.msra.mxu0 0.0
        %3062 = vmatprep.subr.mxu0 0.0
        %3063 = vmatpush1.msra.mxu0 0.0
        %3064 = vmatprep.subr.mxu0 0.0
        %3065 = vmatpush1.msra.mxu0 0.0
        %3066 = vmatprep.subr.mxu0 0.0
        %3067 = vmatpush1.msra.mxu0 0.0
        %3068 = vmatprep.subr.mxu0 0.0
        %3069 = vmatpush1.msra.mxu0 0.0
        %3070 = vmatprep.subr.mxu0 0.0
        %3071 = vmatpush1.msra.mxu0 0.0
        %3072 = vmatprep.subr.mxu0 0.0
        %3073 = vmatpush1.msra.mxu0 0.0
        %3074 = vmatprep.subr.mxu0 0.0
        %3075 = vmatpush1.msra.mxu0 0.0
        %3076 = vmatprep.subr.mxu0 0.0
        %3077 = vmatpush1.msra.mxu0 0.0
        %3078 = vmatprep.subr.mxu0 0.0
        %3079 = vmatpush1.msra.mxu0 0.0
        %3080 = vmatprep.subr.mxu0 0.0
        %3081 = vmatpush1.msra.mxu0 0.0
        %3082 = vmatprep.subr.mxu0 0.0
        %3083 = vmatpush1.msra.mxu0 0.0
        %3084 = vmatprep.subr.mxu0 0.0
        %3085 = vmatpush1.msra.mxu0 0.0
        %3086 = vmatprep.subr.mxu0 0.0
        %3087 = vmatpush1.msra.mxu0 0.0
        %3088 = vmatprep.subr.mxu0 0.0
        %3089 = vmatpush1.msra.mxu0 0.0
        %3090 = vmatprep.subr.mxu0 0.0
        %3091 = vmatpush1.msra.mxu0 0.0
        %3092 = vmatprep.subr.mxu0 0.0
        %3093 = vmatpush1.msra.mxu0 0.0
        %3094 = vmatprep.subr.mxu0 0.0
        %3095 = vmatpush1.msra.mxu0 0.0
        %3096 = vmatprep.subr.mxu0 0.0
        %3097 = vmatpush1.msra.mxu0 0.0
        %3098 = vmatprep.subr.mxu0 0.0
        %3099 = vmatpush1.msra.mxu0 0.0
        %3100 = vmatprep.subr.mxu0 0.0
        %3101 = vmatpush1.msra.mxu0 0.0
        %3102 = vmatprep.subr.mxu0 0.0
        %3103 = vmatpush1.msra.mxu0 0.0
        %3104 = vmatprep.subr.mxu0 0.0
        %3105 = vmatpush1.msra.mxu0 0.0
        %3106 = vmatprep.mubr.f32.mxu0 0.0
        %3107 = vmatmul.mubr.f32.gmra.mrb[0].mxu0 %v1831
        %v3108 = vpop.f32.mrb[0].mxu0
        %v3109 = vadd.f32 %v1822, %v3108
        %v3110 = vpop.f32.mrb[0].mxu0
        %v3111 = vadd.f32 %v1822, %v3110
        %3112 = vmatprep.mubr.f32.mxu0 0.0
        %3113 = vmatmul.mubr.f32.gmra.mrb[0].mxu0 %v1834
        %v3114 = vpop.f32.mrb[0].mxu0
        %v3115 = vadd.f32 %v1827, %v3114
        %v3116 = vpop.f32.mrb[0].mxu0
        %v3117 = vadd.f32 %v1827, %v3116
        %3118 = vdwg.mxu0
        %s3119 = scalar_lea.vmem %s324, 32 [#allocation6]
        %3120 = vst [vmem:[%s3119] sm:$0xff] %v3109
        %3121 = vst [vmem:[%s3119 + $0x8] sm:$0xff] %v3111
        %3122 = vst [vmem:[%s3119 + $0x10] sm:$0xff] %v3115
        %3123 = vst [vmem:[%s3119 + $0x18] sm:$0xff] %v3117
        %s3124 = sand.u32 %s206, 1
        %s3125 = scalar_lea.sflag [#allocation5], %s3124
        %s3126 = sand.u32 %s206, 1
        %s3127 = smul.addr %s3126, 64
        %s3128 = scalar_lea.vmem [#allocation6], %s3127
        // Predicated region
        $region57: #{tpu_custom_call.1} parent=51 // pred_check
          %p3129 = pneg %p216
        $region58: #{tpu_custom_call.1} parent=51 // pred_check_branch
          %3131 = sbr.rel (%p3129) target = $region60
        $region59: #{tpu_custom_call.1} parent=51 // pred_region
          %s3132 = smul.u32 2, %s25
          %s3134 = ssub.s32 1024, 1024
          %3135 = vsyncadd %s3125, %s3134
          %s3136 = smul.addr %s3132, 4
          %s3137 = smul.addr %s3136, 128
          %s3138 = scalar_lea.hbm %s8, %s3137
          %s3139 = sshll.u32 %s3128, 4
          %s3140 = int_to_ptr.vmem [resolvable:$true] %s3139
          %3145 = dma.vmem_to_hbm [thread:$0]  %s3140, 1024, %s3138, %s3125, 256, 256, 16
        $region60: #{tpu_custom_call.1} parent=51 // pred_fallthru
          _
      $region52: #{tpu_custom_call.1} parent=5 // pred_fallthru
        _
      %p3146 = scmp.le.s32.totalorder 2, %s20
      // Predicated region
      $region61: #{tpu_custom_call.1} parent=5 // pred_check
        %p3147 = pneg %p3146
      $region62: #{tpu_custom_call.1} parent=5 // pred_check_branch
        %3149 = sbr.rel (%p3147) target = $region64
      $region63: #{tpu_custom_call.1} parent=5 // pred_region
        %s3150 = ssub.s32 %s20, 2
        // Predicated region
        $region65: #{tpu_custom_call.1} parent=63 // pred_check
          %p3151 = pneg %p222
        $region66: #{tpu_custom_call.1} parent=63 // pred_check_branch
          %3153 = sbr.rel (%p3151) target = $region68
        $region67: #{tpu_custom_call.1} parent=63 // pred_region
          %s3154 = sand.u32 %s207, 1
          %s3155 = scalar_lea.sflag [#allocation5], %s3154
          %s3156 = sand.u32 %s207, 1
          %s3157 = smul.addr %s3156, 64
          %s3158 = scalar_lea.vmem [#allocation6], %s3157
          %3159 = dma.done %s3155, 1024
        $region68: #{tpu_custom_call.1} parent=63 // pred_fallthru
          _
      $region64: #{tpu_custom_call.1} parent=5 // pred_fallthru
        _
    $region6: #{tpu_custom_call.1} parent=1 // loop_footer
      %s24 = sadd.s32 1, %s20
    $region7: #{tpu_custom_call.1} parent=1 // loop_footer_branch
      %19 = sbr.rel target = $region3
    $region8: #{tpu_custom_call.1} parent=1 // loop_exit
      _
    %3160 = vsyncpa [#allocation4], 1
    %s3161 = scalar_lea.sflag [#allocation4], 1
    %3162 = vsyncpa %s3161, 1
    %3163 = vsyncpa [#allocation5], 1
    %s3164 = scalar_lea.sflag [#allocation5], 1
    %3165 = vsyncpa %s3164, 1

</llo_original>
